<compile_context>
chip_gen: v7x
topology: tpu7x:2x2x1
jax: 0.10.0
libtpu: 0.0.40
codegen_flags: <defaults>
</compile_context>

<pallas_src>
import math
from functools import partial

import jax
import jax.numpy as jnp
from jax.experimental import pallas as pl
from jax.experimental.pallas import tpu as pltpu

# ---------------- small synthetic BERT config ----------------
VOCAB = 128
HIDDEN = 32
N_LAYERS = 2
N_HEADS = 4
HEAD_DIM = HIDDEN // N_HEADS
INTER = 4 * HIDDEN
MAX_POS = 16
NUM_LABELS = 2
LN_EPS = 1e-12
LANE = 128                      # lane-dense width for padded inputs/outputs
QKV_OUT = 3 * HIDDEN            # fused QKV output columns (96)
GELU_C = math.sqrt(2.0 / math.pi)


# ---------------- fused Pallas kernel ----------------
def _layer_norm(v, g, b):
    mu = jnp.mean(v, axis=-1, keepdims=True)
    var = jnp.mean((v - mu) ** 2, axis=-1, keepdims=True)
    return (v - mu) * jax.lax.rsqrt(var + LN_EPS) * g + b


def _bert_fused_kernel(with_loss, B, S,
                       x_ref, mask_ref, eg_ref, eb_ref,
                       qkv_w, qkv_b, o_w, o_b,
                       ln1_g, ln1_b, i_w, i_b, f_w, f_b, ln2_g, ln2_b,
                       pool_w, pool_b, cls_w, cls_b,
                       *rest):
    if with_loss:
        sel_ref, logits_ref, loss_ref = rest
    else:
        (logits_ref,) = rest

    x = _layer_norm(x_ref[...].astype(jnp.float32), eg_ref[...], eb_ref[...])   # [B*S, H]
    # Additive attention-mask bias, stored lane-dense as [B, 128]; only [:, :S] is real.
    mb = mask_ref[...][:, :S].reshape(B, 1, S)

    # Static 2-layer / 4-head loops: fully unrolled inside ONE pallas_call.
    for l in range(N_LAYERS):
        # ---- fused QKV projection: one lane-dense bf16 matmul per layer ----
        qkv = (jnp.dot(x.astype(jnp.bfloat16), qkv_w[l],
                       preferred_element_type=jnp.float32) + qkv_b[l])           # [B*S, 96]

        ctx_heads = []
        for h in range(N_HEADS):
            # Static lane slices of the resident qkv slab; the reshape
            # [B*S, DH] -> [B, S, DH] is a pure re-view (no cross-tile move).
            q = qkv[:, h * HEAD_DIM:(h + 1) * HEAD_DIM].reshape(B, S, HEAD_DIM)
            k = qkv[:, HIDDEN + h * HEAD_DIM:HIDDEN + (h + 1) * HEAD_DIM].reshape(B, S, HEAD_DIM)
            v = qkv[:, 2 * HIDDEN + h * HEAD_DIM:2 * HIDDEN + (h + 1) * HEAD_DIM].reshape(B, S, HEAD_DIM)
            # 1/sqrt(head_dim) is pre-folded into the packed Q weight columns.
            s = jnp.einsum("bqd,bkd->bqk", q, k, preferred_element_type=jnp.float32) + mb
            s = s - jnp.max(s, axis=-1, keepdims=True)
            p = jnp.exp(s)
            p = p * pl.reciprocal(jnp.sum(p, axis=-1, keepdims=True), approx=True)
            ctx_heads.append(
                jnp.einsum("bqk,bkd->bqd", p, v,
                           preferred_element_type=jnp.float32).reshape(B * S, HEAD_DIM))
        ctx_all = jnp.concatenate(ctx_heads, axis=-1)                            # [B*S, H] head-major

        # ---- fused output projection: one [B*S,H]@[H,H] matmul ----
        attn = (jnp.dot(ctx_all.astype(jnp.bfloat16), o_w[l],
                        preferred_element_type=jnp.float32) + o_b[l])
        x = _layer_norm(attn + x, ln1_g[l], ln1_b[l])

        hmid = jnp.dot(x.astype(jnp.bfloat16), i_w[l],
                       preferred_element_type=jnp.float32) + i_b[l]
        # TODO(synk): HF BERT default is exact erf-GELU; tanh approximation kept
        # for portable Mosaic lowering (tiny numerical deviation).
        hmid = 0.5 * hmid * (1.0 + jnp.tanh(GELU_C * (hmid + 0.044715 * hmid * hmid * hmid)))
        ffn = jnp.dot(hmid.astype(jnp.bfloat16), f_w[l],
                      preferred_element_type=jnp.float32) + f_b[l]
        x = _layer_norm(ffn + x, ln2_g[l], ln2_b[l])

    # Pooler + classifier head applied to every token row (rows are cheap and
    # this keeps the output a lane-dense [B*S, 128] slab); only the [CLS] rows
    # are consumed outside the kernel.
    pooled = jnp.tanh(jnp.dot(x.astype(jnp.bfloat16), pool_w[...],
                              preferred_element_type=jnp.float32) + pool_b[...])
    logits_pad = jnp.dot(pooled.astype(jnp.bfloat16), cls_w[...],
                         preferred_element_type=jnp.float32) + cls_b[...]
    logits_ref[...] = logits_pad

    if with_loss:
        # Weighted CE fused into the epilogue: sel holds w_{y_b} at each
        # example's [CLS] row / true-class column, zero elsewhere (lane-dense
        # [B*S, 128]), so loss = sum(sel * -log_softmax(logits)) / sum(sel)
        # == torch CrossEntropyLoss(weight=w, reduction='mean').
        lg = logits_pad[:, :NUM_LABELS]                        # [B*S, C]
        m = jnp.max(lg, axis=-1, keepdims=True)
        lse = jnp.log(jnp.sum(jnp.exp(lg - m), axis=-1, keepdims=True)) + m
        neg_logp = lse - logits_pad                            # valid where sel != 0
        sel = sel_ref[...]
        num = jnp.sum(sel * neg_logp, keepdims=True)           # [1, 1]
        den = jnp.sum(sel, keepdims=True)                      # [1, 1]
        # Exact divide kept for the single final scalar (keeps loss closest to torch).
        loss_ref[...] = jnp.broadcast_to(num / den, loss_ref.shape)


def _full_spec(shape):
    zero = (0,) * len(shape)
    return pl.BlockSpec(shape, lambda i, _z=zero: _z)


def _fused_call(packed, x_emb, mask_pad, sel):
    with_loss = sel is not None
    BS = x_emb.shape[0]
    B = mask_pad.shape[0]
    S = BS // B
    inputs = [x_emb, mask_pad,
              packed["emb_ln_g"], packed["emb_ln_b"],
              packed["qkv_w"], packed["qkv_b"], packed["o_w"], packed["o_b"],
              packed["ln1_g"], packed["ln1_b"], packed["i_w"], packed["i_b"],
              packed["f_w"], packed["f_b"], packed["ln2_g"], packed["ln2_b"],
              packed["pool_w"], packed["pool_b"], packed["cls_w"], packed["cls_b"]]
    out_shapes = [jax.ShapeDtypeStruct((BS, LANE), jnp.float32)]
    if with_loss:
        inputs.append(sel)
        out_shapes.append(jax.ShapeDtypeStruct((1, LANE), jnp.float32))
    return pl.pallas_call(
        partial(_bert_fused_kernel, with_loss, B, S),
        grid=(1,),
        in_specs=[_full_spec(a.shape) for a in inputs],
        out_specs=tuple(_full_spec(s.shape) for s in out_shapes),
        out_shape=tuple(out_shapes),
        compiler_params=pltpu.CompilerParams(dimension_semantics=("arbitrary",)),
    )(*inputs)


# ---------------- thin JAX glue (embedding gather, mask, slicing) ----------------
def _embed(embeds, input_ids):
    B, S = input_ids.shape
    # TODO(synk): token-id embedding gather stays in plain JAX (data-dependent
    # gather; not worth a Pallas DMA-gather at this scale).
    emb = (jnp.take(embeds["word"], input_ids, axis=0)
           + embeds["pos"][None, :S, :]
           + embeds["type"][0][None, None, :])
    return emb.reshape(B * S, HIDDEN).astype(jnp.float32)


def _mask_bias_padded(attention_mask):
    mb = (1.0 - attention_mask.astype(jnp.float32)) * -10000.0        # [B, S]
    B, S = mb.shape
    return jnp.pad(mb, ((0, 0), (0, LANE - S)))                       # lane-dense [B, 128]


@jax.jit
def _forward_with_loss(packed, embeds, class_weights, input_ids, attention_mask, labels):
    B, S = input_ids.shape
    x_emb = _embed(embeds, input_ids)
    onehot = jax.nn.one_hot(labels, NUM_LABELS, dtype=jnp.float32)               # [B, C]
    # Weight of the true class, placed at each example's [CLS] row, lane-padded.
    sel = jnp.zeros((B * S, NUM_LABELS), jnp.float32).at[jnp.arange(B) * S].set(
        onehot * class_weights.reshape(1, NUM_LABELS))
    sel = jnp.pad(sel, ((0, 0), (0, LANE - NUM_LABELS)))                         # [B*S, 128]
    logits_all, loss_pad = _fused_call(packed, x_emb, _mask_bias_padded(attention_mask), sel)
    logits = logits_all.reshape(B, S, LANE)[:, 0, :NUM_LABELS]
    return loss_pad[0, 0], logits


@jax.jit
def _forward_logits(packed, embeds, input_ids, attention_mask):
    B, S = input_ids.shape
    x_emb = _embed(embeds, input_ids)
    (logits_all,) = _fused_call(packed, x_emb, _mask_bias_padded(attention_mask), None)
    return logits_all.reshape(B, S, LANE)[:, 0, :NUM_LABELS]


# ---------------- parameter packing ----------------
def pack_params(params):
    """Repack per-layer params into stacked, kernel-friendly tensors:
      - fused QKV projection [L, H, 3H] (bf16, softmax scale folded into Q columns),
      - output / FFN / pooler / classifier weights in bf16 (MXU operands),
      - biases / LN params as broadcastable f32 rows,
      - classifier head zero-padded to 128 output lanes (lane-dense stores).
    """
    scale = 1.0 / math.sqrt(HEAD_DIM)
    layers = params["layers"]

    qkv_w = jnp.stack([jnp.concatenate([lp["q_w"] * scale, lp["k_w"], lp["v_w"]], axis=1)
                       for lp in layers]).astype(jnp.bfloat16)                   # [L, H, 3H]
    qkv_b = jnp.stack([jnp.concatenate([lp["q_b"] * scale, lp["k_b"], lp["v_b"]]
                                       ).reshape(1, QKV_OUT)
                       for lp in layers])                                        # [L, 1, 3H]

    def row(name, width):
        return jnp.stack([layers[l][name].reshape(1, width) for l in range(N_LAYERS)])

    return {
        "emb_ln_g": params["emb_ln_g"].reshape(1, HIDDEN),
        "emb_ln_b": params["emb_ln_b"].reshape(1, HIDDEN),
        "qkv_w": qkv_w, "qkv_b": qkv_b,
        "o_w": jnp.stack([lp["o_w"] for lp in layers]).astype(jnp.bfloat16),     # [L, H, H]
        "o_b": row("o_b", HIDDEN),
        "ln1_g": row("ln1_g", HIDDEN), "ln1_b": row("ln1_b", HIDDEN),
        "i_w": jnp.stack([lp["i_w"] for lp in layers]).astype(jnp.bfloat16),     # [L, H, INTER]
        "i_b": row("i_b", INTER),
        "f_w": jnp.stack([lp["f_w"] for lp in layers]).astype(jnp.bfloat16),     # [L, INTER, H]
        "f_b": row("f_b", HIDDEN),
        "ln2_g": row("ln2_g", HIDDEN), "ln2_b": row("ln2_b", HIDDEN),
        "pool_w": params["pooler_w"].astype(jnp.bfloat16),
        "pool_b": params["pooler_b"].reshape(1, HIDDEN),
        "cls_w": jnp.zeros((HIDDEN, LANE), jnp.float32).at[:, :NUM_LABELS].set(
            params["cls_w"]).astype(jnp.bfloat16),
        "cls_b": jnp.zeros((1, LANE), jnp.float32).at[:, :NUM_LABELS].set(
            params["cls_b"].reshape(1, NUM_LABELS)),
    }


# ---------------- model wrapper ----------------
class WeightedModel:
    """JAX/Pallas analogue of the PyTorch WeightedModel (single fused kernel)."""

    def __init__(self, params, class_weights):
        self.packed = pack_params(params)
        self.embeds = {"word": params["word_emb"],
                       "pos": params["pos_emb"],
                       "type": params["type_emb"]}
        self.class_weights = jnp.asarray(class_weights, jnp.float32)

    def __call__(self, input_ids=None, attention_mask=None, labels=None):
        if labels is not None:
            loss, logits = _forward_with_loss(self.packed, self.embeds, self.class_weights,
                                              input_ids, attention_mask, labels)
            return {"loss": loss, "logits": logits}
        return _forward_logits(self.packed, self.embeds, input_ids, attention_mask)


# ---------------- deterministic parameter init ----------------
def init_params(key):
    keys = iter(jax.random.split(key, 64))

    def dense(k, fan_in, fan_out):
        return 0.02 * jax.random.normal(k, (fan_in, fan_out), jnp.float32)

    params = {
        "word_emb": 0.02 * jax.random.normal(next(keys), (VOCAB, HIDDEN), jnp.float32),
        "pos_emb": 0.02 * jax.random.normal(next(keys), (MAX_POS, HIDDEN), jnp.float32),
        "type_emb": 0.02 * jax.random.normal(next(keys), (2, HIDDEN), jnp.float32),
        "emb_ln_g": jnp.ones((HIDDEN,), jnp.float32),
        "emb_ln_b": jnp.zeros((HIDDEN,), jnp.float32),
        "layers": [],
        "pooler_w": dense(next(keys), HIDDEN, HIDDEN),
        "pooler_b": jnp.zeros((HIDDEN,), jnp.float32),
        "cls_w": dense(next(keys), HIDDEN, NUM_LABELS),
        "cls_b": jnp.zeros((NUM_LABELS,), jnp.float32),
    }
    for _ in range(N_LAYERS):
        params["layers"].append({
            "q_w": dense(next(keys), HIDDEN, HIDDEN), "q_b": jnp.zeros((HIDDEN,), jnp.float32),
            "k_w": dense(next(keys), HIDDEN, HIDDEN), "k_b": jnp.zeros((HIDDEN,), jnp.float32),
            "v_w": dense(next(keys), HIDDEN, HIDDEN), "v_b": jnp.zeros((HIDDEN,), jnp.float32),
            "o_w": dense(next(keys), HIDDEN, HIDDEN), "o_b": jnp.zeros((HIDDEN,), jnp.float32),
            "ln1_g": jnp.ones((HIDDEN,), jnp.float32), "ln1_b": jnp.zeros((HIDDEN,), jnp.float32),
            "i_w": dense(next(keys), HIDDEN, INTER), "i_b": jnp.zeros((INTER,), jnp.float32),
            "f_w": dense(next(keys), INTER, HIDDEN), "f_b": jnp.zeros((HIDDEN,), jnp.float32),
            "ln2_g": jnp.ones((HIDDEN,), jnp.float32), "ln2_b": jnp.zeros((HIDDEN,), jnp.float32),
        })
    return params


if __name__ == "__main__":
    B, S = 2, 8
    key = jax.random.PRNGKey(0)
    k_ids, k_lab = jax.random.split(key)

    input_ids = jax.random.randint(k_ids, (B, S), 0, VOCAB, dtype=jnp.int32)
    attention_mask = jnp.ones((B, S), jnp.int32).at[1, 6:].set(0)     # second sequence padded
    labels = jax.random.randint(k_lab, (B,), 0, NUM_LABELS, dtype=jnp.int32)

    params = init_params(jax.random.PRNGKey(42))

    # class weights as in the reference: tensor([frac_fraud, frac_not_fraud]).flip(0)
    class_fractions = {"not_fraud": 0.8, "fraud": 0.2}
    weights = jnp.array([class_fractions["fraud"], class_fractions["not_fraud"]],
                        jnp.float32)[::-1]

    model = WeightedModel(params, weights)
    out = model(input_ids=input_ids, attention_mask=attention_mask, labels=labels)
    jax.block_until_ready(out)
    assert out["logits"].shape == (B, NUM_LABELS)
    assert bool(jnp.isfinite(out["loss"]))
    print("KERNEL_OK")
</pallas_src>

<mosaic_0001>
module attributes {stable_mosaic.version = 11 : i64} {
  func.func @_bert_fused_kernel(%arg0: i32, %arg1: memref<16x32xf32, #tpu.memory_space<vmem>>, %arg2: memref<2x128xf32, #tpu.memory_space<vmem>>, %arg3: memref<1x32xf32, #tpu.memory_space<vmem>>, %arg4: memref<1x32xf32, #tpu.memory_space<vmem>>, %arg5: memref<2x32x96xbf16, #tpu.memory_space<vmem>>, %arg6: memref<2x1x96xf32, #tpu.memory_space<vmem>>, %arg7: memref<2x32x32xbf16, #tpu.memory_space<vmem>>, %arg8: memref<2x1x32xf32, #tpu.memory_space<vmem>>, %arg9: memref<2x1x32xf32, #tpu.memory_space<vmem>>, %arg10: memref<2x1x32xf32, #tpu.memory_space<vmem>>, %arg11: memref<2x32x128xbf16, #tpu.memory_space<vmem>>, %arg12: memref<2x1x128xf32, #tpu.memory_space<vmem>>, %arg13: memref<2x128x32xbf16, #tpu.memory_space<vmem>>, %arg14: memref<2x1x32xf32, #tpu.memory_space<vmem>>, %arg15: memref<2x1x32xf32, #tpu.memory_space<vmem>>, %arg16: memref<2x1x32xf32, #tpu.memory_space<vmem>>, %arg17: memref<32x32xbf16, #tpu.memory_space<vmem>>, %arg18: memref<1x32xf32, #tpu.memory_space<vmem>>, %arg19: memref<32x128xbf16, #tpu.memory_space<vmem>>, %arg20: memref<1x128xf32, #tpu.memory_space<vmem>>, %arg21: memref<16x128xf32, #tpu.memory_space<vmem>>, %arg22: memref<16x128xf32, #tpu.memory_space<vmem>>, %arg23: memref<1x128xf32, #tpu.memory_space<vmem>>) attributes {dimension_semantics = [#tpu.dimension_semantics<arbitrary>], iteration_bounds = array<i64: 1>, scalar_prefetch = 0 : i64, scratch_operands = 0 : i64, tpu.core_type = #tpu.core_type<tc>, window_params = [{pipeline_mode = #tpu.pipeline_mode<synchronous>, transform_indices = @transform_0, window_bounds = array<i64: 16, 32>}, {pipeline_mode = #tpu.pipeline_mode<synchronous>, transform_indices = @transform_1, window_bounds = array<i64: 2, 128>}, {pipeline_mode = #tpu.pipeline_mode<synchronous>, transform_indices = @transform_2, window_bounds = array<i64: 1, 32>}, {pipeline_mode = #tpu.pipeline_mode<synchronous>, transform_indices = @transform_3, window_bounds = array<i64: 1, 32>}, {pipeline_mode = #tpu.pipeline_mode<synchronous>, transform_indices = @transform_4, window_bounds = array<i64: 2, 32, 96>}, {pipeline_mode = #tpu.pipeline_mode<synchronous>, transform_indices = @transform_5, window_bounds = array<i64: 2, 1, 96>}, {pipeline_mode = #tpu.pipeline_mode<synchronous>, transform_indices = @transform_6, window_bounds = array<i64: 2, 32, 32>}, {pipeline_mode = #tpu.pipeline_mode<synchronous>, transform_indices = @transform_7, window_bounds = array<i64: 2, 1, 32>}, {pipeline_mode = #tpu.pipeline_mode<synchronous>, transform_indices = @transform_8, window_bounds = array<i64: 2, 1, 32>}, {pipeline_mode = #tpu.pipeline_mode<synchronous>, transform_indices = @transform_9, window_bounds = array<i64: 2, 1, 32>}, {pipeline_mode = #tpu.pipeline_mode<synchronous>, transform_indices = @transform_10, window_bounds = array<i64: 2, 32, 128>}, {pipeline_mode = #tpu.pipeline_mode<synchronous>, transform_indices = @transform_11, window_bounds = array<i64: 2, 1, 128>}, {pipeline_mode = #tpu.pipeline_mode<synchronous>, transform_indices = @transform_12, window_bounds = array<i64: 2, 128, 32>}, {pipeline_mode = #tpu.pipeline_mode<synchronous>, transform_indices = @transform_13, window_bounds = array<i64: 2, 1, 32>}, {pipeline_mode = #tpu.pipeline_mode<synchronous>, transform_indices = @transform_14, window_bounds = array<i64: 2, 1, 32>}, {pipeline_mode = #tpu.pipeline_mode<synchronous>, transform_indices = @transform_15, window_bounds = array<i64: 2, 1, 32>}, {pipeline_mode = #tpu.pipeline_mode<synchronous>, transform_indices = @transform_16, window_bounds = array<i64: 32, 32>}, {pipeline_mode = #tpu.pipeline_mode<synchronous>, transform_indices = @transform_17, window_bounds = array<i64: 1, 32>}, {pipeline_mode = #tpu.pipeline_mode<synchronous>, transform_indices = @transform_18, window_bounds = array<i64: 32, 128>}, {pipeline_mode = #tpu.pipeline_mode<synchronous>, transform_indices = @transform_19, window_bounds = array<i64: 1, 128>}, {pipeline_mode = #tpu.pipeline_mode<synchronous>, transform_indices = @transform_20, window_bounds = array<i64: 16, 128>}, {pipeline_mode = #tpu.pipeline_mode<synchronous>, transform_indices = @transform_21, window_bounds = array<i64: 16, 128>}, {pipeline_mode = #tpu.pipeline_mode<synchronous>, transform_indices = @transform_22, window_bounds = array<i64: 1, 128>}]} {
    %c0 = arith.constant 0 : index
    %c0_0 = arith.constant 0 : index
    %0 = vector.load %arg1[%c0, %c0_0] : memref<16x32xf32, #tpu.memory_space<vmem>>, vector<16x32xf32>
    %c0_1 = arith.constant 0 : index
    %c0_2 = arith.constant 0 : index
    %1 = vector.load %arg3[%c0_1, %c0_2] : memref<1x32xf32, #tpu.memory_space<vmem>>, vector<1x32xf32>
    %c0_3 = arith.constant 0 : index
    %c0_4 = arith.constant 0 : index
    %2 = vector.load %arg4[%c0_3, %c0_4] : memref<1x32xf32, #tpu.memory_space<vmem>>, vector<1x32xf32>
    %cst = arith.constant dense<0.000000e+00> : vector<16xf32>
    %3 = vector.multi_reduction <add>, %0, %cst [1] : vector<16x32xf32> to vector<16xf32>
    %4 = vector.shape_cast %3 : vector<16xf32> to vector<16x1xf32>
    %cst_5 = arith.constant 3.200000e+01 : f32
    %5 = vector.broadcast %cst_5 : f32 to vector<16x1xf32>
    %6 = arith.divf %4, %5 : vector<16x1xf32>
    %7 = vector.broadcast %6 : vector<16x1xf32> to vector<16x32xf32>
    %8 = arith.subf %0, %7 : vector<16x32xf32>
    %9 = arith.mulf %8, %8 : vector<16x32xf32>
    %cst_6 = arith.constant dense<0.000000e+00> : vector<16xf32>
    %10 = vector.multi_reduction <add>, %9, %cst_6 [1] : vector<16x32xf32> to vector<16xf32>
    %11 = vector.shape_cast %10 : vector<16xf32> to vector<16x1xf32>
    %cst_7 = arith.constant 3.200000e+01 : f32
    %12 = vector.broadcast %cst_7 : f32 to vector<16x1xf32>
    %13 = arith.divf %11, %12 : vector<16x1xf32>
    %14 = vector.broadcast %6 : vector<16x1xf32> to vector<16x32xf32>
    %15 = arith.subf %0, %14 : vector<16x32xf32>
    %cst_8 = arith.constant 9.99999996E-13 : f32
    %16 = vector.broadcast %cst_8 : f32 to vector<16x1xf32>
    %17 = arith.addf %13, %16 : vector<16x1xf32>
    %18 = math.rsqrt %17 : vector<16x1xf32>
    %19 = vector.broadcast %18 : vector<16x1xf32> to vector<16x32xf32>
    %20 = arith.mulf %15, %19 : vector<16x32xf32>
    %21 = vector.broadcast %1 : vector<1x32xf32> to vector<16x32xf32>
    %22 = arith.mulf %20, %21 : vector<16x32xf32>
    %23 = vector.broadcast %2 : vector<1x32xf32> to vector<16x32xf32>
    %24 = arith.addf %22, %23 : vector<16x32xf32>
    %c0_9 = arith.constant 0 : index
    %c0_10 = arith.constant 0 : index
    %25 = vector.load %arg2[%c0_9, %c0_10] : memref<2x128xf32, #tpu.memory_space<vmem>>, vector<2x128xf32>
    %26 = vector.extract_strided_slice %25 {offsets = [0, 0], sizes = [2, 8], strides = [1, 1]} : vector<2x128xf32> to vector<2x8xf32>
    %27 = vector.shape_cast %26 : vector<2x8xf32> to vector<2x1x8xf32>
    %28 = arith.truncf %24 : vector<16x32xf32> to vector<16x32xbf16>
    %c0_11 = arith.constant 0 : index
    %c0_12 = arith.constant 0 : index
    %c0_13 = arith.constant 0 : index
    %29 = vector.load %arg5[%c0_11, %c0_12, %c0_13] : memref<2x32x96xbf16, #tpu.memory_space<vmem>>, vector<1x32x96xbf16>
    %30 = vector.shape_cast %29 : vector<1x32x96xbf16> to vector<32x96xbf16>
    %cst_14 = arith.constant dense<0.000000e+00> : vector<16x96xf32>
    %31 = tpu.matmul %28, %30, %cst_14 {dimension_numbers = #tpu.dot_dimension_numbers<[1], [0], [0], [1], [0, 0, 1, 1], [], []>} : vector<16x32xbf16>, vector<32x96xbf16>, vector<16x96xf32> -> vector<16x96xf32>
    %c0_15 = arith.constant 0 : index
    %c0_16 = arith.constant 0 : index
    %c0_17 = arith.constant 0 : index
    %32 = vector.load %arg6[%c0_15, %c0_16, %c0_17] : memref<2x1x96xf32, #tpu.memory_space<vmem>>, vector<1x1x96xf32>
    %33 = vector.shape_cast %32 : vector<1x1x96xf32> to vector<1x96xf32>
    %34 = vector.broadcast %33 : vector<1x96xf32> to vector<16x96xf32>
    %35 = arith.addf %31, %34 : vector<16x96xf32>
    %36 = vector.extract_strided_slice %35 {offsets = [0, 0], sizes = [16, 8], strides = [1, 1]} : vector<16x96xf32> to vector<16x8xf32>
    %37 = vector.shape_cast %36 : vector<16x8xf32> to vector<2x8x8xf32>
    %38 = vector.extract_strided_slice %35 {offsets = [0, 32], sizes = [16, 8], strides = [1, 1]} : vector<16x96xf32> to vector<16x8xf32>
    %39 = vector.shape_cast %38 : vector<16x8xf32> to vector<2x8x8xf32>
    %40 = vector.extract_strided_slice %35 {offsets = [0, 64], sizes = [16, 8], strides = [1, 1]} : vector<16x96xf32> to vector<16x8xf32>
    %41 = vector.shape_cast %40 : vector<16x8xf32> to vector<2x8x8xf32>
    "tpu.trace_start"() <{level = 10 : i32, message = "bqd,bkd->bqk"}> : () -> ()
    %cst_18 = arith.constant dense<0.000000e+00> : vector<2x8x8xf32>
    %42 = tpu.matmul %37, %39, %cst_18 {dimension_numbers = #tpu.dot_dimension_numbers<[2], [2], [1], [1], [0, 0, 0, 1, 1, 1], [0], [0]>} : vector<2x8x8xf32>, vector<2x8x8xf32>, vector<2x8x8xf32> -> vector<2x8x8xf32>
    "tpu.trace_stop"() : () -> ()
    %43 = vector.broadcast %27 : vector<2x1x8xf32> to vector<2x8x8xf32>
    %44 = arith.addf %42, %43 : vector<2x8x8xf32>
    %cst_19 = arith.constant dense<0xFF800000> : vector<2x8xf32>
    %45 = vector.multi_reduction <maximumf>, %44, %cst_19 [2] : vector<2x8x8xf32> to vector<2x8xf32>
    %46 = vector.shape_cast %45 : vector<2x8xf32> to vector<2x8x1xf32>
    %47 = vector.broadcast %46 : vector<2x8x1xf32> to vector<2x8x8xf32>
    %48 = arith.subf %44, %47 : vector<2x8x8xf32>
    %49 = math.exp %48 : vector<2x8x8xf32>
    %cst_20 = arith.constant dense<0.000000e+00> : vector<2x8xf32>
    %50 = vector.multi_reduction <add>, %49, %cst_20 [2] : vector<2x8x8xf32> to vector<2x8xf32>
    %51 = vector.shape_cast %50 : vector<2x8xf32> to vector<2x8x1xf32>
    %52 = tpu.reciprocal %51 {approx = true} : vector<2x8x1xf32> -> vector<2x8x1xf32>
    %53 = vector.broadcast %52 : vector<2x8x1xf32> to vector<2x8x8xf32>
    %54 = arith.mulf %49, %53 : vector<2x8x8xf32>
    "tpu.trace_start"() <{level = 10 : i32, message = "bqk,bkd->bqd"}> : () -> ()
    %cst_21 = arith.constant dense<0.000000e+00> : vector<2x8x8xf32>
    %55 = tpu.matmul %54, %41, %cst_21 {dimension_numbers = #tpu.dot_dimension_numbers<[2], [1], [1], [2], [0, 0, 0, 1, 1, 2], [0], [0]>} : vector<2x8x8xf32>, vector<2x8x8xf32>, vector<2x8x8xf32> -> vector<2x8x8xf32>
    "tpu.trace_stop"() : () -> ()
    %56 = vector.shape_cast %55 : vector<2x8x8xf32> to vector<16x8xf32>
    %57 = vector.extract_strided_slice %35 {offsets = [0, 8], sizes = [16, 8], strides = [1, 1]} : vector<16x96xf32> to vector<16x8xf32>
    %58 = vector.shape_cast %57 : vector<16x8xf32> to vector<2x8x8xf32>
    %59 = vector.extract_strided_slice %35 {offsets = [0, 40], sizes = [16, 8], strides = [1, 1]} : vector<16x96xf32> to vector<16x8xf32>
    %60 = vector.shape_cast %59 : vector<16x8xf32> to vector<2x8x8xf32>
    %61 = vector.extract_strided_slice %35 {offsets = [0, 72], sizes = [16, 8], strides = [1, 1]} : vector<16x96xf32> to vector<16x8xf32>
    %62 = vector.shape_cast %61 : vector<16x8xf32> to vector<2x8x8xf32>
    "tpu.trace_start"() <{level = 10 : i32, message = "bqd,bkd->bqk"}> : () -> ()
    %cst_22 = arith.constant dense<0.000000e+00> : vector<2x8x8xf32>
    %63 = tpu.matmul %58, %60, %cst_22 {dimension_numbers = #tpu.dot_dimension_numbers<[2], [2], [1], [1], [0, 0, 0, 1, 1, 1], [0], [0]>} : vector<2x8x8xf32>, vector<2x8x8xf32>, vector<2x8x8xf32> -> vector<2x8x8xf32>
    "tpu.trace_stop"() : () -> ()
    %64 = vector.broadcast %27 : vector<2x1x8xf32> to vector<2x8x8xf32>
    %65 = arith.addf %63, %64 : vector<2x8x8xf32>
    %cst_23 = arith.constant dense<0xFF800000> : vector<2x8xf32>
    %66 = vector.multi_reduction <maximumf>, %65, %cst_23 [2] : vector<2x8x8xf32> to vector<2x8xf32>
    %67 = vector.shape_cast %66 : vector<2x8xf32> to vector<2x8x1xf32>
    %68 = vector.broadcast %67 : vector<2x8x1xf32> to vector<2x8x8xf32>
    %69 = arith.subf %65, %68 : vector<2x8x8xf32>
    %70 = math.exp %69 : vector<2x8x8xf32>
    %cst_24 = arith.constant dense<0.000000e+00> : vector<2x8xf32>
    %71 = vector.multi_reduction <add>, %70, %cst_24 [2] : vector<2x8x8xf32> to vector<2x8xf32>
    %72 = vector.shape_cast %71 : vector<2x8xf32> to vector<2x8x1xf32>
    %73 = tpu.reciprocal %72 {approx = true} : vector<2x8x1xf32> -> vector<2x8x1xf32>
    %74 = vector.broadcast %73 : vector<2x8x1xf32> to vector<2x8x8xf32>
    %75 = arith.mulf %70, %74 : vector<2x8x8xf32>
    "tpu.trace_start"() <{level = 10 : i32, message = "bqk,bkd->bqd"}> : () -> ()
    %cst_25 = arith.constant dense<0.000000e+00> : vector<2x8x8xf32>
    %76 = tpu.matmul %75, %62, %cst_25 {dimension_numbers = #tpu.dot_dimension_numbers<[2], [1], [1], [2], [0, 0, 0, 1, 1, 2], [0], [0]>} : vector<2x8x8xf32>, vector<2x8x8xf32>, vector<2x8x8xf32> -> vector<2x8x8xf32>
    "tpu.trace_stop"() : () -> ()
    %77 = vector.shape_cast %76 : vector<2x8x8xf32> to vector<16x8xf32>
    %78 = vector.extract_strided_slice %35 {offsets = [0, 16], sizes = [16, 8], strides = [1, 1]} : vector<16x96xf32> to vector<16x8xf32>
    %79 = vector.shape_cast %78 : vector<16x8xf32> to vector<2x8x8xf32>
    %80 = vector.extract_strided_slice %35 {offsets = [0, 48], sizes = [16, 8], strides = [1, 1]} : vector<16x96xf32> to vector<16x8xf32>
    %81 = vector.shape_cast %80 : vector<16x8xf32> to vector<2x8x8xf32>
    %82 = vector.extract_strided_slice %35 {offsets = [0, 80], sizes = [16, 8], strides = [1, 1]} : vector<16x96xf32> to vector<16x8xf32>
    %83 = vector.shape_cast %82 : vector<16x8xf32> to vector<2x8x8xf32>
    "tpu.trace_start"() <{level = 10 : i32, message = "bqd,bkd->bqk"}> : () -> ()
    %cst_26 = arith.constant dense<0.000000e+00> : vector<2x8x8xf32>
    %84 = tpu.matmul %79, %81, %cst_26 {dimension_numbers = #tpu.dot_dimension_numbers<[2], [2], [1], [1], [0, 0, 0, 1, 1, 1], [0], [0]>} : vector<2x8x8xf32>, vector<2x8x8xf32>, vector<2x8x8xf32> -> vector<2x8x8xf32>
    "tpu.trace_stop"() : () -> ()
    %85 = vector.broadcast %27 : vector<2x1x8xf32> to vector<2x8x8xf32>
    %86 = arith.addf %84, %85 : vector<2x8x8xf32>
    %cst_27 = arith.constant dense<0xFF800000> : vector<2x8xf32>
    %87 = vector.multi_reduction <maximumf>, %86, %cst_27 [2] : vector<2x8x8xf32> to vector<2x8xf32>
    %88 = vector.shape_cast %87 : vector<2x8xf32> to vector<2x8x1xf32>
    %89 = vector.broadcast %88 : vector<2x8x1xf32> to vector<2x8x8xf32>
    %90 = arith.subf %86, %89 : vector<2x8x8xf32>
    %91 = math.exp %90 : vector<2x8x8xf32>
    %cst_28 = arith.constant dense<0.000000e+00> : vector<2x8xf32>
    %92 = vector.multi_reduction <add>, %91, %cst_28 [2] : vector<2x8x8xf32> to vector<2x8xf32>
    %93 = vector.shape_cast %92 : vector<2x8xf32> to vector<2x8x1xf32>
    %94 = tpu.reciprocal %93 {approx = true} : vector<2x8x1xf32> -> vector<2x8x1xf32>
    %95 = vector.broadcast %94 : vector<2x8x1xf32> to vector<2x8x8xf32>
    %96 = arith.mulf %91, %95 : vector<2x8x8xf32>
    "tpu.trace_start"() <{level = 10 : i32, message = "bqk,bkd->bqd"}> : () -> ()
    %cst_29 = arith.constant dense<0.000000e+00> : vector<2x8x8xf32>
    %97 = tpu.matmul %96, %83, %cst_29 {dimension_numbers = #tpu.dot_dimension_numbers<[2], [1], [1], [2], [0, 0, 0, 1, 1, 2], [0], [0]>} : vector<2x8x8xf32>, vector<2x8x8xf32>, vector<2x8x8xf32> -> vector<2x8x8xf32>
    "tpu.trace_stop"() : () -> ()
    %98 = vector.shape_cast %97 : vector<2x8x8xf32> to vector<16x8xf32>
    %99 = vector.extract_strided_slice %35 {offsets = [0, 24], sizes = [16, 8], strides = [1, 1]} : vector<16x96xf32> to vector<16x8xf32>
    %100 = vector.shape_cast %99 : vector<16x8xf32> to vector<2x8x8xf32>
    %101 = vector.extract_strided_slice %35 {offsets = [0, 56], sizes = [16, 8], strides = [1, 1]} : vector<16x96xf32> to vector<16x8xf32>
    %102 = vector.shape_cast %101 : vector<16x8xf32> to vector<2x8x8xf32>
    %103 = vector.extract_strided_slice %35 {offsets = [0, 88], sizes = [16, 8], strides = [1, 1]} : vector<16x96xf32> to vector<16x8xf32>
    %104 = vector.shape_cast %103 : vector<16x8xf32> to vector<2x8x8xf32>
    "tpu.trace_start"() <{level = 10 : i32, message = "bqd,bkd->bqk"}> : () -> ()
    %cst_30 = arith.constant dense<0.000000e+00> : vector<2x8x8xf32>
    %105 = tpu.matmul %100, %102, %cst_30 {dimension_numbers = #tpu.dot_dimension_numbers<[2], [2], [1], [1], [0, 0, 0, 1, 1, 1], [0], [0]>} : vector<2x8x8xf32>, vector<2x8x8xf32>, vector<2x8x8xf32> -> vector<2x8x8xf32>
    "tpu.trace_stop"() : () -> ()
    %106 = vector.broadcast %27 : vector<2x1x8xf32> to vector<2x8x8xf32>
    %107 = arith.addf %105, %106 : vector<2x8x8xf32>
    %cst_31 = arith.constant dense<0xFF800000> : vector<2x8xf32>
    %108 = vector.multi_reduction <maximumf>, %107, %cst_31 [2] : vector<2x8x8xf32> to vector<2x8xf32>
    %109 = vector.shape_cast %108 : vector<2x8xf32> to vector<2x8x1xf32>
    %110 = vector.broadcast %109 : vector<2x8x1xf32> to vector<2x8x8xf32>
    %111 = arith.subf %107, %110 : vector<2x8x8xf32>
    %112 = math.exp %111 : vector<2x8x8xf32>
    %cst_32 = arith.constant dense<0.000000e+00> : vector<2x8xf32>
    %113 = vector.multi_reduction <add>, %112, %cst_32 [2] : vector<2x8x8xf32> to vector<2x8xf32>
    %114 = vector.shape_cast %113 : vector<2x8xf32> to vector<2x8x1xf32>
    %115 = tpu.reciprocal %114 {approx = true} : vector<2x8x1xf32> -> vector<2x8x1xf32>
    %116 = vector.broadcast %115 : vector<2x8x1xf32> to vector<2x8x8xf32>
    %117 = arith.mulf %112, %116 : vector<2x8x8xf32>
    "tpu.trace_start"() <{level = 10 : i32, message = "bqk,bkd->bqd"}> : () -> ()
    %cst_33 = arith.constant dense<0.000000e+00> : vector<2x8x8xf32>
    %118 = tpu.matmul %117, %104, %cst_33 {dimension_numbers = #tpu.dot_dimension_numbers<[2], [1], [1], [2], [0, 0, 0, 1, 1, 2], [0], [0]>} : vector<2x8x8xf32>, vector<2x8x8xf32>, vector<2x8x8xf32> -> vector<2x8x8xf32>
    "tpu.trace_stop"() : () -> ()
    %119 = vector.shape_cast %118 : vector<2x8x8xf32> to vector<16x8xf32>
    %120 = tpu.concatenate %56, %77, %98, %119 in 1 : vector<16x8xf32>, vector<16x8xf32>, vector<16x8xf32>, vector<16x8xf32> -> vector<16x32xf32>
    %121 = arith.truncf %120 : vector<16x32xf32> to vector<16x32xbf16>
    %c0_34 = arith.constant 0 : index
    %c0_35 = arith.constant 0 : index
    %c0_36 = arith.constant 0 : index
    %122 = vector.load %arg7[%c0_34, %c0_35, %c0_36] : memref<2x32x32xbf16, #tpu.memory_space<vmem>>, vector<1x32x32xbf16>
    %123 = vector.shape_cast %122 : vector<1x32x32xbf16> to vector<32x32xbf16>
    %cst_37 = arith.constant dense<0.000000e+00> : vector<16x32xf32>
    %124 = tpu.matmul %121, %123, %cst_37 {dimension_numbers = #tpu.dot_dimension_numbers<[1], [0], [0], [1], [0, 0, 1, 1], [], []>} : vector<16x32xbf16>, vector<32x32xbf16>, vector<16x32xf32> -> vector<16x32xf32>
    %c0_38 = arith.constant 0 : index
    %c0_39 = arith.constant 0 : index
    %c0_40 = arith.constant 0 : index
    %125 = vector.load %arg8[%c0_38, %c0_39, %c0_40] : memref<2x1x32xf32, #tpu.memory_space<vmem>>, vector<1x1x32xf32>
    %126 = vector.shape_cast %125 : vector<1x1x32xf32> to vector<1x32xf32>
    %127 = vector.broadcast %126 : vector<1x32xf32> to vector<16x32xf32>
    %128 = arith.addf %124, %127 : vector<16x32xf32>
    %129 = arith.addf %128, %24 : vector<16x32xf32>
    %c0_41 = arith.constant 0 : index
    %c0_42 = arith.constant 0 : index
    %c0_43 = arith.constant 0 : index
    %130 = vector.load %arg9[%c0_41, %c0_42, %c0_43] : memref<2x1x32xf32, #tpu.memory_space<vmem>>, vector<1x1x32xf32>
    %131 = vector.shape_cast %130 : vector<1x1x32xf32> to vector<1x32xf32>
    %c0_44 = arith.constant 0 : index
    %c0_45 = arith.constant 0 : index
    %c0_46 = arith.constant 0 : index
    %132 = vector.load %arg10[%c0_44, %c0_45, %c0_46] : memref<2x1x32xf32, #tpu.memory_space<vmem>>, vector<1x1x32xf32>
    %133 = vector.shape_cast %132 : vector<1x1x32xf32> to vector<1x32xf32>
    %cst_47 = arith.constant dense<0.000000e+00> : vector<16xf32>
    %134 = vector.multi_reduction <add>, %129, %cst_47 [1] : vector<16x32xf32> to vector<16xf32>
    %135 = vector.shape_cast %134 : vector<16xf32> to vector<16x1xf32>
    %cst_48 = arith.constant 3.200000e+01 : f32
    %136 = vector.broadcast %cst_48 : f32 to vector<16x1xf32>
    %137 = arith.divf %135, %136 : vector<16x1xf32>
    %138 = vector.broadcast %137 : vector<16x1xf32> to vector<16x32xf32>
    %139 = arith.subf %129, %138 : vector<16x32xf32>
    %140 = arith.mulf %139, %139 : vector<16x32xf32>
    %cst_49 = arith.constant dense<0.000000e+00> : vector<16xf32>
    %141 = vector.multi_reduction <add>, %140, %cst_49 [1] : vector<16x32xf32> to vector<16xf32>
    %142 = vector.shape_cast %141 : vector<16xf32> to vector<16x1xf32>
    %cst_50 = arith.constant 3.200000e+01 : f32
    %143 = vector.broadcast %cst_50 : f32 to vector<16x1xf32>
    %144 = arith.divf %142, %143 : vector<16x1xf32>
    %145 = vector.broadcast %137 : vector<16x1xf32> to vector<16x32xf32>
    %146 = arith.subf %129, %145 : vector<16x32xf32>
    %cst_51 = arith.constant 9.99999996E-13 : f32
    %147 = vector.broadcast %cst_51 : f32 to vector<16x1xf32>
    %148 = arith.addf %144, %147 : vector<16x1xf32>
    %149 = math.rsqrt %148 : vector<16x1xf32>
    %150 = vector.broadcast %149 : vector<16x1xf32> to vector<16x32xf32>
    %151 = arith.mulf %146, %150 : vector<16x32xf32>
    %152 = vector.broadcast %131 : vector<1x32xf32> to vector<16x32xf32>
    %153 = arith.mulf %151, %152 : vector<16x32xf32>
    %154 = vector.broadcast %133 : vector<1x32xf32> to vector<16x32xf32>
    %155 = arith.addf %153, %154 : vector<16x32xf32>
    %156 = arith.truncf %155 : vector<16x32xf32> to vector<16x32xbf16>
    %c0_52 = arith.constant 0 : index
    %c0_53 = arith.constant 0 : index
    %c0_54 = arith.constant 0 : index
    %157 = vector.load %arg11[%c0_52, %c0_53, %c0_54] : memref<2x32x128xbf16, #tpu.memory_space<vmem>>, vector<1x32x128xbf16>
    %158 = vector.shape_cast %157 : vector<1x32x128xbf16> to vector<32x128xbf16>
    %cst_55 = arith.constant dense<0.000000e+00> : vector<16x128xf32>
    %159 = tpu.matmul %156, %158, %cst_55 {dimension_numbers = #tpu.dot_dimension_numbers<[1], [0], [0], [1], [0, 0, 1, 1], [], []>} : vector<16x32xbf16>, vector<32x128xbf16>, vector<16x128xf32> -> vector<16x128xf32>
    %c0_56 = arith.constant 0 : index
    %c0_57 = arith.constant 0 : index
    %c0_58 = arith.constant 0 : index
    %160 = vector.load %arg12[%c0_56, %c0_57, %c0_58] : memref<2x1x128xf32, #tpu.memory_space<vmem>>, vector<1x1x128xf32>
    %161 = vector.shape_cast %160 : vector<1x1x128xf32> to vector<1x128xf32>
    %162 = vector.broadcast %161 : vector<1x128xf32> to vector<16x128xf32>
    %163 = arith.addf %159, %162 : vector<16x128xf32>
    %cst_59 = arith.constant 5.000000e-01 : f32
    %164 = vector.broadcast %cst_59 : f32 to vector<16x128xf32>
    %165 = arith.mulf %164, %163 : vector<16x128xf32>
    %cst_60 = arith.constant 4.471500e-02 : f32
    %166 = vector.broadcast %cst_60 : f32 to vector<16x128xf32>
    %167 = arith.mulf %166, %163 : vector<16x128xf32>
    %168 = arith.mulf %167, %163 : vector<16x128xf32>
    %169 = arith.mulf %168, %163 : vector<16x128xf32>
    %170 = arith.addf %163, %169 : vector<16x128xf32>
    %cst_61 = arith.constant 0.797884583 : f32
    %171 = vector.broadcast %cst_61 : f32 to vector<16x128xf32>
    %172 = arith.mulf %171, %170 : vector<16x128xf32>
    %173 = math.tanh %172 : vector<16x128xf32>
    %cst_62 = arith.constant 1.000000e+00 : f32
    %174 = vector.broadcast %cst_62 : f32 to vector<16x128xf32>
    %175 = arith.addf %174, %173 : vector<16x128xf32>
    %176 = arith.mulf %165, %175 : vector<16x128xf32>
    %177 = arith.truncf %176 : vector<16x128xf32> to vector<16x128xbf16>
    %c0_63 = arith.constant 0 : index
    %c0_64 = arith.constant 0 : index
    %c0_65 = arith.constant 0 : index
    %178 = vector.load %arg13[%c0_63, %c0_64, %c0_65] : memref<2x128x32xbf16, #tpu.memory_space<vmem>>, vector<1x128x32xbf16>
    %179 = vector.shape_cast %178 : vector<1x128x32xbf16> to vector<128x32xbf16>
    %cst_66 = arith.constant dense<0.000000e+00> : vector<16x32xf32>
    %180 = tpu.matmul %177, %179, %cst_66 {dimension_numbers = #tpu.dot_dimension_numbers<[1], [0], [0], [1], [0, 0, 1, 1], [], []>} : vector<16x128xbf16>, vector<128x32xbf16>, vector<16x32xf32> -> vector<16x32xf32>
    %c0_67 = arith.constant 0 : index
    %c0_68 = arith.constant 0 : index
    %c0_69 = arith.constant 0 : index
    %181 = vector.load %arg14[%c0_67, %c0_68, %c0_69] : memref<2x1x32xf32, #tpu.memory_space<vmem>>, vector<1x1x32xf32>
    %182 = vector.shape_cast %181 : vector<1x1x32xf32> to vector<1x32xf32>
    %183 = vector.broadcast %182 : vector<1x32xf32> to vector<16x32xf32>
    %184 = arith.addf %180, %183 : vector<16x32xf32>
    %185 = arith.addf %184, %155 : vector<16x32xf32>
    %c0_70 = arith.constant 0 : index
    %c0_71 = arith.constant 0 : index
    %c0_72 = arith.constant 0 : index
    %186 = vector.load %arg15[%c0_70, %c0_71, %c0_72] : memref<2x1x32xf32, #tpu.memory_space<vmem>>, vector<1x1x32xf32>
    %187 = vector.shape_cast %186 : vector<1x1x32xf32> to vector<1x32xf32>
    %c0_73 = arith.constant 0 : index
    %c0_74 = arith.constant 0 : index
    %c0_75 = arith.constant 0 : index
    %188 = vector.load %arg16[%c0_73, %c0_74, %c0_75] : memref<2x1x32xf32, #tpu.memory_space<vmem>>, vector<1x1x32xf32>
    %189 = vector.shape_cast %188 : vector<1x1x32xf32> to vector<1x32xf32>
    %cst_76 = arith.constant dense<0.000000e+00> : vector<16xf32>
    %190 = vector.multi_reduction <add>, %185, %cst_76 [1] : vector<16x32xf32> to vector<16xf32>
    %191 = vector.shape_cast %190 : vector<16xf32> to vector<16x1xf32>
    %cst_77 = arith.constant 3.200000e+01 : f32
    %192 = vector.broadcast %cst_77 : f32 to vector<16x1xf32>
    %193 = arith.divf %191, %192 : vector<16x1xf32>
    %194 = vector.broadcast %193 : vector<16x1xf32> to vector<16x32xf32>
    %195 = arith.subf %185, %194 : vector<16x32xf32>
    %196 = arith.mulf %195, %195 : vector<16x32xf32>
    %cst_78 = arith.constant dense<0.000000e+00> : vector<16xf32>
    %197 = vector.multi_reduction <add>, %196, %cst_78 [1] : vector<16x32xf32> to vector<16xf32>
    %198 = vector.shape_cast %197 : vector<16xf32> to vector<16x1xf32>
    %cst_79 = arith.constant 3.200000e+01 : f32
    %199 = vector.broadcast %cst_79 : f32 to vector<16x1xf32>
    %200 = arith.divf %198, %199 : vector<16x1xf32>
    %201 = vector.broadcast %193 : vector<16x1xf32> to vector<16x32xf32>
    %202 = arith.subf %185, %201 : vector<16x32xf32>
    %cst_80 = arith.constant 9.99999996E-13 : f32
    %203 = vector.broadcast %cst_80 : f32 to vector<16x1xf32>
    %204 = arith.addf %200, %203 : vector<16x1xf32>
    %205 = math.rsqrt %204 : vector<16x1xf32>
    %206 = vector.broadcast %205 : vector<16x1xf32> to vector<16x32xf32>
    %207 = arith.mulf %202, %206 : vector<16x32xf32>
    %208 = vector.broadcast %187 : vector<1x32xf32> to vector<16x32xf32>
    %209 = arith.mulf %207, %208 : vector<16x32xf32>
    %210 = vector.broadcast %189 : vector<1x32xf32> to vector<16x32xf32>
    %211 = arith.addf %209, %210 : vector<16x32xf32>
    %212 = arith.truncf %211 : vector<16x32xf32> to vector<16x32xbf16>
    %c1 = arith.constant 1 : index
    %c0_81 = arith.constant 0 : index
    %c0_82 = arith.constant 0 : index
    %213 = vector.load %arg5[%c1, %c0_81, %c0_82] : memref<2x32x96xbf16, #tpu.memory_space<vmem>>, vector<1x32x96xbf16>
    %214 = vector.shape_cast %213 : vector<1x32x96xbf16> to vector<32x96xbf16>
    %cst_83 = arith.constant dense<0.000000e+00> : vector<16x96xf32>
    %215 = tpu.matmul %212, %214, %cst_83 {dimension_numbers = #tpu.dot_dimension_numbers<[1], [0], [0], [1], [0, 0, 1, 1], [], []>} : vector<16x32xbf16>, vector<32x96xbf16>, vector<16x96xf32> -> vector<16x96xf32>
    %c1_84 = arith.constant 1 : index
    %c0_85 = arith.constant 0 : index
    %c0_86 = arith.constant 0 : index
    %216 = vector.load %arg6[%c1_84, %c0_85, %c0_86] : memref<2x1x96xf32, #tpu.memory_space<vmem>>, vector<1x1x96xf32>
    %217 = vector.shape_cast %216 : vector<1x1x96xf32> to vector<1x96xf32>
    %218 = vector.broadcast %217 : vector<1x96xf32> to vector<16x96xf32>
    %219 = arith.addf %215, %218 : vector<16x96xf32>
    %220 = vector.extract_strided_slice %219 {offsets = [0, 0], sizes = [16, 8], strides = [1, 1]} : vector<16x96xf32> to vector<16x8xf32>
    %221 = vector.shape_cast %220 : vector<16x8xf32> to vector<2x8x8xf32>
    %222 = vector.extract_strided_slice %219 {offsets = [0, 32], sizes = [16, 8], strides = [1, 1]} : vector<16x96xf32> to vector<16x8xf32>
    %223 = vector.shape_cast %222 : vector<16x8xf32> to vector<2x8x8xf32>
    %224 = vector.extract_strided_slice %219 {offsets = [0, 64], sizes = [16, 8], strides = [1, 1]} : vector<16x96xf32> to vector<16x8xf32>
    %225 = vector.shape_cast %224 : vector<16x8xf32> to vector<2x8x8xf32>
    "tpu.trace_start"() <{level = 10 : i32, message = "bqd,bkd->bqk"}> : () -> ()
    %cst_87 = arith.constant dense<0.000000e+00> : vector<2x8x8xf32>
    %226 = tpu.matmul %221, %223, %cst_87 {dimension_numbers = #tpu.dot_dimension_numbers<[2], [2], [1], [1], [0, 0, 0, 1, 1, 1], [0], [0]>} : vector<2x8x8xf32>, vector<2x8x8xf32>, vector<2x8x8xf32> -> vector<2x8x8xf32>
    "tpu.trace_stop"() : () -> ()
    %227 = vector.broadcast %27 : vector<2x1x8xf32> to vector<2x8x8xf32>
    %228 = arith.addf %226, %227 : vector<2x8x8xf32>
    %cst_88 = arith.constant dense<0xFF800000> : vector<2x8xf32>
    %229 = vector.multi_reduction <maximumf>, %228, %cst_88 [2] : vector<2x8x8xf32> to vector<2x8xf32>
    %230 = vector.shape_cast %229 : vector<2x8xf32> to vector<2x8x1xf32>
    %231 = vector.broadcast %230 : vector<2x8x1xf32> to vector<2x8x8xf32>
    %232 = arith.subf %228, %231 : vector<2x8x8xf32>
    %233 = math.exp %232 : vector<2x8x8xf32>
    %cst_89 = arith.constant dense<0.000000e+00> : vector<2x8xf32>
    %234 = vector.multi_reduction <add>, %233, %cst_89 [2] : vector<2x8x8xf32> to vector<2x8xf32>
    %235 = vector.shape_cast %234 : vector<2x8xf32> to vector<2x8x1xf32>
    %236 = tpu.reciprocal %235 {approx = true} : vector<2x8x1xf32> -> vector<2x8x1xf32>
    %237 = vector.broadcast %236 : vector<2x8x1xf32> to vector<2x8x8xf32>
    %238 = arith.mulf %233, %237 : vector<2x8x8xf32>
    "tpu.trace_start"() <{level = 10 : i32, message = "bqk,bkd->bqd"}> : () -> ()
    %cst_90 = arith.constant dense<0.000000e+00> : vector<2x8x8xf32>
    %239 = tpu.matmul %238, %225, %cst_90 {dimension_numbers = #tpu.dot_dimension_numbers<[2], [1], [1], [2], [0, 0, 0, 1, 1, 2], [0], [0]>} : vector<2x8x8xf32>, vector<2x8x8xf32>, vector<2x8x8xf32> -> vector<2x8x8xf32>
    "tpu.trace_stop"() : () -> ()
    %240 = vector.shape_cast %239 : vector<2x8x8xf32> to vector<16x8xf32>
    %241 = vector.extract_strided_slice %219 {offsets = [0, 8], sizes = [16, 8], strides = [1, 1]} : vector<16x96xf32> to vector<16x8xf32>
    %242 = vector.shape_cast %241 : vector<16x8xf32> to vector<2x8x8xf32>
    %243 = vector.extract_strided_slice %219 {offsets = [0, 40], sizes = [16, 8], strides = [1, 1]} : vector<16x96xf32> to vector<16x8xf32>
    %244 = vector.shape_cast %243 : vector<16x8xf32> to vector<2x8x8xf32>
    %245 = vector.extract_strided_slice %219 {offsets = [0, 72], sizes = [16, 8], strides = [1, 1]} : vector<16x96xf32> to vector<16x8xf32>
    %246 = vector.shape_cast %245 : vector<16x8xf32> to vector<2x8x8xf32>
    "tpu.trace_start"() <{level = 10 : i32, message = "bqd,bkd->bqk"}> : () -> ()
    %cst_91 = arith.constant dense<0.000000e+00> : vector<2x8x8xf32>
    %247 = tpu.matmul %242, %244, %cst_91 {dimension_numbers = #tpu.dot_dimension_numbers<[2], [2], [1], [1], [0, 0, 0, 1, 1, 1], [0], [0]>} : vector<2x8x8xf32>, vector<2x8x8xf32>, vector<2x8x8xf32> -> vector<2x8x8xf32>
    "tpu.trace_stop"() : () -> ()
    %248 = vector.broadcast %27 : vector<2x1x8xf32> to vector<2x8x8xf32>
    %249 = arith.addf %247, %248 : vector<2x8x8xf32>
    %cst_92 = arith.constant dense<0xFF800000> : vector<2x8xf32>
    %250 = vector.multi_reduction <maximumf>, %249, %cst_92 [2] : vector<2x8x8xf32> to vector<2x8xf32>
    %251 = vector.shape_cast %250 : vector<2x8xf32> to vector<2x8x1xf32>
    %252 = vector.broadcast %251 : vector<2x8x1xf32> to vector<2x8x8xf32>
    %253 = arith.subf %249, %252 : vector<2x8x8xf32>
    %254 = math.exp %253 : vector<2x8x8xf32>
    %cst_93 = arith.constant dense<0.000000e+00> : vector<2x8xf32>
    %255 = vector.multi_reduction <add>, %254, %cst_93 [2] : vector<2x8x8xf32> to vector<2x8xf32>
    %256 = vector.shape_cast %255 : vector<2x8xf32> to vector<2x8x1xf32>
    %257 = tpu.reciprocal %256 {approx = true} : vector<2x8x1xf32> -> vector<2x8x1xf32>
    %258 = vector.broadcast %257 : vector<2x8x1xf32> to vector<2x8x8xf32>
    %259 = arith.mulf %254, %258 : vector<2x8x8xf32>
    "tpu.trace_start"() <{level = 10 : i32, message = "bqk,bkd->bqd"}> : () -> ()
    %cst_94 = arith.constant dense<0.000000e+00> : vector<2x8x8xf32>
    %260 = tpu.matmul %259, %246, %cst_94 {dimension_numbers = #tpu.dot_dimension_numbers<[2], [1], [1], [2], [0, 0, 0, 1, 1, 2], [0], [0]>} : vector<2x8x8xf32>, vector<2x8x8xf32>, vector<2x8x8xf32> -> vector<2x8x8xf32>
    "tpu.trace_stop"() : () -> ()
    %261 = vector.shape_cast %260 : vector<2x8x8xf32> to vector<16x8xf32>
    %262 = vector.extract_strided_slice %219 {offsets = [0, 16], sizes = [16, 8], strides = [1, 1]} : vector<16x96xf32> to vector<16x8xf32>
    %263 = vector.shape_cast %262 : vector<16x8xf32> to vector<2x8x8xf32>
    %264 = vector.extract_strided_slice %219 {offsets = [0, 48], sizes = [16, 8], strides = [1, 1]} : vector<16x96xf32> to vector<16x8xf32>
    %265 = vector.shape_cast %264 : vector<16x8xf32> to vector<2x8x8xf32>
    %266 = vector.extract_strided_slice %219 {offsets = [0, 80], sizes = [16, 8], strides = [1, 1]} : vector<16x96xf32> to vector<16x8xf32>
    %267 = vector.shape_cast %266 : vector<16x8xf32> to vector<2x8x8xf32>
    "tpu.trace_start"() <{level = 10 : i32, message = "bqd,bkd->bqk"}> : () -> ()
    %cst_95 = arith.constant dense<0.000000e+00> : vector<2x8x8xf32>
    %268 = tpu.matmul %263, %265, %cst_95 {dimension_numbers = #tpu.dot_dimension_numbers<[2], [2], [1], [1], [0, 0, 0, 1, 1, 1], [0], [0]>} : vector<2x8x8xf32>, vector<2x8x8xf32>, vector<2x8x8xf32> -> vector<2x8x8xf32>
    "tpu.trace_stop"() : () -> ()
    %269 = vector.broadcast %27 : vector<2x1x8xf32> to vector<2x8x8xf32>
    %270 = arith.addf %268, %269 : vector<2x8x8xf32>
    %cst_96 = arith.constant dense<0xFF800000> : vector<2x8xf32>
    %271 = vector.multi_reduction <maximumf>, %270, %cst_96 [2] : vector<2x8x8xf32> to vector<2x8xf32>
    %272 = vector.shape_cast %271 : vector<2x8xf32> to vector<2x8x1xf32>
    %273 = vector.broadcast %272 : vector<2x8x1xf32> to vector<2x8x8xf32>
    %274 = arith.subf %270, %273 : vector<2x8x8xf32>
    %275 = math.exp %274 : vector<2x8x8xf32>
    %cst_97 = arith.constant dense<0.000000e+00> : vector<2x8xf32>
    %276 = vector.multi_reduction <add>, %275, %cst_97 [2] : vector<2x8x8xf32> to vector<2x8xf32>
    %277 = vector.shape_cast %276 : vector<2x8xf32> to vector<2x8x1xf32>
    %278 = tpu.reciprocal %277 {approx = true} : vector<2x8x1xf32> -> vector<2x8x1xf32>
    %279 = vector.broadcast %278 : vector<2x8x1xf32> to vector<2x8x8xf32>
    %280 = arith.mulf %275, %279 : vector<2x8x8xf32>
    "tpu.trace_start"() <{level = 10 : i32, message = "bqk,bkd->bqd"}> : () -> ()
    %cst_98 = arith.constant dense<0.000000e+00> : vector<2x8x8xf32>
    %281 = tpu.matmul %280, %267, %cst_98 {dimension_numbers = #tpu.dot_dimension_numbers<[2], [1], [1], [2], [0, 0, 0, 1, 1, 2], [0], [0]>} : vector<2x8x8xf32>, vector<2x8x8xf32>, vector<2x8x8xf32> -> vector<2x8x8xf32>
    "tpu.trace_stop"() : () -> ()
    %282 = vector.shape_cast %281 : vector<2x8x8xf32> to vector<16x8xf32>
    %283 = vector.extract_strided_slice %219 {offsets = [0, 24], sizes = [16, 8], strides = [1, 1]} : vector<16x96xf32> to vector<16x8xf32>
    %284 = vector.shape_cast %283 : vector<16x8xf32> to vector<2x8x8xf32>
    %285 = vector.extract_strided_slice %219 {offsets = [0, 56], sizes = [16, 8], strides = [1, 1]} : vector<16x96xf32> to vector<16x8xf32>
    %286 = vector.shape_cast %285 : vector<16x8xf32> to vector<2x8x8xf32>
    %287 = vector.extract_strided_slice %219 {offsets = [0, 88], sizes = [16, 8], strides = [1, 1]} : vector<16x96xf32> to vector<16x8xf32>
    %288 = vector.shape_cast %287 : vector<16x8xf32> to vector<2x8x8xf32>
    "tpu.trace_start"() <{level = 10 : i32, message = "bqd,bkd->bqk"}> : () -> ()
    %cst_99 = arith.constant dense<0.000000e+00> : vector<2x8x8xf32>
    %289 = tpu.matmul %284, %286, %cst_99 {dimension_numbers = #tpu.dot_dimension_numbers<[2], [2], [1], [1], [0, 0, 0, 1, 1, 1], [0], [0]>} : vector<2x8x8xf32>, vector<2x8x8xf32>, vector<2x8x8xf32> -> vector<2x8x8xf32>
    "tpu.trace_stop"() : () -> ()
    %290 = vector.broadcast %27 : vector<2x1x8xf32> to vector<2x8x8xf32>
    %291 = arith.addf %289, %290 : vector<2x8x8xf32>
    %cst_100 = arith.constant dense<0xFF800000> : vector<2x8xf32>
    %292 = vector.multi_reduction <maximumf>, %291, %cst_100 [2] : vector<2x8x8xf32> to vector<2x8xf32>
    %293 = vector.shape_cast %292 : vector<2x8xf32> to vector<2x8x1xf32>
    %294 = vector.broadcast %293 : vector<2x8x1xf32> to vector<2x8x8xf32>
    %295 = arith.subf %291, %294 : vector<2x8x8xf32>
    %296 = math.exp %295 : vector<2x8x8xf32>
    %cst_101 = arith.constant dense<0.000000e+00> : vector<2x8xf32>
    %297 = vector.multi_reduction <add>, %296, %cst_101 [2] : vector<2x8x8xf32> to vector<2x8xf32>
    %298 = vector.shape_cast %297 : vector<2x8xf32> to vector<2x8x1xf32>
    %299 = tpu.reciprocal %298 {approx = true} : vector<2x8x1xf32> -> vector<2x8x1xf32>
    %300 = vector.broadcast %299 : vector<2x8x1xf32> to vector<2x8x8xf32>
    %301 = arith.mulf %296, %300 : vector<2x8x8xf32>
    "tpu.trace_start"() <{level = 10 : i32, message = "bqk,bkd->bqd"}> : () -> ()
    %cst_102 = arith.constant dense<0.000000e+00> : vector<2x8x8xf32>
    %302 = tpu.matmul %301, %288, %cst_102 {dimension_numbers = #tpu.dot_dimension_numbers<[2], [1], [1], [2], [0, 0, 0, 1, 1, 2], [0], [0]>} : vector<2x8x8xf32>, vector<2x8x8xf32>, vector<2x8x8xf32> -> vector<2x8x8xf32>
    "tpu.trace_stop"() : () -> ()
    %303 = vector.shape_cast %302 : vector<2x8x8xf32> to vector<16x8xf32>
    %304 = tpu.concatenate %240, %261, %282, %303 in 1 : vector<16x8xf32>, vector<16x8xf32>, vector<16x8xf32>, vector<16x8xf32> -> vector<16x32xf32>
    %305 = arith.truncf %304 : vector<16x32xf32> to vector<16x32xbf16>
    %c1_103 = arith.constant 1 : index
    %c0_104 = arith.constant 0 : index
    %c0_105 = arith.constant 0 : index
    %306 = vector.load %arg7[%c1_103, %c0_104, %c0_105] : memref<2x32x32xbf16, #tpu.memory_space<vmem>>, vector<1x32x32xbf16>
    %307 = vector.shape_cast %306 : vector<1x32x32xbf16> to vector<32x32xbf16>
    %cst_106 = arith.constant dense<0.000000e+00> : vector<16x32xf32>
    %308 = tpu.matmul %305, %307, %cst_106 {dimension_numbers = #tpu.dot_dimension_numbers<[1], [0], [0], [1], [0, 0, 1, 1], [], []>} : vector<16x32xbf16>, vector<32x32xbf16>, vector<16x32xf32> -> vector<16x32xf32>
    %c1_107 = arith.constant 1 : index
    %c0_108 = arith.constant 0 : index
    %c0_109 = arith.constant 0 : index
    %309 = vector.load %arg8[%c1_107, %c0_108, %c0_109] : memref<2x1x32xf32, #tpu.memory_space<vmem>>, vector<1x1x32xf32>
    %310 = vector.shape_cast %309 : vector<1x1x32xf32> to vector<1x32xf32>
    %311 = vector.broadcast %310 : vector<1x32xf32> to vector<16x32xf32>
    %312 = arith.addf %308, %311 : vector<16x32xf32>
    %313 = arith.addf %312, %211 : vector<16x32xf32>
    %c1_110 = arith.constant 1 : index
    %c0_111 = arith.constant 0 : index
    %c0_112 = arith.constant 0 : index
    %314 = vector.load %arg9[%c1_110, %c0_111, %c0_112] : memref<2x1x32xf32, #tpu.memory_space<vmem>>, vector<1x1x32xf32>
    %315 = vector.shape_cast %314 : vector<1x1x32xf32> to vector<1x32xf32>
    %c1_113 = arith.constant 1 : index
    %c0_114 = arith.constant 0 : index
    %c0_115 = arith.constant 0 : index
    %316 = vector.load %arg10[%c1_113, %c0_114, %c0_115] : memref<2x1x32xf32, #tpu.memory_space<vmem>>, vector<1x1x32xf32>
    %317 = vector.shape_cast %316 : vector<1x1x32xf32> to vector<1x32xf32>
    %cst_116 = arith.constant dense<0.000000e+00> : vector<16xf32>
    %318 = vector.multi_reduction <add>, %313, %cst_116 [1] : vector<16x32xf32> to vector<16xf32>
    %319 = vector.shape_cast %318 : vector<16xf32> to vector<16x1xf32>
    %cst_117 = arith.constant 3.200000e+01 : f32
    %320 = vector.broadcast %cst_117 : f32 to vector<16x1xf32>
    %321 = arith.divf %319, %320 : vector<16x1xf32>
    %322 = vector.broadcast %321 : vector<16x1xf32> to vector<16x32xf32>
    %323 = arith.subf %313, %322 : vector<16x32xf32>
    %324 = arith.mulf %323, %323 : vector<16x32xf32>
    %cst_118 = arith.constant dense<0.000000e+00> : vector<16xf32>
    %325 = vector.multi_reduction <add>, %324, %cst_118 [1] : vector<16x32xf32> to vector<16xf32>
    %326 = vector.shape_cast %325 : vector<16xf32> to vector<16x1xf32>
    %cst_119 = arith.constant 3.200000e+01 : f32
    %327 = vector.broadcast %cst_119 : f32 to vector<16x1xf32>
    %328 = arith.divf %326, %327 : vector<16x1xf32>
    %329 = vector.broadcast %321 : vector<16x1xf32> to vector<16x32xf32>
    %330 = arith.subf %313, %329 : vector<16x32xf32>
    %cst_120 = arith.constant 9.99999996E-13 : f32
    %331 = vector.broadcast %cst_120 : f32 to vector<16x1xf32>
    %332 = arith.addf %328, %331 : vector<16x1xf32>
    %333 = math.rsqrt %332 : vector<16x1xf32>
    %334 = vector.broadcast %333 : vector<16x1xf32> to vector<16x32xf32>
    %335 = arith.mulf %330, %334 : vector<16x32xf32>
    %336 = vector.broadcast %315 : vector<1x32xf32> to vector<16x32xf32>
    %337 = arith.mulf %335, %336 : vector<16x32xf32>
    %338 = vector.broadcast %317 : vector<1x32xf32> to vector<16x32xf32>
    %339 = arith.addf %337, %338 : vector<16x32xf32>
    %340 = arith.truncf %339 : vector<16x32xf32> to vector<16x32xbf16>
    %c1_121 = arith.constant 1 : index
    %c0_122 = arith.constant 0 : index
    %c0_123 = arith.constant 0 : index
    %341 = vector.load %arg11[%c1_121, %c0_122, %c0_123] : memref<2x32x128xbf16, #tpu.memory_space<vmem>>, vector<1x32x128xbf16>
    %342 = vector.shape_cast %341 : vector<1x32x128xbf16> to vector<32x128xbf16>
    %cst_124 = arith.constant dense<0.000000e+00> : vector<16x128xf32>
    %343 = tpu.matmul %340, %342, %cst_124 {dimension_numbers = #tpu.dot_dimension_numbers<[1], [0], [0], [1], [0, 0, 1, 1], [], []>} : vector<16x32xbf16>, vector<32x128xbf16>, vector<16x128xf32> -> vector<16x128xf32>
    %c1_125 = arith.constant 1 : index
    %c0_126 = arith.constant 0 : index
    %c0_127 = arith.constant 0 : index
    %344 = vector.load %arg12[%c1_125, %c0_126, %c0_127] : memref<2x1x128xf32, #tpu.memory_space<vmem>>, vector<1x1x128xf32>
    %345 = vector.shape_cast %344 : vector<1x1x128xf32> to vector<1x128xf32>
    %346 = vector.broadcast %345 : vector<1x128xf32> to vector<16x128xf32>
    %347 = arith.addf %343, %346 : vector<16x128xf32>
    %cst_128 = arith.constant 5.000000e-01 : f32
    %348 = vector.broadcast %cst_128 : f32 to vector<16x128xf32>
    %349 = arith.mulf %348, %347 : vector<16x128xf32>
    %cst_129 = arith.constant 4.471500e-02 : f32
    %350 = vector.broadcast %cst_129 : f32 to vector<16x128xf32>
    %351 = arith.mulf %350, %347 : vector<16x128xf32>
    %352 = arith.mulf %351, %347 : vector<16x128xf32>
    %353 = arith.mulf %352, %347 : vector<16x128xf32>
    %354 = arith.addf %347, %353 : vector<16x128xf32>
    %cst_130 = arith.constant 0.797884583 : f32
    %355 = vector.broadcast %cst_130 : f32 to vector<16x128xf32>
    %356 = arith.mulf %355, %354 : vector<16x128xf32>
    %357 = math.tanh %356 : vector<16x128xf32>
    %cst_131 = arith.constant 1.000000e+00 : f32
    %358 = vector.broadcast %cst_131 : f32 to vector<16x128xf32>
    %359 = arith.addf %358, %357 : vector<16x128xf32>
    %360 = arith.mulf %349, %359 : vector<16x128xf32>
    %361 = arith.truncf %360 : vector<16x128xf32> to vector<16x128xbf16>
    %c1_132 = arith.constant 1 : index
    %c0_133 = arith.constant 0 : index
    %c0_134 = arith.constant 0 : index
    %362 = vector.load %arg13[%c1_132, %c0_133, %c0_134] : memref<2x128x32xbf16, #tpu.memory_space<vmem>>, vector<1x128x32xbf16>
    %363 = vector.shape_cast %362 : vector<1x128x32xbf16> to vector<128x32xbf16>
    %cst_135 = arith.constant dense<0.000000e+00> : vector<16x32xf32>
    %364 = tpu.matmul %361, %363, %cst_135 {dimension_numbers = #tpu.dot_dimension_numbers<[1], [0], [0], [1], [0, 0, 1, 1], [], []>} : vector<16x128xbf16>, vector<128x32xbf16>, vector<16x32xf32> -> vector<16x32xf32>
    %c1_136 = arith.constant 1 : index
    %c0_137 = arith.constant 0 : index
    %c0_138 = arith.constant 0 : index
    %365 = vector.load %arg14[%c1_136, %c0_137, %c0_138] : memref<2x1x32xf32, #tpu.memory_space<vmem>>, vector<1x1x32xf32>
    %366 = vector.shape_cast %365 : vector<1x1x32xf32> to vector<1x32xf32>
    %367 = vector.broadcast %366 : vector<1x32xf32> to vector<16x32xf32>
    %368 = arith.addf %364, %367 : vector<16x32xf32>
    %369 = arith.addf %368, %339 : vector<16x32xf32>
    %c1_139 = arith.constant 1 : index
    %c0_140 = arith.constant 0 : index
    %c0_141 = arith.constant 0 : index
    %370 = vector.load %arg15[%c1_139, %c0_140, %c0_141] : memref<2x1x32xf32, #tpu.memory_space<vmem>>, vector<1x1x32xf32>
    %371 = vector.shape_cast %370 : vector<1x1x32xf32> to vector<1x32xf32>
    %c1_142 = arith.constant 1 : index
    %c0_143 = arith.constant 0 : index
    %c0_144 = arith.constant 0 : index
    %372 = vector.load %arg16[%c1_142, %c0_143, %c0_144] : memref<2x1x32xf32, #tpu.memory_space<vmem>>, vector<1x1x32xf32>
    %373 = vector.shape_cast %372 : vector<1x1x32xf32> to vector<1x32xf32>
    %cst_145 = arith.constant dense<0.000000e+00> : vector<16xf32>
    %374 = vector.multi_reduction <add>, %369, %cst_145 [1] : vector<16x32xf32> to vector<16xf32>
    %375 = vector.shape_cast %374 : vector<16xf32> to vector<16x1xf32>
    %cst_146 = arith.constant 3.200000e+01 : f32
    %376 = vector.broadcast %cst_146 : f32 to vector<16x1xf32>
    %377 = arith.divf %375, %376 : vector<16x1xf32>
    %378 = vector.broadcast %377 : vector<16x1xf32> to vector<16x32xf32>
    %379 = arith.subf %369, %378 : vector<16x32xf32>
    %380 = arith.mulf %379, %379 : vector<16x32xf32>
    %cst_147 = arith.constant dense<0.000000e+00> : vector<16xf32>
    %381 = vector.multi_reduction <add>, %380, %cst_147 [1] : vector<16x32xf32> to vector<16xf32>
    %382 = vector.shape_cast %381 : vector<16xf32> to vector<16x1xf32>
    %cst_148 = arith.constant 3.200000e+01 : f32
    %383 = vector.broadcast %cst_148 : f32 to vector<16x1xf32>
    %384 = arith.divf %382, %383 : vector<16x1xf32>
    %385 = vector.broadcast %377 : vector<16x1xf32> to vector<16x32xf32>
    %386 = arith.subf %369, %385 : vector<16x32xf32>
    %cst_149 = arith.constant 9.99999996E-13 : f32
    %387 = vector.broadcast %cst_149 : f32 to vector<16x1xf32>
    %388 = arith.addf %384, %387 : vector<16x1xf32>
    %389 = math.rsqrt %388 : vector<16x1xf32>
    %390 = vector.broadcast %389 : vector<16x1xf32> to vector<16x32xf32>
    %391 = arith.mulf %386, %390 : vector<16x32xf32>
    %392 = vector.broadcast %371 : vector<1x32xf32> to vector<16x32xf32>
    %393 = arith.mulf %391, %392 : vector<16x32xf32>
    %394 = vector.broadcast %373 : vector<1x32xf32> to vector<16x32xf32>
    %395 = arith.addf %393, %394 : vector<16x32xf32>
    %396 = arith.truncf %395 : vector<16x32xf32> to vector<16x32xbf16>
    %c0_150 = arith.constant 0 : index
    %c0_151 = arith.constant 0 : index
    %397 = vector.load %arg17[%c0_150, %c0_151] : memref<32x32xbf16, #tpu.memory_space<vmem>>, vector<32x32xbf16>
    %cst_152 = arith.constant dense<0.000000e+00> : vector<16x32xf32>
    %398 = tpu.matmul %396, %397, %cst_152 {dimension_numbers = #tpu.dot_dimension_numbers<[1], [0], [0], [1], [0, 0, 1, 1], [], []>} : vector<16x32xbf16>, vector<32x32xbf16>, vector<16x32xf32> -> vector<16x32xf32>
    %c0_153 = arith.constant 0 : index
    %c0_154 = arith.constant 0 : index
    %399 = vector.load %arg18[%c0_153, %c0_154] : memref<1x32xf32, #tpu.memory_space<vmem>>, vector<1x32xf32>
    %400 = vector.broadcast %399 : vector<1x32xf32> to vector<16x32xf32>
    %401 = arith.addf %398, %400 : vector<16x32xf32>
    %402 = math.tanh %401 : vector<16x32xf32>
    %403 = arith.truncf %402 : vector<16x32xf32> to vector<16x32xbf16>
    %c0_155 = arith.constant 0 : index
    %c0_156 = arith.constant 0 : index
    %404 = vector.load %arg19[%c0_155, %c0_156] : memref<32x128xbf16, #tpu.memory_space<vmem>>, vector<32x128xbf16>
    %cst_157 = arith.constant dense<0.000000e+00> : vector<16x128xf32>
    %405 = tpu.matmul %403, %404, %cst_157 {dimension_numbers = #tpu.dot_dimension_numbers<[1], [0], [0], [1], [0, 0, 1, 1], [], []>} : vector<16x32xbf16>, vector<32x128xbf16>, vector<16x128xf32> -> vector<16x128xf32>
    %c0_158 = arith.constant 0 : index
    %c0_159 = arith.constant 0 : index
    %406 = vector.load %arg20[%c0_158, %c0_159] : memref<1x128xf32, #tpu.memory_space<vmem>>, vector<1x128xf32>
    %407 = vector.broadcast %406 : vector<1x128xf32> to vector<16x128xf32>
    %408 = arith.addf %405, %407 : vector<16x128xf32>
    %c0_160 = arith.constant 0 : index
    %c0_161 = arith.constant 0 : index
    %409 = vector.load %arg22[%c0_160, %c0_161] : memref<16x128xf32, #tpu.memory_space<vmem>>, vector<16x128xf32>
    tpu.vector_store %arg22[%c0_160, %c0_161], %408 {strides = array<i32>} : memref<16x128xf32, #tpu.memory_space<vmem>>, vector<16x128xf32>,
    %410 = vector.extract_strided_slice %408 {offsets = [0, 0], sizes = [16, 2], strides = [1, 1]} : vector<16x128xf32> to vector<16x2xf32>
    %cst_162 = arith.constant dense<0xFF800000> : vector<16xf32>
    %411 = vector.multi_reduction <maximumf>, %410, %cst_162 [1] : vector<16x2xf32> to vector<16xf32>
    %412 = vector.shape_cast %411 : vector<16xf32> to vector<16x1xf32>
    %413 = vector.broadcast %412 : vector<16x1xf32> to vector<16x2xf32>
    %414 = arith.subf %410, %413 : vector<16x2xf32>
    %415 = math.exp %414 : vector<16x2xf32>
    %cst_163 = arith.constant dense<0.000000e+00> : vector<16xf32>
    %416 = vector.multi_reduction <add>, %415, %cst_163 [1] : vector<16x2xf32> to vector<16xf32>
    %417 = vector.shape_cast %416 : vector<16xf32> to vector<16x1xf32>
    %418 = math.log %417 : vector<16x1xf32>
    %419 = arith.addf %418, %412 : vector<16x1xf32>
    %420 = vector.broadcast %419 : vector<16x1xf32> to vector<16x128xf32>
    %421 = arith.subf %420, %408 : vector<16x128xf32>
    %c0_164 = arith.constant 0 : index
    %c0_165 = arith.constant 0 : index
    %422 = vector.load %arg21[%c0_164, %c0_165] : memref<16x128xf32, #tpu.memory_space<vmem>>, vector<16x128xf32>
    %423 = arith.mulf %422, %421 : vector<16x128xf32>
    %424 = vector.shape_cast %423 : vector<16x128xf32> to vector<1x16x128xf32>
    %cst_166 = arith.constant dense<0.000000e+00> : vector<1xf32>
    %425 = vector.multi_reduction <add>, %424, %cst_166 [1, 2] : vector<1x16x128xf32> to vector<1xf32>
    %426 = vector.shape_cast %425 : vector<1xf32> to vector<1x1x1xf32>
    %427 = vector.extract %426[0, 0, 0] : f32 from vector<1x1x1xf32>
    %428 = vector.broadcast %427 : f32 to vector<1x1xf32>
    %429 = vector.shape_cast %422 : vector<16x128xf32> to vector<1x16x128xf32>
    %cst_167 = arith.constant dense<0.000000e+00> : vector<1xf32>
    %430 = vector.multi_reduction <add>, %429, %cst_167 [1, 2] : vector<1x16x128xf32> to vector<1xf32>
    %431 = vector.shape_cast %430 : vector<1xf32> to vector<1x1x1xf32>
    %432 = vector.extract %431[0, 0, 0] : f32 from vector<1x1x1xf32>
    %433 = vector.broadcast %432 : f32 to vector<1x1xf32>
    %434 = arith.divf %428, %433 : vector<1x1xf32>
    %435 = vector.shape_cast %434 : vector<1x1xf32> to vector<1x1xf32>
    %436 = vector.broadcast %435 : vector<1x1xf32> to vector<1x128xf32>
    %c0_168 = arith.constant 0 : index
    %c0_169 = arith.constant 0 : index
    %437 = vector.load %arg23[%c0_168, %c0_169] : memref<1x128xf32, #tpu.memory_space<vmem>>, vector<1x128xf32>
    tpu.vector_store %arg23[%c0_168, %c0_169], %436 {strides = array<i32>} : memref<1x128xf32, #tpu.memory_space<vmem>>, vector<1x128xf32>,
    return
  }
  func.func @transform_0(%arg0: i32) -> (i32, i32) {
    %c0_i32 = arith.constant 0 : i32
    %c0_i32_0 = arith.constant 0 : i32
    %c0_i32_1 = arith.constant 0 : i32
    return %c0_i32, %c0_i32_0 : i32, i32
  }
  func.func @transform_1(%arg0: i32) -> (i32, i32) {
    %c0_i32 = arith.constant 0 : i32
    %c0_i32_0 = arith.constant 0 : i32
    %c0_i32_1 = arith.constant 0 : i32
    return %c0_i32, %c0_i32_0 : i32, i32
  }
  func.func @transform_2(%arg0: i32) -> (i32, i32) {
    %c0_i32 = arith.constant 0 : i32
    %c0_i32_0 = arith.constant 0 : i32
    %c0_i32_1 = arith.constant 0 : i32
    return %c0_i32, %c0_i32_0 : i32, i32
  }
  func.func @transform_3(%arg0: i32) -> (i32, i32) {
    %c0_i32 = arith.constant 0 : i32
    %c0_i32_0 = arith.constant 0 : i32
    %c0_i32_1 = arith.constant 0 : i32
    return %c0_i32, %c0_i32_0 : i32, i32
  }
  func.func @transform_4(%arg0: i32) -> (i32, i32, i32) {
    %c0_i32 = arith.constant 0 : i32
    %c0_i32_0 = arith.constant 0 : i32
    %c0_i32_1 = arith.constant 0 : i32
    %c0_i32_2 = arith.constant 0 : i32
    return %c0_i32, %c0_i32_0, %c0_i32_1 : i32, i32, i32
  }
  func.func @transform_5(%arg0: i32) -> (i32, i32, i32) {
    %c0_i32 = arith.constant 0 : i32
    %c0_i32_0 = arith.constant 0 : i32
    %c0_i32_1 = arith.constant 0 : i32
    %c0_i32_2 = arith.constant 0 : i32
    return %c0_i32, %c0_i32_0, %c0_i32_1 : i32, i32, i32
  }
  func.func @transform_6(%arg0: i32) -> (i32, i32, i32) {
    %c0_i32 = arith.constant 0 : i32
    %c0_i32_0 = arith.constant 0 : i32
    %c0_i32_1 = arith.constant 0 : i32
    %c0_i32_2 = arith.constant 0 : i32
    return %c0_i32, %c0_i32_0, %c0_i32_1 : i32, i32, i32
  }
  func.func @transform_7(%arg0: i32) -> (i32, i32, i32) {
    %c0_i32 = arith.constant 0 : i32
    %c0_i32_0 = arith.constant 0 : i32
    %c0_i32_1 = arith.constant 0 : i32
    %c0_i32_2 = arith.constant 0 : i32
    return %c0_i32, %c0_i32_0, %c0_i32_1 : i32, i32, i32
  }
  func.func @transform_8(%arg0: i32) -> (i32, i32, i32) {
    %c0_i32 = arith.constant 0 : i32
    %c0_i32_0 = arith.constant 0 : i32
    %c0_i32_1 = arith.constant 0 : i32
    %c0_i32_2 = arith.constant 0 : i32
    return %c0_i32, %c0_i32_0, %c0_i32_1 : i32, i32, i32
  }
  func.func @transform_9(%arg0: i32) -> (i32, i32, i32) {
    %c0_i32 = arith.constant 0 : i32
    %c0_i32_0 = arith.constant 0 : i32
    %c0_i32_1 = arith.constant 0 : i32
    %c0_i32_2 = arith.constant 0 : i32
    return %c0_i32, %c0_i32_0, %c0_i32_1 : i32, i32, i32
  }
  func.func @transform_10(%arg0: i32) -> (i32, i32, i32) {
    %c0_i32 = arith.constant 0 : i32
    %c0_i32_0 = arith.constant 0 : i32
    %c0_i32_1 = arith.constant 0 : i32
    %c0_i32_2 = arith.constant 0 : i32
    return %c0_i32, %c0_i32_0, %c0_i32_1 : i32, i32, i32
  }
  func.func @transform_11(%arg0: i32) -> (i32, i32, i32) {
    %c0_i32 = arith.constant 0 : i32
    %c0_i32_0 = arith.constant 0 : i32
    %c0_i32_1 = arith.constant 0 : i32
    %c0_i32_2 = arith.constant 0 : i32
    return %c0_i32, %c0_i32_0, %c0_i32_1 : i32, i32, i32
  }
  func.func @transform_12(%arg0: i32) -> (i32, i32, i32) {
    %c0_i32 = arith.constant 0 : i32
    %c0_i32_0 = arith.constant 0 : i32
    %c0_i32_1 = arith.constant 0 : i32
    %c0_i32_2 = arith.constant 0 : i32
    return %c0_i32, %c0_i32_0, %c0_i32_1 : i32, i32, i32
  }
  func.func @transform_13(%arg0: i32) -> (i32, i32, i32) {
    %c0_i32 = arith.constant 0 : i32
    %c0_i32_0 = arith.constant 0 : i32
    %c0_i32_1 = arith.constant 0 : i32
    %c0_i32_2 = arith.constant 0 : i32
    return %c0_i32, %c0_i32_0, %c0_i32_1 : i32, i32, i32
  }
  func.func @transform_14(%arg0: i32) -> (i32, i32, i32) {
    %c0_i32 = arith.constant 0 : i32
    %c0_i32_0 = arith.constant 0 : i32
    %c0_i32_1 = arith.constant 0 : i32
    %c0_i32_2 = arith.constant 0 : i32
    return %c0_i32, %c0_i32_0, %c0_i32_1 : i32, i32, i32
  }
  func.func @transform_15(%arg0: i32) -> (i32, i32, i32) {
    %c0_i32 = arith.constant 0 : i32
    %c0_i32_0 = arith.constant 0 : i32
    %c0_i32_1 = arith.constant 0 : i32
    %c0_i32_2 = arith.constant 0 : i32
    return %c0_i32, %c0_i32_0, %c0_i32_1 : i32, i32, i32
  }
  func.func @transform_16(%arg0: i32) -> (i32, i32) {
    %c0_i32 = arith.constant 0 : i32
    %c0_i32_0 = arith.constant 0 : i32
    %c0_i32_1 = arith.constant 0 : i32
    return %c0_i32, %c0_i32_0 : i32, i32
  }
  func.func @transform_17(%arg0: i32) -> (i32, i32) {
    %c0_i32 = arith.constant 0 : i32
    %c0_i32_0 = arith.constant 0 : i32
    %c0_i32_1 = arith.constant 0 : i32
    return %c0_i32, %c0_i32_0 : i32, i32
  }
  func.func @transform_18(%arg0: i32) -> (i32, i32) {
    %c0_i32 = arith.constant 0 : i32
    %c0_i32_0 = arith.constant 0 : i32
    %c0_i32_1 = arith.constant 0 : i32
    return %c0_i32, %c0_i32_0 : i32, i32
  }
  func.func @transform_19(%arg0: i32) -> (i32, i32) {
    %c0_i32 = arith.constant 0 : i32
    %c0_i32_0 = arith.constant 0 : i32
    %c0_i32_1 = arith.constant 0 : i32
    return %c0_i32, %c0_i32_0 : i32, i32
  }
  func.func @transform_20(%arg0: i32) -> (i32, i32) {
    %c0_i32 = arith.constant 0 : i32
    %c0_i32_0 = arith.constant 0 : i32
    %c0_i32_1 = arith.constant 0 : i32
    return %c0_i32, %c0_i32_0 : i32, i32
  }
  func.func @transform_21(%arg0: i32) -> (i32, i32) {
    %c0_i32 = arith.constant 0 : i32
    %c0_i32_0 = arith.constant 0 : i32
    %c0_i32_1 = arith.constant 0 : i32
    return %c0_i32, %c0_i32_0 : i32, i32
  }
  func.func @transform_22(%arg0: i32) -> (i32, i32) {
    %c0_i32 = arith.constant 0 : i32
    %c0_i32_0 = arith.constant 0 : i32
    %c0_i32_1 = arith.constant 0 : i32
    return %c0_i32, %c0_i32_0 : i32, i32
  }
}

</mosaic_0001>

<llo_original>
// kernel: _forward_with_loss.1
$region0: #{_forward_with_loss.1}
  #allocation0 [shape = 'u32[]', space=smem, size = 0x4, offset = 0x4, fixed_abs, tag = 'smem constant byte address 0x4 - core index']
  #allocation1 [shape = 'u32[144,128]{1,0:T(1,128)}', space=vmem, size = 0x12000, scoped, tag = 'internal scratch']
  %s0 = inlined_call_operand.vmem [shape: f32[16,32], index: 0, kind: input, shape index: {}]
  %s1 = inlined_call_operand.vmem [shape: f32[2,128], index: 1, kind: input, shape index: {}]
  %s2 = inlined_call_operand.vmem [shape: f32[1,32], index: 2, kind: input, shape index: {}]
  %s3 = inlined_call_operand.vmem [shape: f32[1,32], index: 3, kind: input, shape index: {}]
  %s4 = inlined_call_operand.vmem [shape: bf16[2,32,96], index: 4, kind: input, shape index: {}]
  %s5 = inlined_call_operand.vmem [shape: f32[2,1,96], index: 5, kind: input, shape index: {}]
  %s6 = inlined_call_operand.vmem [shape: bf16[2,32,32], index: 6, kind: input, shape index: {}]
  %s7 = inlined_call_operand.vmem [shape: f32[2,1,32], index: 7, kind: input, shape index: {}]
  %s8 = inlined_call_operand.vmem [shape: f32[2,1,32], index: 8, kind: input, shape index: {}]
  %s9 = inlined_call_operand.vmem [shape: f32[2,1,32], index: 9, kind: input, shape index: {}]
  %s10 = inlined_call_operand.vmem [shape: bf16[2,32,128], index: 10, kind: input, shape index: {}]
  %s11 = inlined_call_operand.vmem [shape: f32[2,1,128], index: 11, kind: input, shape index: {}]
  %s12 = inlined_call_operand.vmem [shape: bf16[2,128,32], index: 12, kind: input, shape index: {}]
  %s13 = inlined_call_operand.vmem [shape: f32[2,1,32], index: 13, kind: input, shape index: {}]
  %s14 = inlined_call_operand.vmem [shape: f32[2,1,32], index: 14, kind: input, shape index: {}]
  %s15 = inlined_call_operand.vmem [shape: f32[2,1,32], index: 15, kind: input, shape index: {}]
  %s16 = inlined_call_operand.vmem [shape: bf16[32,32], index: 16, kind: input, shape index: {}]
  %s17 = inlined_call_operand.vmem [shape: f32[1,32], index: 17, kind: input, shape index: {}]
  %s18 = inlined_call_operand.vmem [shape: bf16[32,128], index: 18, kind: input, shape index: {}]
  %s19 = inlined_call_operand.vmem [shape: f32[1,128], index: 19, kind: input, shape index: {}]
  %s20 = inlined_call_operand.vmem [shape: f32[16,128], index: 20, kind: input, shape index: {}]
  %s21 = inlined_call_operand.vmem [shape: f32[16,128], index: 21, kind: output, shape index: {0}]
  %s22 = inlined_call_operand.hbm [shape: f32[1,128], index: 22, kind: output, shape index: {1}]
  %23 = xla_tuple %s21, %s22
  %s24 = sld [smem:[#allocation0]]
  $region102: #{_forward_with_loss.1} parent=0
    _
  %s26 = ssub.s32 1, %s24
  %s27 = scalar_select 0, %s26, %s24
  $region1: #{_forward_with_loss.1} parent=0
    #allocation2 [shape = 'u8[512]{0}', space=vmem, size = 0x400, scoped, tag = 'output window, operand 1, single buffered']
    #allocation3 [shape = 's32[1]{0}', space=sflag, size = 0x4, scoped, tag = 'scoped memory for _forward_with_loss.1']
    %28 = vsyncpa [#allocation3], 0
    // Predicated region
    $region2: #{_forward_with_loss.1} parent=1 // pred_check
      _
    $region3: #{_forward_with_loss.1} parent=1 // pred_check_branch
      %30 = sbr.rel (0) target = $region5
    $region4: #{_forward_with_loss.1} parent=1 // pred_region
      _
    $region5: #{_forward_with_loss.1} parent=1 // pred_fallthru
      _
    // Predicated region
    $region6: #{_forward_with_loss.1} parent=1 // pred_check
      _
    $region7: #{_forward_with_loss.1} parent=1 // pred_check_branch
      %32 = sbr.rel (0) target = $region9
    $region8: #{_forward_with_loss.1} parent=1 // pred_region
      _
    $region9: #{_forward_with_loss.1} parent=1 // pred_fallthru
      _
    // Predicated region
    $region10: #{_forward_with_loss.1} parent=1 // pred_check
      _
    $region11: #{_forward_with_loss.1} parent=1 // pred_check_branch
      %34 = sbr.rel (0) target = $region13
    $region12: #{_forward_with_loss.1} parent=1 // pred_region
      _
    $region13: #{_forward_with_loss.1} parent=1 // pred_fallthru
      _
    // Predicated region
    $region14: #{_forward_with_loss.1} parent=1 // pred_check
      _
    $region15: #{_forward_with_loss.1} parent=1 // pred_check_branch
      %36 = sbr.rel (0) target = $region17
    $region16: #{_forward_with_loss.1} parent=1 // pred_region
      _
    $region17: #{_forward_with_loss.1} parent=1 // pred_fallthru
      _
    // Predicated region
    $region18: #{_forward_with_loss.1} parent=1 // pred_check
      _
    $region19: #{_forward_with_loss.1} parent=1 // pred_check_branch
      %38 = sbr.rel (0) target = $region21
    $region20: #{_forward_with_loss.1} parent=1 // pred_region
      _
    $region21: #{_forward_with_loss.1} parent=1 // pred_fallthru
      _
    // Predicated region
    $region22: #{_forward_with_loss.1} parent=1 // pred_check
      _
    $region23: #{_forward_with_loss.1} parent=1 // pred_check_branch
      %40 = sbr.rel (0) target = $region25
    $region24: #{_forward_with_loss.1} parent=1 // pred_region
      _
    $region25: #{_forward_with_loss.1} parent=1 // pred_fallthru
      _
    // Predicated region
    $region26: #{_forward_with_loss.1} parent=1 // pred_check
      _
    $region27: #{_forward_with_loss.1} parent=1 // pred_check_branch
      %42 = sbr.rel (0) target = $region29
    $region28: #{_forward_with_loss.1} parent=1 // pred_region
      _
    $region29: #{_forward_with_loss.1} parent=1 // pred_fallthru
      _
    // Predicated region
    $region30: #{_forward_with_loss.1} parent=1 // pred_check
      _
    $region31: #{_forward_with_loss.1} parent=1 // pred_check_branch
      %44 = sbr.rel (0) target = $region33
    $region32: #{_forward_with_loss.1} parent=1 // pred_region
      _
    $region33: #{_forward_with_loss.1} parent=1 // pred_fallthru
      _
    // Predicated region
    $region34: #{_forward_with_loss.1} parent=1 // pred_check
      _
    $region35: #{_forward_with_loss.1} parent=1 // pred_check_branch
      %46 = sbr.rel (0) target = $region37
    $region36: #{_forward_with_loss.1} parent=1 // pred_region
      _
    $region37: #{_forward_with_loss.1} parent=1 // pred_fallthru
      _
    // Predicated region
    $region38: #{_forward_with_loss.1} parent=1 // pred_check
      _
    $region39: #{_forward_with_loss.1} parent=1 // pred_check_branch
      %48 = sbr.rel (0) target = $region41
    $region40: #{_forward_with_loss.1} parent=1 // pred_region
      _
    $region41: #{_forward_with_loss.1} parent=1 // pred_fallthru
      _
    // Predicated region
    $region42: #{_forward_with_loss.1} parent=1 // pred_check
      _
    $region43: #{_forward_with_loss.1} parent=1 // pred_check_branch
      %50 = sbr.rel (0) target = $region45
    $region44: #{_forward_with_loss.1} parent=1 // pred_region
      _
    $region45: #{_forward_with_loss.1} parent=1 // pred_fallthru
      _
    // Predicated region
    $region46: #{_forward_with_loss.1} parent=1 // pred_check
      _
    $region47: #{_forward_with_loss.1} parent=1 // pred_check_branch
      %52 = sbr.rel (0) target = $region49
    $region48: #{_forward_with_loss.1} parent=1 // pred_region
      _
    $region49: #{_forward_with_loss.1} parent=1 // pred_fallthru
      _
    // Predicated region
    $region50: #{_forward_with_loss.1} parent=1 // pred_check
      _
    $region51: #{_forward_with_loss.1} parent=1 // pred_check_branch
      %54 = sbr.rel (0) target = $region53
    $region52: #{_forward_with_loss.1} parent=1 // pred_region
      _
    $region53: #{_forward_with_loss.1} parent=1 // pred_fallthru
      _
    // Predicated region
    $region54: #{_forward_with_loss.1} parent=1 // pred_check
      _
    $region55: #{_forward_with_loss.1} parent=1 // pred_check_branch
      %56 = sbr.rel (0) target = $region57
    $region56: #{_forward_with_loss.1} parent=1 // pred_region
      _
    $region57: #{_forward_with_loss.1} parent=1 // pred_fallthru
      _
    // Predicated region
    $region58: #{_forward_with_loss.1} parent=1 // pred_check
      _
    $region59: #{_forward_with_loss.1} parent=1 // pred_check_branch
      %58 = sbr.rel (0) target = $region61
    $region60: #{_forward_with_loss.1} parent=1 // pred_region
      _
    $region61: #{_forward_with_loss.1} parent=1 // pred_fallthru
      _
    // Predicated region
    $region62: #{_forward_with_loss.1} parent=1 // pred_check
      _
    $region63: #{_forward_with_loss.1} parent=1 // pred_check_branch
      %60 = sbr.rel (0) target = $region65
    $region64: #{_forward_with_loss.1} parent=1 // pred_region
      _
    $region65: #{_forward_with_loss.1} parent=1 // pred_fallthru
      _
    // Predicated region
    $region66: #{_forward_with_loss.1} parent=1 // pred_check
      _
    $region67: #{_forward_with_loss.1} parent=1 // pred_check_branch
      %62 = sbr.rel (0) target = $region69
    $region68: #{_forward_with_loss.1} parent=1 // pred_region
      _
    $region69: #{_forward_with_loss.1} parent=1 // pred_fallthru
      _
    // Predicated region
    $region70: #{_forward_with_loss.1} parent=1 // pred_check
      _
    $region71: #{_forward_with_loss.1} parent=1 // pred_check_branch
      %64 = sbr.rel (0) target = $region73
    $region72: #{_forward_with_loss.1} parent=1 // pred_region
      _
    $region73: #{_forward_with_loss.1} parent=1 // pred_fallthru
      _
    // Predicated region
    $region74: #{_forward_with_loss.1} parent=1 // pred_check
      _
    $region75: #{_forward_with_loss.1} parent=1 // pred_check_branch
      %66 = sbr.rel (0) target = $region77
    $region76: #{_forward_with_loss.1} parent=1 // pred_region
      _
    $region77: #{_forward_with_loss.1} parent=1 // pred_fallthru
      _
    // Predicated region
    $region78: #{_forward_with_loss.1} parent=1 // pred_check
      _
    $region79: #{_forward_with_loss.1} parent=1 // pred_check_branch
      %68 = sbr.rel (0) target = $region81
    $region80: #{_forward_with_loss.1} parent=1 // pred_region
      _
    $region81: #{_forward_with_loss.1} parent=1 // pred_fallthru
      _
    // Predicated region
    $region82: #{_forward_with_loss.1} parent=1 // pred_check
      _
    $region83: #{_forward_with_loss.1} parent=1 // pred_check_branch
      %70 = sbr.rel (0) target = $region85
    $region84: #{_forward_with_loss.1} parent=1 // pred_region
      _
    $region85: #{_forward_with_loss.1} parent=1 // pred_fallthru
      _
    %v72 = vld [vmem:[%s0] sm:$0xff]
    %v73 = vld [vmem:[%s0 + $0x8] sm:$0xff]
    %v74 = vld [vmem:[%s2] sm:$0x1]
    %v75 = vld [vmem:[%s3] sm:$0x1]
    %vm76 = vcmask 261120
    %v77 = vsel %vm76, %v72, 0.0
    %78 = vadd.xlane.f32.xlu0 %v77
    %v79 = vpop.xlane.xlu0 %78
    %v80 = vsel %vm76, %v73, 0.0
    %81 = vadd.xlane.f32.xlu0 %v80
    %v82 = vpop.xlane.xlu0 %81
    %v83 = vrcp.pop 32.0
    %v84 = vmul.f32 %v79, %v83
    %v85 = vmul.f32 %v82, %v83
    %v86 = vsub.f32 %v72, %v84
    %v87 = vsub.f32 %v73, %v85
    %v88 = vmul.f32 %v86, %v86
    %v89 = vmul.f32 %v87, %v87
    %v90 = vsel %vm76, %v88, 0.0
    %91 = vadd.xlane.f32.xlu0 %v90
    %v92 = vpop.xlane.xlu0 %91
    %v93 = vsel %vm76, %v89, 0.0
    %94 = vadd.xlane.f32.xlu0 %v93
    %v95 = vpop.xlane.xlu0 %94
    %v96 = vmul.f32 %v92, %v83
    %v97 = vmul.f32 %v95, %v83
    %v98 = vadd.f32 %v96, 1e-12
    %v99 = vadd.f32 %v97, 1e-12
    %v100 = vrsqrt.pop %v98
    %v101 = vrsqrt.pop %v99
    %v102 = vmul.f32 %v86, %v100
    %v103 = vmul.f32 %v87, %v101
    %v105 = vlaneseq
    %v106 = vshrl.u32 %v105, 7
    %v107 = vsub.s32 0, %v106
    %v108 = vrot.slane %v74, %v107
    %v110 = vmul.f32 %v102, %v108
    %v111 = vmul.f32 %v103, %v108
    %v113 = vlaneseq
    %v114 = vshrl.u32 %v113, 7
    %v115 = vsub.s32 0, %v114
    %v116 = vrot.slane %v75, %v115
    %v118 = vadd.f32 %v110, %v116
    %v119 = vadd.f32 %v111, %v116
    %v120 = vld [vmem:[%s1] sm:$0x3]
    %v123 = vunpack.c.l.s4 1966171168
    %v124 = vunpack.c.0.s8 %v123
    %v125 = vlaneseq
    %v126 = vshrl.u32 %v125, 7
    %v127 = vsub.s32 %v124, %v126
    %v128 = vrot.slane %v120, %v127
    %v129 = vcombine.high %v128, %v128
    %v131 = vunpack.c.l.s4 1966171168
    %v132 = vunpack.c.0.s8 %v131
    %v133 = vlaneseq
    %v134 = vshrl.u32 %v133, 7
    %v135 = vsub.s32 %v132, %v134
    %v136 = vrot.slane %v128, %v135
    %v138 = vunpack.c.l.s4 1966171168
    %v139 = vunpack.c.0.s8 %v138
    %v140 = vlaneseq
    %v141 = vshrl.u32 %v140, 7
    %v142 = vsub.s32 %v139, %v141
    %v143 = vrot.slane %v129, %v142
    %v144 = vpack.c.bf16 %v119, %v118
    %v145 = vld [vmem:[%s4] sm:$0xf]
    %v146 = vld [vmem:[%s4 + $0x4] sm:$0xf]
    %v147 = vld [vmem:[%s4 + $0x8] sm:$0xf]
    %v148 = vld [vmem:[%s4 + $0xc] sm:$0xf]
    %v149 = vld [vmem:[%s5] sm:$0x1]
    %v151 = vlaneseq
    %v152 = vshrl.u32 %v151, 7
    %v153 = vsub.s32 0, %v152
    %v154 = vrot.slane %v149, %v153
    %v160 = vunpack.c.l.b16 %v145
    %v161 = vunpack.c.l.b16 %v146
    %v162 = vunpack.c.l.b16 %v147
    %v163 = vunpack.c.l.b16 %v148
    %v164 = vpack.c.b16 %v161, %v160
    %v165 = vpack.c.b16 %v163, %v162
    %v169 = vsel %vm76, %v144, 0
    %171 = vmatprep.subr.bf16.mxu0 0
    %172 = vmatpush1.bf16.msra.mxu0 %v164
    %173 = vmatprep.subr.bf16.mxu0 0
    %174 = vmatpush1.bf16.msra.mxu0 %v165
    %175 = vmatprep.subr.bf16.mxu0 0
    %176 = vmatpush1.bf16.msra.mxu0 0
    %177 = vmatprep.subr.bf16.mxu0 0
    %178 = vmatpush1.bf16.msra.mxu0 0
    %179 = vmatprep.subr.bf16.mxu0 0
    %180 = vmatpush1.bf16.msra.mxu0 0
    %181 = vmatprep.subr.bf16.mxu0 0
    %182 = vmatpush1.bf16.msra.mxu0 0
    %183 = vmatprep.subr.bf16.mxu0 0
    %184 = vmatpush1.bf16.msra.mxu0 0
    %185 = vmatprep.subr.bf16.mxu0 0
    %186 = vmatpush1.bf16.msra.mxu0 0
    %187 = vmatprep.subr.bf16.mxu0 0
    %188 = vmatpush1.bf16.msra.mxu0 0
    %189 = vmatprep.subr.bf16.mxu0 0
    %190 = vmatpush1.bf16.msra.mxu0 0
    %191 = vmatprep.subr.bf16.mxu0 0
    %192 = vmatpush1.bf16.msra.mxu0 0
    %193 = vmatprep.subr.bf16.mxu0 0
    %194 = vmatpush1.bf16.msra.mxu0 0
    %195 = vmatprep.subr.bf16.mxu0 0
    %196 = vmatpush1.bf16.msra.mxu0 0
    %197 = vmatprep.subr.bf16.mxu0 0
    %198 = vmatpush1.bf16.msra.mxu0 0
    %199 = vmatprep.subr.bf16.mxu0 0
    %200 = vmatpush1.bf16.msra.mxu0 0
    %201 = vmatprep.subr.bf16.mxu0 0
    %202 = vmatpush1.bf16.msra.mxu0 0
    %203 = vmatprep.mubr.bf16.mxu0 0
    %204 = vmatmul.mubr.bf16.gmra.mrb[0].mxu0 %v169
    %v205 = vpop.f32.mrb[0].mxu0
    %v206 = vadd.f32 %v154, %v205
    %v207 = vpop.f32.mrb[0].mxu0
    %v208 = vpop.f32.mrb[0].mxu0
    %v209 = vadd.f32 %v154, %v208
    %v210 = vpop.f32.mrb[0].mxu0
    %211 = vdwg.mxu0
    %v212 = vlaneseq
    %v213 = vshrl.u32 %v212, 7
    %v214 = vsub.s32 0, %v213
    %v215 = vrot.slane %v136, %v214
    %v216 = vlaneseq
    %v217 = vshrl.u32 %v216, 7
    %v218 = vsub.s32 0, %v217
    %v219 = vrot.slane %v143, %v218
    %223 = vrot.lane.b32.xlu0 %v206, 96
    %v224 = vpop.permute.xlu0 %223
    %vm225 = vcmask 64512
    %v226 = vsel %vm225, %v206, 0
    %v228 = vsel %vm225, %v224, 0
    %230 = vmatprep.subr.mxu0 0.0
    %231 = vmatpush1.xpose.msra.mxu0 %v228
    %232 = vmatprep.subr.mxu0 0.0
    %233 = vmatpush1.xpose.msra.mxu0 0.0
    %234 = vmatprep.subr.mxu0 0.0
    %235 = vmatpush1.xpose.msra.mxu0 0.0
    %236 = vmatprep.subr.mxu0 0.0
    %237 = vmatpush1.xpose.msra.mxu0 0.0
    %238 = vmatprep.subr.mxu0 0.0
    %239 = vmatpush1.xpose.msra.mxu0 0.0
    %240 = vmatprep.subr.mxu0 0.0
    %241 = vmatpush1.xpose.msra.mxu0 0.0
    %242 = vmatprep.subr.mxu0 0.0
    %243 = vmatpush1.xpose.msra.mxu0 0.0
    %244 = vmatprep.subr.mxu0 0.0
    %245 = vmatpush1.xpose.msra.mxu0 0.0
    %246 = vmatprep.subr.mxu0 0.0
    %247 = vmatpush1.xpose.msra.mxu0 0.0
    %248 = vmatprep.subr.mxu0 0.0
    %249 = vmatpush1.xpose.msra.mxu0 0.0
    %250 = vmatprep.subr.mxu0 0.0
    %251 = vmatpush1.xpose.msra.mxu0 0.0
    %252 = vmatprep.subr.mxu0 0.0
    %253 = vmatpush1.xpose.msra.mxu0 0.0
    %254 = vmatprep.subr.mxu0 0.0
    %255 = vmatpush1.xpose.msra.mxu0 0.0
    %256 = vmatprep.subr.mxu0 0.0
    %257 = vmatpush1.xpose.msra.mxu0 0.0
    %258 = vmatprep.subr.mxu0 0.0
    %259 = vmatpush1.xpose.msra.mxu0 0.0
    %260 = vmatprep.subr.mxu0 0.0
    %261 = vmatpush1.xpose.msra.mxu0 0.0
    %262 = vmatprep.subr.mxu0 0.0
    %263 = vmatpush1.xpose.msra.mxu0 0.0
    %264 = vmatprep.subr.mxu0 0.0
    %265 = vmatpush1.xpose.msra.mxu0 0.0
    %266 = vmatprep.subr.mxu0 0.0
    %267 = vmatpush1.xpose.msra.mxu0 0.0
    %268 = vmatprep.subr.mxu0 0.0
    %269 = vmatpush1.xpose.msra.mxu0 0.0
    %270 = vmatprep.subr.mxu0 0.0
    %271 = vmatpush1.xpose.msra.mxu0 0.0
    %272 = vmatprep.subr.mxu0 0.0
    %273 = vmatpush1.xpose.msra.mxu0 0.0
    %274 = vmatprep.subr.mxu0 0.0
    %275 = vmatpush1.xpose.msra.mxu0 0.0
    %276 = vmatprep.subr.mxu0 0.0
    %277 = vmatpush1.xpose.msra.mxu0 0.0
    %278 = vmatprep.subr.mxu0 0.0
    %279 = vmatpush1.xpose.msra.mxu0 0.0
    %280 = vmatprep.subr.mxu0 0.0
    %281 = vmatpush1.xpose.msra.mxu0 0.0
    %282 = vmatprep.subr.mxu0 0.0
    %283 = vmatpush1.xpose.msra.mxu0 0.0
    %284 = vmatprep.subr.mxu0 0.0
    %285 = vmatpush1.xpose.msra.mxu0 0.0
    %286 = vmatprep.subr.mxu0 0.0
    %287 = vmatpush1.xpose.msra.mxu0 0.0
    %288 = vmatprep.subr.mxu0 0.0
    %289 = vmatpush1.xpose.msra.mxu0 0.0
    %290 = vmatprep.subr.mxu0 0.0
    %291 = vmatpush1.xpose.msra.mxu0 0.0
    %292 = vmatprep.subr.mxu0 0.0
    %293 = vmatpush1.xpose.msra.mxu0 0.0
    %294 = vmatprep.mubr.f32.mxu0 0.0
    %295 = vmatmul.mubr.f32.gmra.mrb[0].mxu0 %v226
    %v296 = vpop.f32.mrb[0].mxu0
    %v297 = vadd.f32 %v215, %v296
    %v298 = vpop.f32.mrb[0].mxu0
    %299 = vdwg.mxu0
    %301 = vrot.lane.b32.xlu0 %v209, 96
    %v302 = vpop.permute.xlu0 %301
    %v303 = vsel %vm225, %v209, 0
    %v305 = vsel %vm225, %v302, 0
    %307 = vmatprep.subr.mxu0 0.0
    %308 = vmatpush1.xpose.msra.mxu0 %v305
    %309 = vmatprep.subr.mxu0 0.0
    %310 = vmatpush1.xpose.msra.mxu0 0.0
    %311 = vmatprep.subr.mxu0 0.0
    %312 = vmatpush1.xpose.msra.mxu0 0.0
    %313 = vmatprep.subr.mxu0 0.0
    %314 = vmatpush1.xpose.msra.mxu0 0.0
    %315 = vmatprep.subr.mxu0 0.0
    %316 = vmatpush1.xpose.msra.mxu0 0.0
    %317 = vmatprep.subr.mxu0 0.0
    %318 = vmatpush1.xpose.msra.mxu0 0.0
    %319 = vmatprep.subr.mxu0 0.0
    %320 = vmatpush1.xpose.msra.mxu0 0.0
    %321 = vmatprep.subr.mxu0 0.0
    %322 = vmatpush1.xpose.msra.mxu0 0.0
    %323 = vmatprep.subr.mxu0 0.0
    %324 = vmatpush1.xpose.msra.mxu0 0.0
    %325 = vmatprep.subr.mxu0 0.0
    %326 = vmatpush1.xpose.msra.mxu0 0.0
    %327 = vmatprep.subr.mxu0 0.0
    %328 = vmatpush1.xpose.msra.mxu0 0.0
    %329 = vmatprep.subr.mxu0 0.0
    %330 = vmatpush1.xpose.msra.mxu0 0.0
    %331 = vmatprep.subr.mxu0 0.0
    %332 = vmatpush1.xpose.msra.mxu0 0.0
    %333 = vmatprep.subr.mxu0 0.0
    %334 = vmatpush1.xpose.msra.mxu0 0.0
    %335 = vmatprep.subr.mxu0 0.0
    %336 = vmatpush1.xpose.msra.mxu0 0.0
    %337 = vmatprep.subr.mxu0 0.0
    %338 = vmatpush1.xpose.msra.mxu0 0.0
    %339 = vmatprep.subr.mxu0 0.0
    %340 = vmatpush1.xpose.msra.mxu0 0.0
    %341 = vmatprep.subr.mxu0 0.0
    %342 = vmatpush1.xpose.msra.mxu0 0.0
    %343 = vmatprep.subr.mxu0 0.0
    %344 = vmatpush1.xpose.msra.mxu0 0.0
    %345 = vmatprep.subr.mxu0 0.0
    %346 = vmatpush1.xpose.msra.mxu0 0.0
    %347 = vmatprep.subr.mxu0 0.0
    %348 = vmatpush1.xpose.msra.mxu0 0.0
    %349 = vmatprep.subr.mxu0 0.0
    %350 = vmatpush1.xpose.msra.mxu0 0.0
    %351 = vmatprep.subr.mxu0 0.0
    %352 = vmatpush1.xpose.msra.mxu0 0.0
    %353 = vmatprep.subr.mxu0 0.0
    %354 = vmatpush1.xpose.msra.mxu0 0.0
    %355 = vmatprep.subr.mxu0 0.0
    %356 = vmatpush1.xpose.msra.mxu0 0.0
    %357 = vmatprep.subr.mxu0 0.0
    %358 = vmatpush1.xpose.msra.mxu0 0.0
    %359 = vmatprep.subr.mxu0 0.0
    %360 = vmatpush1.xpose.msra.mxu0 0.0
    %361 = vmatprep.subr.mxu0 0.0
    %362 = vmatpush1.xpose.msra.mxu0 0.0
    %363 = vmatprep.subr.mxu0 0.0
    %364 = vmatpush1.xpose.msra.mxu0 0.0
    %365 = vmatprep.subr.mxu0 0.0
    %366 = vmatpush1.xpose.msra.mxu0 0.0
    %367 = vmatprep.subr.mxu0 0.0
    %368 = vmatpush1.xpose.msra.mxu0 0.0
    %369 = vmatprep.subr.mxu0 0.0
    %370 = vmatpush1.xpose.msra.mxu0 0.0
    %371 = vmatprep.mubr.f32.mxu0 0.0
    %372 = vmatmul.mubr.f32.gmra.mrb[0].mxu0 %v303
    %v373 = vpop.f32.mrb[0].mxu0
    %v374 = vadd.f32 %v219, %v373
    %v375 = vpop.f32.mrb[0].mxu0
    %376 = vdwg.mxu0
    %v377 = vsel %vm225, %v297, -inf
    %378 = vmax.xlane.f32.xlu0 %v377
    %v379 = vpop.xlane.xlu0 %378
    %v380 = vsel %vm225, %v374, -inf
    %381 = vmax.xlane.f32.xlu0 %v380
    %v382 = vpop.xlane.xlu0 %381
    %v383 = vsub.f32 %v297, %v379
    %v384 = vsub.f32 %v374, %v382
    %v385 = vmul.f32 %v383, 1.442695
    %v386 = vpow.pop %v385
    %v387 = vmul.f32 %v384, 1.442695
    %v388 = vpow.pop %v387
    %v389 = vsel %vm225, %v386, 0.0
    %390 = vadd.xlane.f32.xlu0 %v389
    %v391 = vpop.xlane.xlu0 %390
    %v392 = vsel %vm225, %v388, 0.0
    %393 = vadd.xlane.f32.xlu0 %v392
    %v394 = vpop.xlane.xlu0 %393
    %v395 = vrcp.pop %v391
    %v396 = vrcp.pop %v394
    %v397 = vmul.f32 %v386, %v395
    %v398 = vmul.f32 %v388, %v396
    %399 = vrot.lane.b32.xlu0 %v206, 64
    %v400 = vpop.permute.xlu0 %399
    %v403 = vsel %vm225, %v397, 0
    %405 = vmatprep.subr.mxu0 0.0
    %406 = vmatpush1.msra.mxu0 %v400
    %407 = vmatprep.subr.mxu0 0.0
    %408 = vmatpush1.msra.mxu0 0.0
    %409 = vmatprep.subr.mxu0 0.0
    %410 = vmatpush1.msra.mxu0 0.0
    %411 = vmatprep.subr.mxu0 0.0
    %412 = vmatpush1.msra.mxu0 0.0
    %413 = vmatprep.subr.mxu0 0.0
    %414 = vmatpush1.msra.mxu0 0.0
    %415 = vmatprep.subr.mxu0 0.0
    %416 = vmatpush1.msra.mxu0 0.0
    %417 = vmatprep.subr.mxu0 0.0
    %418 = vmatpush1.msra.mxu0 0.0
    %419 = vmatprep.subr.mxu0 0.0
    %420 = vmatpush1.msra.mxu0 0.0
    %421 = vmatprep.subr.mxu0 0.0
    %422 = vmatpush1.msra.mxu0 0.0
    %423 = vmatprep.subr.mxu0 0.0
    %424 = vmatpush1.msra.mxu0 0.0
    %425 = vmatprep.subr.mxu0 0.0
    %426 = vmatpush1.msra.mxu0 0.0
    %427 = vmatprep.subr.mxu0 0.0
    %428 = vmatpush1.msra.mxu0 0.0
    %429 = vmatprep.subr.mxu0 0.0
    %430 = vmatpush1.msra.mxu0 0.0
    %431 = vmatprep.subr.mxu0 0.0
    %432 = vmatpush1.msra.mxu0 0.0
    %433 = vmatprep.subr.mxu0 0.0
    %434 = vmatpush1.msra.mxu0 0.0
    %435 = vmatprep.subr.mxu0 0.0
    %436 = vmatpush1.msra.mxu0 0.0
    %437 = vmatprep.subr.mxu0 0.0
    %438 = vmatpush1.msra.mxu0 0.0
    %439 = vmatprep.subr.mxu0 0.0
    %440 = vmatpush1.msra.mxu0 0.0
    %441 = vmatprep.subr.mxu0 0.0
    %442 = vmatpush1.msra.mxu0 0.0
    %443 = vmatprep.subr.mxu0 0.0
    %444 = vmatpush1.msra.mxu0 0.0
    %445 = vmatprep.subr.mxu0 0.0
    %446 = vmatpush1.msra.mxu0 0.0
    %447 = vmatprep.subr.mxu0 0.0
    %448 = vmatpush1.msra.mxu0 0.0
    %449 = vmatprep.subr.mxu0 0.0
    %450 = vmatpush1.msra.mxu0 0.0
    %451 = vmatprep.subr.mxu0 0.0
    %452 = vmatpush1.msra.mxu0 0.0
    %453 = vmatprep.subr.mxu0 0.0
    %454 = vmatpush1.msra.mxu0 0.0
    %455 = vmatprep.subr.mxu0 0.0
    %456 = vmatpush1.msra.mxu0 0.0
    %457 = vmatprep.subr.mxu0 0.0
    %458 = vmatpush1.msra.mxu0 0.0
    %459 = vmatprep.subr.mxu0 0.0
    %460 = vmatpush1.msra.mxu0 0.0
    %461 = vmatprep.subr.mxu0 0.0
    %462 = vmatpush1.msra.mxu0 0.0
    %463 = vmatprep.subr.mxu0 0.0
    %464 = vmatpush1.msra.mxu0 0.0
    %465 = vmatprep.subr.mxu0 0.0
    %466 = vmatpush1.msra.mxu0 0.0
    %467 = vmatprep.subr.mxu0 0.0
    %468 = vmatpush1.msra.mxu0 0.0
    %469 = vmatprep.mubr.f32.mxu0 0.0
    %470 = vmatmul.mubr.f32.gmra.mrb[0].mxu0 %v403
    %v471 = vpop.f32.mrb[0].mxu0
    %v472 = vadd.f32 0.0, %v471
    %v473 = vpop.f32.mrb[0].mxu0
    %474 = vdwg.mxu0
    %475 = vrot.lane.b32.xlu0 %v209, 64
    %v476 = vpop.permute.xlu0 %475
    %v479 = vsel %vm225, %v398, 0
    %481 = vmatprep.subr.mxu0 0.0
    %482 = vmatpush1.msra.mxu0 %v476
    %483 = vmatprep.subr.mxu0 0.0
    %484 = vmatpush1.msra.mxu0 0.0
    %485 = vmatprep.subr.mxu0 0.0
    %486 = vmatpush1.msra.mxu0 0.0
    %487 = vmatprep.subr.mxu0 0.0
    %488 = vmatpush1.msra.mxu0 0.0
    %489 = vmatprep.subr.mxu0 0.0
    %490 = vmatpush1.msra.mxu0 0.0
    %491 = vmatprep.subr.mxu0 0.0
    %492 = vmatpush1.msra.mxu0 0.0
    %493 = vmatprep.subr.mxu0 0.0
    %494 = vmatpush1.msra.mxu0 0.0
    %495 = vmatprep.subr.mxu0 0.0
    %496 = vmatpush1.msra.mxu0 0.0
    %497 = vmatprep.subr.mxu0 0.0
    %498 = vmatpush1.msra.mxu0 0.0
    %499 = vmatprep.subr.mxu0 0.0
    %500 = vmatpush1.msra.mxu0 0.0
    %501 = vmatprep.subr.mxu0 0.0
    %502 = vmatpush1.msra.mxu0 0.0
    %503 = vmatprep.subr.mxu0 0.0
    %504 = vmatpush1.msra.mxu0 0.0
    %505 = vmatprep.subr.mxu0 0.0
    %506 = vmatpush1.msra.mxu0 0.0
    %507 = vmatprep.subr.mxu0 0.0
    %508 = vmatpush1.msra.mxu0 0.0
    %509 = vmatprep.subr.mxu0 0.0
    %510 = vmatpush1.msra.mxu0 0.0
    %511 = vmatprep.subr.mxu0 0.0
    %512 = vmatpush1.msra.mxu0 0.0
    %513 = vmatprep.subr.mxu0 0.0
    %514 = vmatpush1.msra.mxu0 0.0
    %515 = vmatprep.subr.mxu0 0.0
    %516 = vmatpush1.msra.mxu0 0.0
    %517 = vmatprep.subr.mxu0 0.0
    %518 = vmatpush1.msra.mxu0 0.0
    %519 = vmatprep.subr.mxu0 0.0
    %520 = vmatpush1.msra.mxu0 0.0
    %521 = vmatprep.subr.mxu0 0.0
    %522 = vmatpush1.msra.mxu0 0.0
    %523 = vmatprep.subr.mxu0 0.0
    %524 = vmatpush1.msra.mxu0 0.0
    %525 = vmatprep.subr.mxu0 0.0
    %526 = vmatpush1.msra.mxu0 0.0
    %527 = vmatprep.subr.mxu0 0.0
    %528 = vmatpush1.msra.mxu0 0.0
    %529 = vmatprep.subr.mxu0 0.0
    %530 = vmatpush1.msra.mxu0 0.0
    %531 = vmatprep.subr.mxu0 0.0
    %532 = vmatpush1.msra.mxu0 0.0
    %533 = vmatprep.subr.mxu0 0.0
    %534 = vmatpush1.msra.mxu0 0.0
    %535 = vmatprep.subr.mxu0 0.0
    %536 = vmatpush1.msra.mxu0 0.0
    %537 = vmatprep.subr.mxu0 0.0
    %538 = vmatpush1.msra.mxu0 0.0
    %539 = vmatprep.subr.mxu0 0.0
    %540 = vmatpush1.msra.mxu0 0.0
    %541 = vmatprep.subr.mxu0 0.0
    %542 = vmatpush1.msra.mxu0 0.0
    %543 = vmatprep.subr.mxu0 0.0
    %544 = vmatpush1.msra.mxu0 0.0
    %545 = vmatprep.mubr.f32.mxu0 0.0
    %546 = vmatmul.mubr.f32.gmra.mrb[0].mxu0 %v479
    %v547 = vpop.f32.mrb[0].mxu0
    %v548 = vadd.f32 0.0, %v547
    %v549 = vpop.f32.mrb[0].mxu0
    %550 = vdwg.mxu0
    %551 = vrot.lane.b32.xlu0 %v206, 120
    %v552 = vpop.permute.xlu0 %551
    %553 = vrot.lane.b32.xlu0 %v206, 88
    %v554 = vpop.permute.xlu0 %553
    %v555 = vsel %vm225, %v552, 0
    %v557 = vsel %vm225, %v554, 0
    %559 = vmatprep.subr.mxu0 0.0
    %560 = vmatpush1.xpose.msra.mxu0 %v557
    %561 = vmatprep.subr.mxu0 0.0
    %562 = vmatpush1.xpose.msra.mxu0 0.0
    %563 = vmatprep.subr.mxu0 0.0
    %564 = vmatpush1.xpose.msra.mxu0 0.0
    %565 = vmatprep.subr.mxu0 0.0
    %566 = vmatpush1.xpose.msra.mxu0 0.0
    %567 = vmatprep.subr.mxu0 0.0
    %568 = vmatpush1.xpose.msra.mxu0 0.0
    %569 = vmatprep.subr.mxu0 0.0
    %570 = vmatpush1.xpose.msra.mxu0 0.0
    %571 = vmatprep.subr.mxu0 0.0
    %572 = vmatpush1.xpose.msra.mxu0 0.0
    %573 = vmatprep.subr.mxu0 0.0
    %574 = vmatpush1.xpose.msra.mxu0 0.0
    %575 = vmatprep.subr.mxu0 0.0
    %576 = vmatpush1.xpose.msra.mxu0 0.0
    %577 = vmatprep.subr.mxu0 0.0
    %578 = vmatpush1.xpose.msra.mxu0 0.0
    %579 = vmatprep.subr.mxu0 0.0
    %580 = vmatpush1.xpose.msra.mxu0 0.0
    %581 = vmatprep.subr.mxu0 0.0
    %582 = vmatpush1.xpose.msra.mxu0 0.0
    %583 = vmatprep.subr.mxu0 0.0
    %584 = vmatpush1.xpose.msra.mxu0 0.0
    %585 = vmatprep.subr.mxu0 0.0
    %586 = vmatpush1.xpose.msra.mxu0 0.0
    %587 = vmatprep.subr.mxu0 0.0
    %588 = vmatpush1.xpose.msra.mxu0 0.0
    %589 = vmatprep.subr.mxu0 0.0
    %590 = vmatpush1.xpose.msra.mxu0 0.0
    %591 = vmatprep.subr.mxu0 0.0
    %592 = vmatpush1.xpose.msra.mxu0 0.0
    %593 = vmatprep.subr.mxu0 0.0
    %594 = vmatpush1.xpose.msra.mxu0 0.0
    %595 = vmatprep.subr.mxu0 0.0
    %596 = vmatpush1.xpose.msra.mxu0 0.0
    %597 = vmatprep.subr.mxu0 0.0
    %598 = vmatpush1.xpose.msra.mxu0 0.0
    %599 = vmatprep.subr.mxu0 0.0
    %600 = vmatpush1.xpose.msra.mxu0 0.0
    %601 = vmatprep.subr.mxu0 0.0
    %602 = vmatpush1.xpose.msra.mxu0 0.0
    %603 = vmatprep.subr.mxu0 0.0
    %604 = vmatpush1.xpose.msra.mxu0 0.0
    %605 = vmatprep.subr.mxu0 0.0
    %606 = vmatpush1.xpose.msra.mxu0 0.0
    %607 = vmatprep.subr.mxu0 0.0
    %608 = vmatpush1.xpose.msra.mxu0 0.0
    %609 = vmatprep.subr.mxu0 0.0
    %610 = vmatpush1.xpose.msra.mxu0 0.0
    %611 = vmatprep.subr.mxu0 0.0
    %612 = vmatpush1.xpose.msra.mxu0 0.0
    %613 = vmatprep.subr.mxu0 0.0
    %614 = vmatpush1.xpose.msra.mxu0 0.0
    %615 = vmatprep.subr.mxu0 0.0
    %616 = vmatpush1.xpose.msra.mxu0 0.0
    %617 = vmatprep.subr.mxu0 0.0
    %618 = vmatpush1.xpose.msra.mxu0 0.0
    %619 = vmatprep.subr.mxu0 0.0
    %620 = vmatpush1.xpose.msra.mxu0 0.0
    %621 = vmatprep.subr.mxu0 0.0
    %622 = vmatpush1.xpose.msra.mxu0 0.0
    %623 = vmatprep.mubr.f32.mxu0 0.0
    %624 = vmatmul.mubr.f32.gmra.mrb[0].mxu0 %v555
    %v625 = vpop.f32.mrb[0].mxu0
    %v626 = vadd.f32 %v215, %v625
    %v627 = vpop.f32.mrb[0].mxu0
    %628 = vdwg.mxu0
    %629 = vrot.lane.b32.xlu0 %v209, 120
    %v630 = vpop.permute.xlu0 %629
    %631 = vrot.lane.b32.xlu0 %v209, 88
    %v632 = vpop.permute.xlu0 %631
    %v633 = vsel %vm225, %v630, 0
    %v635 = vsel %vm225, %v632, 0
    %637 = vmatprep.subr.mxu0 0.0
    %638 = vmatpush1.xpose.msra.mxu0 %v635
    %639 = vmatprep.subr.mxu0 0.0
    %640 = vmatpush1.xpose.msra.mxu0 0.0
    %641 = vmatprep.subr.mxu0 0.0
    %642 = vmatpush1.xpose.msra.mxu0 0.0
    %643 = vmatprep.subr.mxu0 0.0
    %644 = vmatpush1.xpose.msra.mxu0 0.0
    %645 = vmatprep.subr.mxu0 0.0
    %646 = vmatpush1.xpose.msra.mxu0 0.0
    %647 = vmatprep.subr.mxu0 0.0
    %648 = vmatpush1.xpose.msra.mxu0 0.0
    %649 = vmatprep.subr.mxu0 0.0
    %650 = vmatpush1.xpose.msra.mxu0 0.0
    %651 = vmatprep.subr.mxu0 0.0
    %652 = vmatpush1.xpose.msra.mxu0 0.0
    %653 = vmatprep.subr.mxu0 0.0
    %654 = vmatpush1.xpose.msra.mxu0 0.0
    %655 = vmatprep.subr.mxu0 0.0
    %656 = vmatpush1.xpose.msra.mxu0 0.0
    %657 = vmatprep.subr.mxu0 0.0
    %658 = vmatpush1.xpose.msra.mxu0 0.0
    %659 = vmatprep.subr.mxu0 0.0
    %660 = vmatpush1.xpose.msra.mxu0 0.0
    %661 = vmatprep.subr.mxu0 0.0
    %662 = vmatpush1.xpose.msra.mxu0 0.0
    %663 = vmatprep.subr.mxu0 0.0
    %664 = vmatpush1.xpose.msra.mxu0 0.0
    %665 = vmatprep.subr.mxu0 0.0
    %666 = vmatpush1.xpose.msra.mxu0 0.0
    %667 = vmatprep.subr.mxu0 0.0
    %668 = vmatpush1.xpose.msra.mxu0 0.0
    %669 = vmatprep.subr.mxu0 0.0
    %670 = vmatpush1.xpose.msra.mxu0 0.0
    %671 = vmatprep.subr.mxu0 0.0
    %672 = vmatpush1.xpose.msra.mxu0 0.0
    %673 = vmatprep.subr.mxu0 0.0
    %674 = vmatpush1.xpose.msra.mxu0 0.0
    %675 = vmatprep.subr.mxu0 0.0
    %676 = vmatpush1.xpose.msra.mxu0 0.0
    %677 = vmatprep.subr.mxu0 0.0
    %678 = vmatpush1.xpose.msra.mxu0 0.0
    %679 = vmatprep.subr.mxu0 0.0
    %680 = vmatpush1.xpose.msra.mxu0 0.0
    %681 = vmatprep.subr.mxu0 0.0
    %682 = vmatpush1.xpose.msra.mxu0 0.0
    %683 = vmatprep.subr.mxu0 0.0
    %684 = vmatpush1.xpose.msra.mxu0 0.0
    %685 = vmatprep.subr.mxu0 0.0
    %686 = vmatpush1.xpose.msra.mxu0 0.0
    %687 = vmatprep.subr.mxu0 0.0
    %688 = vmatpush1.xpose.msra.mxu0 0.0
    %689 = vmatprep.subr.mxu0 0.0
    %690 = vmatpush1.xpose.msra.mxu0 0.0
    %691 = vmatprep.subr.mxu0 0.0
    %692 = vmatpush1.xpose.msra.mxu0 0.0
    %693 = vmatprep.subr.mxu0 0.0
    %694 = vmatpush1.xpose.msra.mxu0 0.0
    %695 = vmatprep.subr.mxu0 0.0
    %696 = vmatpush1.xpose.msra.mxu0 0.0
    %697 = vmatprep.subr.mxu0 0.0
    %698 = vmatpush1.xpose.msra.mxu0 0.0
    %699 = vmatprep.subr.mxu0 0.0
    %700 = vmatpush1.xpose.msra.mxu0 0.0
    %701 = vmatprep.mubr.f32.mxu0 0.0
    %702 = vmatmul.mubr.f32.gmra.mrb[0].mxu0 %v633
    %v703 = vpop.f32.mrb[0].mxu0
    %v704 = vadd.f32 %v219, %v703
    %v705 = vpop.f32.mrb[0].mxu0
    %706 = vdwg.mxu0
    %v707 = vsel %vm225, %v626, -inf
    %708 = vmax.xlane.f32.xlu0 %v707
    %v709 = vpop.xlane.xlu0 %708
    %v710 = vsel %vm225, %v704, -inf
    %711 = vmax.xlane.f32.xlu0 %v710
    %v712 = vpop.xlane.xlu0 %711
    %v713 = vsub.f32 %v626, %v709
    %v714 = vsub.f32 %v704, %v712
    %v715 = vmul.f32 %v713, 1.442695
    %v716 = vpow.pop %v715
    %v717 = vmul.f32 %v714, 1.442695
    %v718 = vpow.pop %v717
    %v719 = vsel %vm225, %v716, 0.0
    %720 = vadd.xlane.f32.xlu0 %v719
    %v721 = vpop.xlane.xlu0 %720
    %v722 = vsel %vm225, %v718, 0.0
    %723 = vadd.xlane.f32.xlu0 %v722
    %v724 = vpop.xlane.xlu0 %723
    %v725 = vrcp.pop %v721
    %v726 = vrcp.pop %v724
    %v727 = vmul.f32 %v716, %v725
    %v728 = vmul.f32 %v718, %v726
    %729 = vrot.lane.b32.xlu0 %v206, 56
    %v730 = vpop.permute.xlu0 %729
    %v733 = vsel %vm225, %v727, 0
    %735 = vmatprep.subr.mxu0 0.0
    %736 = vmatpush1.msra.mxu0 %v730
    %737 = vmatprep.subr.mxu0 0.0
    %738 = vmatpush1.msra.mxu0 0.0
    %739 = vmatprep.subr.mxu0 0.0
    %740 = vmatpush1.msra.mxu0 0.0
    %741 = vmatprep.subr.mxu0 0.0
    %742 = vmatpush1.msra.mxu0 0.0
    %743 = vmatprep.subr.mxu0 0.0
    %744 = vmatpush1.msra.mxu0 0.0
    %745 = vmatprep.subr.mxu0 0.0
    %746 = vmatpush1.msra.mxu0 0.0
    %747 = vmatprep.subr.mxu0 0.0
    %748 = vmatpush1.msra.mxu0 0.0
    %749 = vmatprep.subr.mxu0 0.0
    %750 = vmatpush1.msra.mxu0 0.0
    %751 = vmatprep.subr.mxu0 0.0
    %752 = vmatpush1.msra.mxu0 0.0
    %753 = vmatprep.subr.mxu0 0.0
    %754 = vmatpush1.msra.mxu0 0.0
    %755 = vmatprep.subr.mxu0 0.0
    %756 = vmatpush1.msra.mxu0 0.0
    %757 = vmatprep.subr.mxu0 0.0
    %758 = vmatpush1.msra.mxu0 0.0
    %759 = vmatprep.subr.mxu0 0.0
    %760 = vmatpush1.msra.mxu0 0.0
    %761 = vmatprep.subr.mxu0 0.0
    %762 = vmatpush1.msra.mxu0 0.0
    %763 = vmatprep.subr.mxu0 0.0
    %764 = vmatpush1.msra.mxu0 0.0
    %765 = vmatprep.subr.mxu0 0.0
    %766 = vmatpush1.msra.mxu0 0.0
    %767 = vmatprep.subr.mxu0 0.0
    %768 = vmatpush1.msra.mxu0 0.0
    %769 = vmatprep.subr.mxu0 0.0
    %770 = vmatpush1.msra.mxu0 0.0
    %771 = vmatprep.subr.mxu0 0.0
    %772 = vmatpush1.msra.mxu0 0.0
    %773 = vmatprep.subr.mxu0 0.0
    %774 = vmatpush1.msra.mxu0 0.0
    %775 = vmatprep.subr.mxu0 0.0
    %776 = vmatpush1.msra.mxu0 0.0
    %777 = vmatprep.subr.mxu0 0.0
    %778 = vmatpush1.msra.mxu0 0.0
    %779 = vmatprep.subr.mxu0 0.0
    %780 = vmatpush1.msra.mxu0 0.0
    %781 = vmatprep.subr.mxu0 0.0
    %782 = vmatpush1.msra.mxu0 0.0
    %783 = vmatprep.subr.mxu0 0.0
    %784 = vmatpush1.msra.mxu0 0.0
    %785 = vmatprep.subr.mxu0 0.0
    %786 = vmatpush1.msra.mxu0 0.0
    %787 = vmatprep.subr.mxu0 0.0
    %788 = vmatpush1.msra.mxu0 0.0
    %789 = vmatprep.subr.mxu0 0.0
    %790 = vmatpush1.msra.mxu0 0.0
    %791 = vmatprep.subr.mxu0 0.0
    %792 = vmatpush1.msra.mxu0 0.0
    %793 = vmatprep.subr.mxu0 0.0
    %794 = vmatpush1.msra.mxu0 0.0
    %795 = vmatprep.subr.mxu0 0.0
    %796 = vmatpush1.msra.mxu0 0.0
    %797 = vmatprep.subr.mxu0 0.0
    %798 = vmatpush1.msra.mxu0 0.0
    %799 = vmatprep.mubr.f32.mxu0 0.0
    %800 = vmatmul.mubr.f32.gmra.mrb[0].mxu0 %v733
    %v801 = vpop.f32.mrb[0].mxu0
    %v802 = vadd.f32 0.0, %v801
    %v803 = vpop.f32.mrb[0].mxu0
    %804 = vdwg.mxu0
    %805 = vrot.lane.b32.xlu0 %v209, 56
    %v806 = vpop.permute.xlu0 %805
    %v809 = vsel %vm225, %v728, 0
    %811 = vmatprep.subr.mxu0 0.0
    %812 = vmatpush1.msra.mxu0 %v806
    %813 = vmatprep.subr.mxu0 0.0
    %814 = vmatpush1.msra.mxu0 0.0
    %815 = vmatprep.subr.mxu0 0.0
    %816 = vmatpush1.msra.mxu0 0.0
    %817 = vmatprep.subr.mxu0 0.0
    %818 = vmatpush1.msra.mxu0 0.0
    %819 = vmatprep.subr.mxu0 0.0
    %820 = vmatpush1.msra.mxu0 0.0
    %821 = vmatprep.subr.mxu0 0.0
    %822 = vmatpush1.msra.mxu0 0.0
    %823 = vmatprep.subr.mxu0 0.0
    %824 = vmatpush1.msra.mxu0 0.0
    %825 = vmatprep.subr.mxu0 0.0
    %826 = vmatpush1.msra.mxu0 0.0
    %827 = vmatprep.subr.mxu0 0.0
    %828 = vmatpush1.msra.mxu0 0.0
    %829 = vmatprep.subr.mxu0 0.0
    %830 = vmatpush1.msra.mxu0 0.0
    %831 = vmatprep.subr.mxu0 0.0
    %832 = vmatpush1.msra.mxu0 0.0
    %833 = vmatprep.subr.mxu0 0.0
    %834 = vmatpush1.msra.mxu0 0.0
    %835 = vmatprep.subr.mxu0 0.0
    %836 = vmatpush1.msra.mxu0 0.0
    %837 = vmatprep.subr.mxu0 0.0
    %838 = vmatpush1.msra.mxu0 0.0
    %839 = vmatprep.subr.mxu0 0.0
    %840 = vmatpush1.msra.mxu0 0.0
    %841 = vmatprep.subr.mxu0 0.0
    %842 = vmatpush1.msra.mxu0 0.0
    %843 = vmatprep.subr.mxu0 0.0
    %844 = vmatpush1.msra.mxu0 0.0
    %845 = vmatprep.subr.mxu0 0.0
    %846 = vmatpush1.msra.mxu0 0.0
    %847 = vmatprep.subr.mxu0 0.0
    %848 = vmatpush1.msra.mxu0 0.0
    %849 = vmatprep.subr.mxu0 0.0
    %850 = vmatpush1.msra.mxu0 0.0
    %851 = vmatprep.subr.mxu0 0.0
    %852 = vmatpush1.msra.mxu0 0.0
    %853 = vmatprep.subr.mxu0 0.0
    %854 = vmatpush1.msra.mxu0 0.0
    %855 = vmatprep.subr.mxu0 0.0
    %856 = vmatpush1.msra.mxu0 0.0
    %857 = vmatprep.subr.mxu0 0.0
    %858 = vmatpush1.msra.mxu0 0.0
    %859 = vmatprep.subr.mxu0 0.0
    %860 = vmatpush1.msra.mxu0 0.0
    %861 = vmatprep.subr.mxu0 0.0
    %862 = vmatpush1.msra.mxu0 0.0
    %863 = vmatprep.subr.mxu0 0.0
    %864 = vmatpush1.msra.mxu0 0.0
    %865 = vmatprep.subr.mxu0 0.0
    %866 = vmatpush1.msra.mxu0 0.0
    %867 = vmatprep.subr.mxu0 0.0
    %868 = vmatpush1.msra.mxu0 0.0
    %869 = vmatprep.subr.mxu0 0.0
    %870 = vmatpush1.msra.mxu0 0.0
    %871 = vmatprep.subr.mxu0 0.0
    %872 = vmatpush1.msra.mxu0 0.0
    %873 = vmatprep.subr.mxu0 0.0
    %874 = vmatpush1.msra.mxu0 0.0
    %875 = vmatprep.mubr.f32.mxu0 0.0
    %876 = vmatmul.mubr.f32.gmra.mrb[0].mxu0 %v809
    %v877 = vpop.f32.mrb[0].mxu0
    %v878 = vadd.f32 0.0, %v877
    %v879 = vpop.f32.mrb[0].mxu0
    %880 = vdwg.mxu0
    %881 = vrot.lane.b32.xlu0 %v206, 112
    %v882 = vpop.permute.xlu0 %881
    %883 = vrot.lane.b32.xlu0 %v206, 80
    %v884 = vpop.permute.xlu0 %883
    %v885 = vsel %vm225, %v882, 0
    %v887 = vsel %vm225, %v884, 0
    %889 = vmatprep.subr.mxu0 0.0
    %890 = vmatpush1.xpose.msra.mxu0 %v887
    %891 = vmatprep.subr.mxu0 0.0
    %892 = vmatpush1.xpose.msra.mxu0 0.0
    %893 = vmatprep.subr.mxu0 0.0
    %894 = vmatpush1.xpose.msra.mxu0 0.0
    %895 = vmatprep.subr.mxu0 0.0
    %896 = vmatpush1.xpose.msra.mxu0 0.0
    %897 = vmatprep.subr.mxu0 0.0
    %898 = vmatpush1.xpose.msra.mxu0 0.0
    %899 = vmatprep.subr.mxu0 0.0
    %900 = vmatpush1.xpose.msra.mxu0 0.0
    %901 = vmatprep.subr.mxu0 0.0
    %902 = vmatpush1.xpose.msra.mxu0 0.0
    %903 = vmatprep.subr.mxu0 0.0
    %904 = vmatpush1.xpose.msra.mxu0 0.0
    %905 = vmatprep.subr.mxu0 0.0
    %906 = vmatpush1.xpose.msra.mxu0 0.0
    %907 = vmatprep.subr.mxu0 0.0
    %908 = vmatpush1.xpose.msra.mxu0 0.0
    %909 = vmatprep.subr.mxu0 0.0
    %910 = vmatpush1.xpose.msra.mxu0 0.0
    %911 = vmatprep.subr.mxu0 0.0
    %912 = vmatpush1.xpose.msra.mxu0 0.0
    %913 = vmatprep.subr.mxu0 0.0
    %914 = vmatpush1.xpose.msra.mxu0 0.0
    %915 = vmatprep.subr.mxu0 0.0
    %916 = vmatpush1.xpose.msra.mxu0 0.0
    %917 = vmatprep.subr.mxu0 0.0
    %918 = vmatpush1.xpose.msra.mxu0 0.0
    %919 = vmatprep.subr.mxu0 0.0
    %920 = vmatpush1.xpose.msra.mxu0 0.0
    %921 = vmatprep.subr.mxu0 0.0
    %922 = vmatpush1.xpose.msra.mxu0 0.0
    %923 = vmatprep.subr.mxu0 0.0
    %924 = vmatpush1.xpose.msra.mxu0 0.0
    %925 = vmatprep.subr.mxu0 0.0
    %926 = vmatpush1.xpose.msra.mxu0 0.0
    %927 = vmatprep.subr.mxu0 0.0
    %928 = vmatpush1.xpose.msra.mxu0 0.0
    %929 = vmatprep.subr.mxu0 0.0
    %930 = vmatpush1.xpose.msra.mxu0 0.0
    %931 = vmatprep.subr.mxu0 0.0
    %932 = vmatpush1.xpose.msra.mxu0 0.0
    %933 = vmatprep.subr.mxu0 0.0
    %934 = vmatpush1.xpose.msra.mxu0 0.0
    %935 = vmatprep.subr.mxu0 0.0
    %936 = vmatpush1.xpose.msra.mxu0 0.0
    %937 = vmatprep.subr.mxu0 0.0
    %938 = vmatpush1.xpose.msra.mxu0 0.0
    %939 = vmatprep.subr.mxu0 0.0
    %940 = vmatpush1.xpose.msra.mxu0 0.0
    %941 = vmatprep.subr.mxu0 0.0
    %942 = vmatpush1.xpose.msra.mxu0 0.0
    %943 = vmatprep.subr.mxu0 0.0
    %944 = vmatpush1.xpose.msra.mxu0 0.0
    %945 = vmatprep.subr.mxu0 0.0
    %946 = vmatpush1.xpose.msra.mxu0 0.0
    %947 = vmatprep.subr.mxu0 0.0
    %948 = vmatpush1.xpose.msra.mxu0 0.0
    %949 = vmatprep.subr.mxu0 0.0
    %950 = vmatpush1.xpose.msra.mxu0 0.0
    %951 = vmatprep.subr.mxu0 0.0
    %952 = vmatpush1.xpose.msra.mxu0 0.0
    %953 = vmatprep.mubr.f32.mxu0 0.0
    %954 = vmatmul.mubr.f32.gmra.mrb[0].mxu0 %v885
    %v955 = vpop.f32.mrb[0].mxu0
    %v956 = vadd.f32 %v215, %v955
    %v957 = vpop.f32.mrb[0].mxu0
    %958 = vdwg.mxu0
    %959 = vrot.lane.b32.xlu0 %v209, 112
    %v960 = vpop.permute.xlu0 %959
    %961 = vrot.lane.b32.xlu0 %v209, 80
    %v962 = vpop.permute.xlu0 %961
    %v963 = vsel %vm225, %v960, 0
    %v965 = vsel %vm225, %v962, 0
    %967 = vmatprep.subr.mxu0 0.0
    %968 = vmatpush1.xpose.msra.mxu0 %v965
    %969 = vmatprep.subr.mxu0 0.0
    %970 = vmatpush1.xpose.msra.mxu0 0.0
    %971 = vmatprep.subr.mxu0 0.0
    %972 = vmatpush1.xpose.msra.mxu0 0.0
    %973 = vmatprep.subr.mxu0 0.0
    %974 = vmatpush1.xpose.msra.mxu0 0.0
    %975 = vmatprep.subr.mxu0 0.0
    %976 = vmatpush1.xpose.msra.mxu0 0.0
    %977 = vmatprep.subr.mxu0 0.0
    %978 = vmatpush1.xpose.msra.mxu0 0.0
    %979 = vmatprep.subr.mxu0 0.0
    %980 = vmatpush1.xpose.msra.mxu0 0.0
    %981 = vmatprep.subr.mxu0 0.0
    %982 = vmatpush1.xpose.msra.mxu0 0.0
    %983 = vmatprep.subr.mxu0 0.0
    %984 = vmatpush1.xpose.msra.mxu0 0.0
    %985 = vmatprep.subr.mxu0 0.0
    %986 = vmatpush1.xpose.msra.mxu0 0.0
    %987 = vmatprep.subr.mxu0 0.0
    %988 = vmatpush1.xpose.msra.mxu0 0.0
    %989 = vmatprep.subr.mxu0 0.0
    %990 = vmatpush1.xpose.msra.mxu0 0.0
    %991 = vmatprep.subr.mxu0 0.0
    %992 = vmatpush1.xpose.msra.mxu0 0.0
    %993 = vmatprep.subr.mxu0 0.0
    %994 = vmatpush1.xpose.msra.mxu0 0.0
    %995 = vmatprep.subr.mxu0 0.0
    %996 = vmatpush1.xpose.msra.mxu0 0.0
    %997 = vmatprep.subr.mxu0 0.0
    %998 = vmatpush1.xpose.msra.mxu0 0.0
    %999 = vmatprep.subr.mxu0 0.0
    %1000 = vmatpush1.xpose.msra.mxu0 0.0
    %1001 = vmatprep.subr.mxu0 0.0
    %1002 = vmatpush1.xpose.msra.mxu0 0.0
    %1003 = vmatprep.subr.mxu0 0.0
    %1004 = vmatpush1.xpose.msra.mxu0 0.0
    %1005 = vmatprep.subr.mxu0 0.0
    %1006 = vmatpush1.xpose.msra.mxu0 0.0
    %1007 = vmatprep.subr.mxu0 0.0
    %1008 = vmatpush1.xpose.msra.mxu0 0.0
    %1009 = vmatprep.subr.mxu0 0.0
    %1010 = vmatpush1.xpose.msra.mxu0 0.0
    %1011 = vmatprep.subr.mxu0 0.0
    %1012 = vmatpush1.xpose.msra.mxu0 0.0
    %1013 = vmatprep.subr.mxu0 0.0
    %1014 = vmatpush1.xpose.msra.mxu0 0.0
    %1015 = vmatprep.subr.mxu0 0.0
    %1016 = vmatpush1.xpose.msra.mxu0 0.0
    %1017 = vmatprep.subr.mxu0 0.0
    %1018 = vmatpush1.xpose.msra.mxu0 0.0
    %1019 = vmatprep.subr.mxu0 0.0
    %1020 = vmatpush1.xpose.msra.mxu0 0.0
    %1021 = vmatprep.subr.mxu0 0.0
    %1022 = vmatpush1.xpose.msra.mxu0 0.0
    %1023 = vmatprep.subr.mxu0 0.0
    %1024 = vmatpush1.xpose.msra.mxu0 0.0
    %1025 = vmatprep.subr.mxu0 0.0
    %1026 = vmatpush1.xpose.msra.mxu0 0.0
    %1027 = vmatprep.subr.mxu0 0.0
    %1028 = vmatpush1.xpose.msra.mxu0 0.0
    %1029 = vmatprep.subr.mxu0 0.0
    %1030 = vmatpush1.xpose.msra.mxu0 0.0
    %1031 = vmatprep.mubr.f32.mxu0 0.0
    %1032 = vmatmul.mubr.f32.gmra.mrb[0].mxu0 %v963
    %v1033 = vpop.f32.mrb[0].mxu0
    %v1034 = vadd.f32 %v219, %v1033
    %v1035 = vpop.f32.mrb[0].mxu0
    %1036 = vdwg.mxu0
    %v1037 = vsel %vm225, %v956, -inf
    %1038 = vmax.xlane.f32.xlu0 %v1037
    %v1039 = vpop.xlane.xlu0 %1038
    %v1040 = vsel %vm225, %v1034, -inf
    %1041 = vmax.xlane.f32.xlu0 %v1040
    %v1042 = vpop.xlane.xlu0 %1041
    %v1043 = vsub.f32 %v956, %v1039
    %v1044 = vsub.f32 %v1034, %v1042
    %v1045 = vmul.f32 %v1043, 1.442695
    %v1046 = vpow.pop %v1045
    %v1047 = vmul.f32 %v1044, 1.442695
    %v1048 = vpow.pop %v1047
    %v1049 = vsel %vm225, %v1046, 0.0
    %1050 = vadd.xlane.f32.xlu0 %v1049
    %v1051 = vpop.xlane.xlu0 %1050
    %v1052 = vsel %vm225, %v1048, 0.0
    %1053 = vadd.xlane.f32.xlu0 %v1052
    %v1054 = vpop.xlane.xlu0 %1053
    %v1055 = vrcp.pop %v1051
    %v1056 = vrcp.pop %v1054
    %v1057 = vmul.f32 %v1046, %v1055
    %v1058 = vmul.f32 %v1048, %v1056
    %1059 = vrot.lane.b32.xlu0 %v206, 48
    %v1060 = vpop.permute.xlu0 %1059
    %v1063 = vsel %vm225, %v1057, 0
    %1065 = vmatprep.subr.mxu0 0.0
    %1066 = vmatpush1.msra.mxu0 %v1060
    %1067 = vmatprep.subr.mxu0 0.0
    %1068 = vmatpush1.msra.mxu0 0.0
    %1069 = vmatprep.subr.mxu0 0.0
    %1070 = vmatpush1.msra.mxu0 0.0
    %1071 = vmatprep.subr.mxu0 0.0
    %1072 = vmatpush1.msra.mxu0 0.0
    %1073 = vmatprep.subr.mxu0 0.0
    %1074 = vmatpush1.msra.mxu0 0.0
    %1075 = vmatprep.subr.mxu0 0.0
    %1076 = vmatpush1.msra.mxu0 0.0
    %1077 = vmatprep.subr.mxu0 0.0
    %1078 = vmatpush1.msra.mxu0 0.0
    %1079 = vmatprep.subr.mxu0 0.0
    %1080 = vmatpush1.msra.mxu0 0.0
    %1081 = vmatprep.subr.mxu0 0.0
    %1082 = vmatpush1.msra.mxu0 0.0
    %1083 = vmatprep.subr.mxu0 0.0
    %1084 = vmatpush1.msra.mxu0 0.0
    %1085 = vmatprep.subr.mxu0 0.0
    %1086 = vmatpush1.msra.mxu0 0.0
    %1087 = vmatprep.subr.mxu0 0.0
    %1088 = vmatpush1.msra.mxu0 0.0
    %1089 = vmatprep.subr.mxu0 0.0
    %1090 = vmatpush1.msra.mxu0 0.0
    %1091 = vmatprep.subr.mxu0 0.0
    %1092 = vmatpush1.msra.mxu0 0.0
    %1093 = vmatprep.subr.mxu0 0.0
    %1094 = vmatpush1.msra.mxu0 0.0
    %1095 = vmatprep.subr.mxu0 0.0
    %1096 = vmatpush1.msra.mxu0 0.0
    %1097 = vmatprep.subr.mxu0 0.0
    %1098 = vmatpush1.msra.mxu0 0.0
    %1099 = vmatprep.subr.mxu0 0.0
    %1100 = vmatpush1.msra.mxu0 0.0
    %1101 = vmatprep.subr.mxu0 0.0
    %1102 = vmatpush1.msra.mxu0 0.0
    %1103 = vmatprep.subr.mxu0 0.0
    %1104 = vmatpush1.msra.mxu0 0.0
    %1105 = vmatprep.subr.mxu0 0.0
    %1106 = vmatpush1.msra.mxu0 0.0
    %1107 = vmatprep.subr.mxu0 0.0
    %1108 = vmatpush1.msra.mxu0 0.0
    %1109 = vmatprep.subr.mxu0 0.0
    %1110 = vmatpush1.msra.mxu0 0.0
    %1111 = vmatprep.subr.mxu0 0.0
    %1112 = vmatpush1.msra.mxu0 0.0
    %1113 = vmatprep.subr.mxu0 0.0
    %1114 = vmatpush1.msra.mxu0 0.0
    %1115 = vmatprep.subr.mxu0 0.0
    %1116 = vmatpush1.msra.mxu0 0.0
    %1117 = vmatprep.subr.mxu0 0.0
    %1118 = vmatpush1.msra.mxu0 0.0
    %1119 = vmatprep.subr.mxu0 0.0
    %1120 = vmatpush1.msra.mxu0 0.0
    %1121 = vmatprep.subr.mxu0 0.0
    %1122 = vmatpush1.msra.mxu0 0.0
    %1123 = vmatprep.subr.mxu0 0.0
    %1124 = vmatpush1.msra.mxu0 0.0
    %1125 = vmatprep.subr.mxu0 0.0
    %1126 = vmatpush1.msra.mxu0 0.0
    %1127 = vmatprep.subr.mxu0 0.0
    %1128 = vmatpush1.msra.mxu0 0.0
    %1129 = vmatprep.mubr.f32.mxu0 0.0
    %1130 = vmatmul.mubr.f32.gmra.mrb[0].mxu0 %v1063
    %v1131 = vpop.f32.mrb[0].mxu0
    %v1132 = vadd.f32 0.0, %v1131
    %v1133 = vpop.f32.mrb[0].mxu0
    %1134 = vdwg.mxu0
    %1135 = vrot.lane.b32.xlu0 %v209, 48
    %v1136 = vpop.permute.xlu0 %1135
    %v1139 = vsel %vm225, %v1058, 0
    %1141 = vmatprep.subr.mxu0 0.0
    %1142 = vmatpush1.msra.mxu0 %v1136
    %1143 = vmatprep.subr.mxu0 0.0
    %1144 = vmatpush1.msra.mxu0 0.0
    %1145 = vmatprep.subr.mxu0 0.0
    %1146 = vmatpush1.msra.mxu0 0.0
    %1147 = vmatprep.subr.mxu0 0.0
    %1148 = vmatpush1.msra.mxu0 0.0
    %1149 = vmatprep.subr.mxu0 0.0
    %1150 = vmatpush1.msra.mxu0 0.0
    %1151 = vmatprep.subr.mxu0 0.0
    %1152 = vmatpush1.msra.mxu0 0.0
    %1153 = vmatprep.subr.mxu0 0.0
    %1154 = vmatpush1.msra.mxu0 0.0
    %1155 = vmatprep.subr.mxu0 0.0
    %1156 = vmatpush1.msra.mxu0 0.0
    %1157 = vmatprep.subr.mxu0 0.0
    %1158 = vmatpush1.msra.mxu0 0.0
    %1159 = vmatprep.subr.mxu0 0.0
    %1160 = vmatpush1.msra.mxu0 0.0
    %1161 = vmatprep.subr.mxu0 0.0
    %1162 = vmatpush1.msra.mxu0 0.0
    %1163 = vmatprep.subr.mxu0 0.0
    %1164 = vmatpush1.msra.mxu0 0.0
    %1165 = vmatprep.subr.mxu0 0.0
    %1166 = vmatpush1.msra.mxu0 0.0
    %1167 = vmatprep.subr.mxu0 0.0
    %1168 = vmatpush1.msra.mxu0 0.0
    %1169 = vmatprep.subr.mxu0 0.0
    %1170 = vmatpush1.msra.mxu0 0.0
    %1171 = vmatprep.subr.mxu0 0.0
    %1172 = vmatpush1.msra.mxu0 0.0
    %1173 = vmatprep.subr.mxu0 0.0
    %1174 = vmatpush1.msra.mxu0 0.0
    %1175 = vmatprep.subr.mxu0 0.0
    %1176 = vmatpush1.msra.mxu0 0.0
    %1177 = vmatprep.subr.mxu0 0.0
    %1178 = vmatpush1.msra.mxu0 0.0
    %1179 = vmatprep.subr.mxu0 0.0
    %1180 = vmatpush1.msra.mxu0 0.0
    %1181 = vmatprep.subr.mxu0 0.0
    %1182 = vmatpush1.msra.mxu0 0.0
    %1183 = vmatprep.subr.mxu0 0.0
    %1184 = vmatpush1.msra.mxu0 0.0
    %1185 = vmatprep.subr.mxu0 0.0
    %1186 = vmatpush1.msra.mxu0 0.0
    %1187 = vmatprep.subr.mxu0 0.0
    %1188 = vmatpush1.msra.mxu0 0.0
    %1189 = vmatprep.subr.mxu0 0.0
    %1190 = vmatpush1.msra.mxu0 0.0
    %1191 = vmatprep.subr.mxu0 0.0
    %1192 = vmatpush1.msra.mxu0 0.0
    %1193 = vmatprep.subr.mxu0 0.0
    %1194 = vmatpush1.msra.mxu0 0.0
    %1195 = vmatprep.subr.mxu0 0.0
    %1196 = vmatpush1.msra.mxu0 0.0
    %1197 = vmatprep.subr.mxu0 0.0
    %1198 = vmatpush1.msra.mxu0 0.0
    %1199 = vmatprep.subr.mxu0 0.0
    %1200 = vmatpush1.msra.mxu0 0.0
    %1201 = vmatprep.subr.mxu0 0.0
    %1202 = vmatpush1.msra.mxu0 0.0
    %1203 = vmatprep.subr.mxu0 0.0
    %1204 = vmatpush1.msra.mxu0 0.0
    %1205 = vmatprep.mubr.f32.mxu0 0.0
    %1206 = vmatmul.mubr.f32.gmra.mrb[0].mxu0 %v1139
    %v1207 = vpop.f32.mrb[0].mxu0
    %v1208 = vadd.f32 0.0, %v1207
    %v1209 = vpop.f32.mrb[0].mxu0
    %1210 = vdwg.mxu0
    %1211 = vrot.lane.b32.xlu0 %v206, 104
    %v1212 = vpop.permute.xlu0 %1211
    %1213 = vrot.lane.b32.xlu0 %v206, 72
    %v1214 = vpop.permute.xlu0 %1213
    %v1215 = vsel %vm225, %v1212, 0
    %v1217 = vsel %vm225, %v1214, 0
    %1219 = vmatprep.subr.mxu0 0.0
    %1220 = vmatpush1.xpose.msra.mxu0 %v1217
    %1221 = vmatprep.subr.mxu0 0.0
    %1222 = vmatpush1.xpose.msra.mxu0 0.0
    %1223 = vmatprep.subr.mxu0 0.0
    %1224 = vmatpush1.xpose.msra.mxu0 0.0
    %1225 = vmatprep.subr.mxu0 0.0
    %1226 = vmatpush1.xpose.msra.mxu0 0.0
    %1227 = vmatprep.subr.mxu0 0.0
    %1228 = vmatpush1.xpose.msra.mxu0 0.0
    %1229 = vmatprep.subr.mxu0 0.0
    %1230 = vmatpush1.xpose.msra.mxu0 0.0
    %1231 = vmatprep.subr.mxu0 0.0
    %1232 = vmatpush1.xpose.msra.mxu0 0.0
    %1233 = vmatprep.subr.mxu0 0.0
    %1234 = vmatpush1.xpose.msra.mxu0 0.0
    %1235 = vmatprep.subr.mxu0 0.0
    %1236 = vmatpush1.xpose.msra.mxu0 0.0
    %1237 = vmatprep.subr.mxu0 0.0
    %1238 = vmatpush1.xpose.msra.mxu0 0.0
    %1239 = vmatprep.subr.mxu0 0.0
    %1240 = vmatpush1.xpose.msra.mxu0 0.0
    %1241 = vmatprep.subr.mxu0 0.0
    %1242 = vmatpush1.xpose.msra.mxu0 0.0
    %1243 = vmatprep.subr.mxu0 0.0
    %1244 = vmatpush1.xpose.msra.mxu0 0.0
    %1245 = vmatprep.subr.mxu0 0.0
    %1246 = vmatpush1.xpose.msra.mxu0 0.0
    %1247 = vmatprep.subr.mxu0 0.0
    %1248 = vmatpush1.xpose.msra.mxu0 0.0
    %1249 = vmatprep.subr.mxu0 0.0
    %1250 = vmatpush1.xpose.msra.mxu0 0.0
    %1251 = vmatprep.subr.mxu0 0.0
    %1252 = vmatpush1.xpose.msra.mxu0 0.0
    %1253 = vmatprep.subr.mxu0 0.0
    %1254 = vmatpush1.xpose.msra.mxu0 0.0
    %1255 = vmatprep.subr.mxu0 0.0
    %1256 = vmatpush1.xpose.msra.mxu0 0.0
    %1257 = vmatprep.subr.mxu0 0.0
    %1258 = vmatpush1.xpose.msra.mxu0 0.0
    %1259 = vmatprep.subr.mxu0 0.0
    %1260 = vmatpush1.xpose.msra.mxu0 0.0
    %1261 = vmatprep.subr.mxu0 0.0
    %1262 = vmatpush1.xpose.msra.mxu0 0.0
    %1263 = vmatprep.subr.mxu0 0.0
    %1264 = vmatpush1.xpose.msra.mxu0 0.0
    %1265 = vmatprep.subr.mxu0 0.0
    %1266 = vmatpush1.xpose.msra.mxu0 0.0
    %1267 = vmatprep.subr.mxu0 0.0
    %1268 = vmatpush1.xpose.msra.mxu0 0.0
    %1269 = vmatprep.subr.mxu0 0.0
    %1270 = vmatpush1.xpose.msra.mxu0 0.0
    %1271 = vmatprep.subr.mxu0 0.0
    %1272 = vmatpush1.xpose.msra.mxu0 0.0
    %1273 = vmatprep.subr.mxu0 0.0
    %1274 = vmatpush1.xpose.msra.mxu0 0.0
    %1275 = vmatprep.subr.mxu0 0.0
    %1276 = vmatpush1.xpose.msra.mxu0 0.0
    %1277 = vmatprep.subr.mxu0 0.0
    %1278 = vmatpush1.xpose.msra.mxu0 0.0
    %1279 = vmatprep.subr.mxu0 0.0
    %1280 = vmatpush1.xpose.msra.mxu0 0.0
    %1281 = vmatprep.subr.mxu0 0.0
    %1282 = vmatpush1.xpose.msra.mxu0 0.0
    %1283 = vmatprep.mubr.f32.mxu0 0.0
    %1284 = vmatmul.mubr.f32.gmra.mrb[0].mxu0 %v1215
    %v1285 = vpop.f32.mrb[0].mxu0
    %v1286 = vadd.f32 %v215, %v1285
    %v1287 = vpop.f32.mrb[0].mxu0
    %1288 = vdwg.mxu0
    %1289 = vrot.lane.b32.xlu0 %v209, 104
    %v1290 = vpop.permute.xlu0 %1289
    %1291 = vrot.lane.b32.xlu0 %v209, 72
    %v1292 = vpop.permute.xlu0 %1291
    %v1293 = vsel %vm225, %v1290, 0
    %v1295 = vsel %vm225, %v1292, 0
    %1297 = vmatprep.subr.mxu0 0.0
    %1298 = vmatpush1.xpose.msra.mxu0 %v1295
    %1299 = vmatprep.subr.mxu0 0.0
    %1300 = vmatpush1.xpose.msra.mxu0 0.0
    %1301 = vmatprep.subr.mxu0 0.0
    %1302 = vmatpush1.xpose.msra.mxu0 0.0
    %1303 = vmatprep.subr.mxu0 0.0
    %1304 = vmatpush1.xpose.msra.mxu0 0.0
    %1305 = vmatprep.subr.mxu0 0.0
    %1306 = vmatpush1.xpose.msra.mxu0 0.0
    %1307 = vmatprep.subr.mxu0 0.0
    %1308 = vmatpush1.xpose.msra.mxu0 0.0
    %1309 = vmatprep.subr.mxu0 0.0
    %1310 = vmatpush1.xpose.msra.mxu0 0.0
    %1311 = vmatprep.subr.mxu0 0.0
    %1312 = vmatpush1.xpose.msra.mxu0 0.0
    %1313 = vmatprep.subr.mxu0 0.0
    %1314 = vmatpush1.xpose.msra.mxu0 0.0
    %1315 = vmatprep.subr.mxu0 0.0
    %1316 = vmatpush1.xpose.msra.mxu0 0.0
    %1317 = vmatprep.subr.mxu0 0.0
    %1318 = vmatpush1.xpose.msra.mxu0 0.0
    %1319 = vmatprep.subr.mxu0 0.0
    %1320 = vmatpush1.xpose.msra.mxu0 0.0
    %1321 = vmatprep.subr.mxu0 0.0
    %1322 = vmatpush1.xpose.msra.mxu0 0.0
    %1323 = vmatprep.subr.mxu0 0.0
    %1324 = vmatpush1.xpose.msra.mxu0 0.0
    %1325 = vmatprep.subr.mxu0 0.0
    %1326 = vmatpush1.xpose.msra.mxu0 0.0
    %1327 = vmatprep.subr.mxu0 0.0
    %1328 = vmatpush1.xpose.msra.mxu0 0.0
    %1329 = vmatprep.subr.mxu0 0.0
    %1330 = vmatpush1.xpose.msra.mxu0 0.0
    %1331 = vmatprep.subr.mxu0 0.0
    %1332 = vmatpush1.xpose.msra.mxu0 0.0
    %1333 = vmatprep.subr.mxu0 0.0
    %1334 = vmatpush1.xpose.msra.mxu0 0.0
    %1335 = vmatprep.subr.mxu0 0.0
    %1336 = vmatpush1.xpose.msra.mxu0 0.0
    %1337 = vmatprep.subr.mxu0 0.0
    %1338 = vmatpush1.xpose.msra.mxu0 0.0
    %1339 = vmatprep.subr.mxu0 0.0
    %1340 = vmatpush1.xpose.msra.mxu0 0.0
    %1341 = vmatprep.subr.mxu0 0.0
    %1342 = vmatpush1.xpose.msra.mxu0 0.0
    %1343 = vmatprep.subr.mxu0 0.0
    %1344 = vmatpush1.xpose.msra.mxu0 0.0
    %1345 = vmatprep.subr.mxu0 0.0
    %1346 = vmatpush1.xpose.msra.mxu0 0.0
    %1347 = vmatprep.subr.mxu0 0.0
    %1348 = vmatpush1.xpose.msra.mxu0 0.0
    %1349 = vmatprep.subr.mxu0 0.0
    %1350 = vmatpush1.xpose.msra.mxu0 0.0
    %1351 = vmatprep.subr.mxu0 0.0
    %1352 = vmatpush1.xpose.msra.mxu0 0.0
    %1353 = vmatprep.subr.mxu0 0.0
    %1354 = vmatpush1.xpose.msra.mxu0 0.0
    %1355 = vmatprep.subr.mxu0 0.0
    %1356 = vmatpush1.xpose.msra.mxu0 0.0
    %1357 = vmatprep.subr.mxu0 0.0
    %1358 = vmatpush1.xpose.msra.mxu0 0.0
    %1359 = vmatprep.subr.mxu0 0.0
    %1360 = vmatpush1.xpose.msra.mxu0 0.0
    %1361 = vmatprep.mubr.f32.mxu0 0.0
    %1362 = vmatmul.mubr.f32.gmra.mrb[0].mxu0 %v1293
    %v1363 = vpop.f32.mrb[0].mxu0
    %v1364 = vadd.f32 %v219, %v1363
    %v1365 = vpop.f32.mrb[0].mxu0
    %1366 = vdwg.mxu0
    %v1367 = vsel %vm225, %v1286, -inf
    %1368 = vmax.xlane.f32.xlu0 %v1367
    %v1369 = vpop.xlane.xlu0 %1368
    %v1370 = vsel %vm225, %v1364, -inf
    %1371 = vmax.xlane.f32.xlu0 %v1370
    %v1372 = vpop.xlane.xlu0 %1371
    %v1373 = vsub.f32 %v1286, %v1369
    %v1374 = vsub.f32 %v1364, %v1372
    %v1375 = vmul.f32 %v1373, 1.442695
    %v1376 = vpow.pop %v1375
    %v1377 = vmul.f32 %v1374, 1.442695
    %v1378 = vpow.pop %v1377
    %v1379 = vsel %vm225, %v1376, 0.0
    %1380 = vadd.xlane.f32.xlu0 %v1379
    %v1381 = vpop.xlane.xlu0 %1380
    %v1382 = vsel %vm225, %v1378, 0.0
    %1383 = vadd.xlane.f32.xlu0 %v1382
    %v1384 = vpop.xlane.xlu0 %1383
    %v1385 = vrcp.pop %v1381
    %v1386 = vrcp.pop %v1384
    %v1387 = vmul.f32 %v1376, %v1385
    %v1388 = vmul.f32 %v1378, %v1386
    %1389 = vrot.lane.b32.xlu0 %v206, 40
    %v1390 = vpop.permute.xlu0 %1389
    %v1393 = vsel %vm225, %v1387, 0
    %1395 = vmatprep.subr.mxu0 0.0
    %1396 = vmatpush1.msra.mxu0 %v1390
    %1397 = vmatprep.subr.mxu0 0.0
    %1398 = vmatpush1.msra.mxu0 0.0
    %1399 = vmatprep.subr.mxu0 0.0
    %1400 = vmatpush1.msra.mxu0 0.0
    %1401 = vmatprep.subr.mxu0 0.0
    %1402 = vmatpush1.msra.mxu0 0.0
    %1403 = vmatprep.subr.mxu0 0.0
    %1404 = vmatpush1.msra.mxu0 0.0
    %1405 = vmatprep.subr.mxu0 0.0
    %1406 = vmatpush1.msra.mxu0 0.0
    %1407 = vmatprep.subr.mxu0 0.0
    %1408 = vmatpush1.msra.mxu0 0.0
    %1409 = vmatprep.subr.mxu0 0.0
    %1410 = vmatpush1.msra.mxu0 0.0
    %1411 = vmatprep.subr.mxu0 0.0
    %1412 = vmatpush1.msra.mxu0 0.0
    %1413 = vmatprep.subr.mxu0 0.0
    %1414 = vmatpush1.msra.mxu0 0.0
    %1415 = vmatprep.subr.mxu0 0.0
    %1416 = vmatpush1.msra.mxu0 0.0
    %1417 = vmatprep.subr.mxu0 0.0
    %1418 = vmatpush1.msra.mxu0 0.0
    %1419 = vmatprep.subr.mxu0 0.0
    %1420 = vmatpush1.msra.mxu0 0.0
    %1421 = vmatprep.subr.mxu0 0.0
    %1422 = vmatpush1.msra.mxu0 0.0
    %1423 = vmatprep.subr.mxu0 0.0
    %1424 = vmatpush1.msra.mxu0 0.0
    %1425 = vmatprep.subr.mxu0 0.0
    %1426 = vmatpush1.msra.mxu0 0.0
    %1427 = vmatprep.subr.mxu0 0.0
    %1428 = vmatpush1.msra.mxu0 0.0
    %1429 = vmatprep.subr.mxu0 0.0
    %1430 = vmatpush1.msra.mxu0 0.0
    %1431 = vmatprep.subr.mxu0 0.0
    %1432 = vmatpush1.msra.mxu0 0.0
    %1433 = vmatprep.subr.mxu0 0.0
    %1434 = vmatpush1.msra.mxu0 0.0
    %1435 = vmatprep.subr.mxu0 0.0
    %1436 = vmatpush1.msra.mxu0 0.0
    %1437 = vmatprep.subr.mxu0 0.0
    %1438 = vmatpush1.msra.mxu0 0.0
    %1439 = vmatprep.subr.mxu0 0.0
    %1440 = vmatpush1.msra.mxu0 0.0
    %1441 = vmatprep.subr.mxu0 0.0
    %1442 = vmatpush1.msra.mxu0 0.0
    %1443 = vmatprep.subr.mxu0 0.0
    %1444 = vmatpush1.msra.mxu0 0.0
    %1445 = vmatprep.subr.mxu0 0.0
    %1446 = vmatpush1.msra.mxu0 0.0
    %1447 = vmatprep.subr.mxu0 0.0
    %1448 = vmatpush1.msra.mxu0 0.0
    %1449 = vmatprep.subr.mxu0 0.0
    %1450 = vmatpush1.msra.mxu0 0.0
    %1451 = vmatprep.subr.mxu0 0.0
    %1452 = vmatpush1.msra.mxu0 0.0
    %1453 = vmatprep.subr.mxu0 0.0
    %1454 = vmatpush1.msra.mxu0 0.0
    %1455 = vmatprep.subr.mxu0 0.0
    %1456 = vmatpush1.msra.mxu0 0.0
    %1457 = vmatprep.subr.mxu0 0.0
    %1458 = vmatpush1.msra.mxu0 0.0
    %1459 = vmatprep.mubr.f32.mxu0 0.0
    %1460 = vmatmul.mubr.f32.gmra.mrb[0].mxu0 %v1393
    %v1461 = vpop.f32.mrb[0].mxu0
    %v1462 = vadd.f32 0.0, %v1461
    %v1463 = vpop.f32.mrb[0].mxu0
    %1464 = vdwg.mxu0
    %1465 = vrot.lane.b32.xlu0 %v209, 40
    %v1466 = vpop.permute.xlu0 %1465
    %v1469 = vsel %vm225, %v1388, 0
    %1471 = vmatprep.subr.mxu0 0.0
    %1472 = vmatpush1.msra.mxu0 %v1466
    %1473 = vmatprep.subr.mxu0 0.0
    %1474 = vmatpush1.msra.mxu0 0.0
    %1475 = vmatprep.subr.mxu0 0.0
    %1476 = vmatpush1.msra.mxu0 0.0
    %1477 = vmatprep.subr.mxu0 0.0
    %1478 = vmatpush1.msra.mxu0 0.0
    %1479 = vmatprep.subr.mxu0 0.0
    %1480 = vmatpush1.msra.mxu0 0.0
    %1481 = vmatprep.subr.mxu0 0.0
    %1482 = vmatpush1.msra.mxu0 0.0
    %1483 = vmatprep.subr.mxu0 0.0
    %1484 = vmatpush1.msra.mxu0 0.0
    %1485 = vmatprep.subr.mxu0 0.0
    %1486 = vmatpush1.msra.mxu0 0.0
    %1487 = vmatprep.subr.mxu0 0.0
    %1488 = vmatpush1.msra.mxu0 0.0
    %1489 = vmatprep.subr.mxu0 0.0
    %1490 = vmatpush1.msra.mxu0 0.0
    %1491 = vmatprep.subr.mxu0 0.0
    %1492 = vmatpush1.msra.mxu0 0.0
    %1493 = vmatprep.subr.mxu0 0.0
    %1494 = vmatpush1.msra.mxu0 0.0
    %1495 = vmatprep.subr.mxu0 0.0
    %1496 = vmatpush1.msra.mxu0 0.0
    %1497 = vmatprep.subr.mxu0 0.0
    %1498 = vmatpush1.msra.mxu0 0.0
    %1499 = vmatprep.subr.mxu0 0.0
    %1500 = vmatpush1.msra.mxu0 0.0
    %1501 = vmatprep.subr.mxu0 0.0
    %1502 = vmatpush1.msra.mxu0 0.0
    %1503 = vmatprep.subr.mxu0 0.0
    %1504 = vmatpush1.msra.mxu0 0.0
    %1505 = vmatprep.subr.mxu0 0.0
    %1506 = vmatpush1.msra.mxu0 0.0
    %1507 = vmatprep.subr.mxu0 0.0
    %1508 = vmatpush1.msra.mxu0 0.0
    %1509 = vmatprep.subr.mxu0 0.0
    %1510 = vmatpush1.msra.mxu0 0.0
    %1511 = vmatprep.subr.mxu0 0.0
    %1512 = vmatpush1.msra.mxu0 0.0
    %1513 = vmatprep.subr.mxu0 0.0
    %1514 = vmatpush1.msra.mxu0 0.0
    %1515 = vmatprep.subr.mxu0 0.0
    %1516 = vmatpush1.msra.mxu0 0.0
    %1517 = vmatprep.subr.mxu0 0.0
    %1518 = vmatpush1.msra.mxu0 0.0
    %1519 = vmatprep.subr.mxu0 0.0
    %1520 = vmatpush1.msra.mxu0 0.0
    %1521 = vmatprep.subr.mxu0 0.0
    %1522 = vmatpush1.msra.mxu0 0.0
    %1523 = vmatprep.subr.mxu0 0.0
    %1524 = vmatpush1.msra.mxu0 0.0
    %1525 = vmatprep.subr.mxu0 0.0
    %1526 = vmatpush1.msra.mxu0 0.0
    %1527 = vmatprep.subr.mxu0 0.0
    %1528 = vmatpush1.msra.mxu0 0.0
    %1529 = vmatprep.subr.mxu0 0.0
    %1530 = vmatpush1.msra.mxu0 0.0
    %1531 = vmatprep.subr.mxu0 0.0
    %1532 = vmatpush1.msra.mxu0 0.0
    %1533 = vmatprep.subr.mxu0 0.0
    %1534 = vmatpush1.msra.mxu0 0.0
    %1535 = vmatprep.mubr.f32.mxu0 0.0
    %1536 = vmatmul.mubr.f32.gmra.mrb[0].mxu0 %v1469
    %v1537 = vpop.f32.mrb[0].mxu0
    %v1538 = vadd.f32 0.0, %v1537
    %v1539 = vpop.f32.mrb[0].mxu0
    %1540 = vdwg.mxu0
    %1543 = vrot.lane.b32.xlu0 %v802, 8
    %v1544 = vpop.permute.xlu0 %1543
    %1545 = vrot.lane.b32.xlu0 %v878, 8
    %v1546 = vpop.permute.xlu0 %1545
    %1551 = vrot.lane.b32.xlu0 %v1132, 16
    %v1552 = vpop.permute.xlu0 %1551
    %1553 = vrot.lane.b32.xlu0 %v1208, 16
    %v1554 = vpop.permute.xlu0 %1553
    %1559 = vrot.lane.b32.xlu0 %v1462, 24
    %v1560 = vpop.permute.xlu0 %1559
    %1561 = vrot.lane.b32.xlu0 %v1538, 24
    %v1562 = vpop.permute.xlu0 %1561
    %v1565 = vsel %vm225, %v472, %v1544
    %v1566 = vsel %vm225, %v548, %v1546
    %vm1567 = vcmask 130048
    %v1568 = vsel %vm1567, %v1565, %v1552
    %v1569 = vsel %vm1567, %v1566, %v1554
    %vm1570 = vcmask 195584
    %v1571 = vsel %vm1570, %v1568, %v1560
    %v1572 = vsel %vm1570, %v1569, %v1562
    %v1573 = vpack.c.bf16 %v1572, %v1571
    %v1574 = vld [vmem:[%s6] sm:$0xf]
    %v1575 = vld [vmem:[%s6 + $0x4] sm:$0xf]
    %v1576 = vld [vmem:[%s6 + $0x8] sm:$0xf]
    %v1577 = vld [vmem:[%s6 + $0xc] sm:$0xf]
    %v1578 = vld [vmem:[%s7] sm:$0x1]
    %v1580 = vlaneseq
    %v1581 = vshrl.u32 %v1580, 7
    %v1582 = vsub.s32 0, %v1581
    %v1583 = vrot.slane %v1578, %v1582
    %v1589 = vunpack.c.l.b16 %v1574
    %v1590 = vunpack.c.l.b16 %v1575
    %v1591 = vunpack.c.l.b16 %v1576
    %v1592 = vunpack.c.l.b16 %v1577
    %v1593 = vpack.c.b16 %v1590, %v1589
    %v1594 = vpack.c.b16 %v1592, %v1591
    %v1598 = vsel %vm76, %v1573, 0
    %1600 = vmatprep.subr.bf16.mxu0 0
    %1601 = vmatpush1.bf16.msra.mxu0 %v1593
    %1602 = vmatprep.subr.bf16.mxu0 0
    %1603 = vmatpush1.bf16.msra.mxu0 %v1594
    %1604 = vmatprep.subr.bf16.mxu0 0
    %1605 = vmatpush1.bf16.msra.mxu0 0
    %1606 = vmatprep.subr.bf16.mxu0 0
    %1607 = vmatpush1.bf16.msra.mxu0 0
    %1608 = vmatprep.subr.bf16.mxu0 0
    %1609 = vmatpush1.bf16.msra.mxu0 0
    %1610 = vmatprep.subr.bf16.mxu0 0
    %1611 = vmatpush1.bf16.msra.mxu0 0
    %1612 = vmatprep.subr.bf16.mxu0 0
    %1613 = vmatpush1.bf16.msra.mxu0 0
    %1614 = vmatprep.subr.bf16.mxu0 0
    %1615 = vmatpush1.bf16.msra.mxu0 0
    %1616 = vmatprep.subr.bf16.mxu0 0
    %1617 = vmatpush1.bf16.msra.mxu0 0
    %1618 = vmatprep.subr.bf16.mxu0 0
    %1619 = vmatpush1.bf16.msra.mxu0 0
    %1620 = vmatprep.subr.bf16.mxu0 0
    %1621 = vmatpush1.bf16.msra.mxu0 0
    %1622 = vmatprep.subr.bf16.mxu0 0
    %1623 = vmatpush1.bf16.msra.mxu0 0
    %1624 = vmatprep.subr.bf16.mxu0 0
    %1625 = vmatpush1.bf16.msra.mxu0 0
    %1626 = vmatprep.subr.bf16.mxu0 0
    %1627 = vmatpush1.bf16.msra.mxu0 0
    %1628 = vmatprep.subr.bf16.mxu0 0
    %1629 = vmatpush1.bf16.msra.mxu0 0
    %1630 = vmatprep.subr.bf16.mxu0 0
    %1631 = vmatpush1.bf16.msra.mxu0 0
    %1632 = vmatprep.mubr.bf16.mxu0 0
    %1633 = vmatmul.mubr.bf16.gmra.mrb[0].mxu0 %v1598
    %v1634 = vpop.f32.mrb[0].mxu0
    %v1635 = vadd.f32 %v1583, %v1634
    %v1636 = vpop.f32.mrb[0].mxu0
    %v1637 = vpop.f32.mrb[0].mxu0
    %v1638 = vadd.f32 %v1583, %v1637
    %v1639 = vpop.f32.mrb[0].mxu0
    %1640 = vdwg.mxu0
    %v1641 = vadd.f32 %v1635, %v118
    %v1642 = vadd.f32 %v1638, %v119
    %v1643 = vld [vmem:[%s8] sm:$0x1]
    %v1644 = vld [vmem:[%s9] sm:$0x1]
    %v1645 = vsel %vm76, %v1641, 0.0
    %1646 = vadd.xlane.f32.xlu0 %v1645
    %v1647 = vpop.xlane.xlu0 %1646
    %v1648 = vsel %vm76, %v1642, 0.0
    %1649 = vadd.xlane.f32.xlu0 %v1648
    %v1650 = vpop.xlane.xlu0 %1649
    %v1651 = vmul.f32 %v1647, %v83
    %v1652 = vmul.f32 %v1650, %v83
    %v1653 = vsub.f32 %v1641, %v1651
    %v1654 = vsub.f32 %v1642, %v1652
    %v1655 = vmul.f32 %v1653, %v1653
    %v1656 = vmul.f32 %v1654, %v1654
    %v1657 = vsel %vm76, %v1655, 0.0
    %1658 = vadd.xlane.f32.xlu0 %v1657
    %v1659 = vpop.xlane.xlu0 %1658
    %v1660 = vsel %vm76, %v1656, 0.0
    %1661 = vadd.xlane.f32.xlu0 %v1660
    %v1662 = vpop.xlane.xlu0 %1661
    %v1663 = vmul.f32 %v1659, %v83
    %v1664 = vmul.f32 %v1662, %v83
    %v1665 = vadd.f32 %v1663, 1e-12
    %v1666 = vadd.f32 %v1664, 1e-12
    %v1667 = vrsqrt.pop %v1665
    %v1668 = vrsqrt.pop %v1666
    %v1669 = vmul.f32 %v1653, %v1667
    %v1670 = vmul.f32 %v1654, %v1668
    %v1672 = vlaneseq
    %v1673 = vshrl.u32 %v1672, 7
    %v1674 = vsub.s32 0, %v1673
    %v1675 = vrot.slane %v1643, %v1674
    %v1677 = vmul.f32 %v1669, %v1675
    %v1678 = vmul.f32 %v1670, %v1675
    %v1680 = vlaneseq
    %v1681 = vshrl.u32 %v1680, 7
    %v1682 = vsub.s32 0, %v1681
    %v1683 = vrot.slane %v1644, %v1682
    %v1685 = vadd.f32 %v1677, %v1683
    %v1686 = vadd.f32 %v1678, %v1683
    %v1687 = vpack.c.bf16 %v1686, %v1685
    %v1688 = vld [vmem:[%s10] sm:$0xf]
    %v1689 = vld [vmem:[%s10 + $0x4] sm:$0xf]
    %v1690 = vld [vmem:[%s10 + $0x8] sm:$0xf]
    %v1691 = vld [vmem:[%s10 + $0xc] sm:$0xf]
    %v1692 = vld [vmem:[%s11] sm:$0x1]
    %v1694 = vlaneseq
    %v1695 = vshrl.u32 %v1694, 7
    %v1696 = vsub.s32 0, %v1695
    %v1697 = vrot.slane %v1692, %v1696
    %v1703 = vunpack.c.l.b16 %v1688
    %v1704 = vunpack.c.l.b16 %v1689
    %v1705 = vunpack.c.l.b16 %v1690
    %v1706 = vunpack.c.l.b16 %v1691
    %v1707 = vpack.c.b16 %v1704, %v1703
    %v1708 = vpack.c.b16 %v1706, %v1705
    %v1712 = vsel %vm76, %v1687, 0
    %1714 = vmatprep.subr.bf16.mxu0 0
    %1715 = vmatpush1.bf16.msra.mxu0 %v1707
    %1716 = vmatprep.subr.bf16.mxu0 0
    %1717 = vmatpush1.bf16.msra.mxu0 %v1708
    %1718 = vmatprep.subr.bf16.mxu0 0
    %1719 = vmatpush1.bf16.msra.mxu0 0
    %1720 = vmatprep.subr.bf16.mxu0 0
    %1721 = vmatpush1.bf16.msra.mxu0 0
    %1722 = vmatprep.subr.bf16.mxu0 0
    %1723 = vmatpush1.bf16.msra.mxu0 0
    %1724 = vmatprep.subr.bf16.mxu0 0
    %1725 = vmatpush1.bf16.msra.mxu0 0
    %1726 = vmatprep.subr.bf16.mxu0 0
    %1727 = vmatpush1.bf16.msra.mxu0 0
    %1728 = vmatprep.subr.bf16.mxu0 0
    %1729 = vmatpush1.bf16.msra.mxu0 0
    %1730 = vmatprep.subr.bf16.mxu0 0
    %1731 = vmatpush1.bf16.msra.mxu0 0
    %1732 = vmatprep.subr.bf16.mxu0 0
    %1733 = vmatpush1.bf16.msra.mxu0 0
    %1734 = vmatprep.subr.bf16.mxu0 0
    %1735 = vmatpush1.bf16.msra.mxu0 0
    %1736 = vmatprep.subr.bf16.mxu0 0
    %1737 = vmatpush1.bf16.msra.mxu0 0
    %1738 = vmatprep.subr.bf16.mxu0 0
    %1739 = vmatpush1.bf16.msra.mxu0 0
    %1740 = vmatprep.subr.bf16.mxu0 0
    %1741 = vmatpush1.bf16.msra.mxu0 0
    %1742 = vmatprep.subr.bf16.mxu0 0
    %1743 = vmatpush1.bf16.msra.mxu0 0
    %1744 = vmatprep.subr.bf16.mxu0 0
    %1745 = vmatpush1.bf16.msra.mxu0 0
    %1746 = vmatprep.mubr.bf16.mxu0 0
    %1747 = vmatmul.mubr.bf16.gmra.mrb[0].mxu0 %v1712
    %v1748 = vpop.f32.mrb[0].mxu0
    %v1749 = vadd.f32 %v1697, %v1748
    %v1750 = vpop.f32.mrb[0].mxu0
    %v1751 = vpop.f32.mrb[0].mxu0
    %v1752 = vadd.f32 %v1697, %v1751
    %v1753 = vpop.f32.mrb[0].mxu0
    %1754 = vdwg.mxu0
    %v1755 = vmul.f32 %v1749, 0.5
    %v1756 = vmul.f32 %v1752, 0.5
    %v1757 = vmul.f32 %v1749, 0.044715
    %v1758 = vmul.f32 %v1752, 0.044715
    %v1759 = vmul.f32 %v1757, %v1749
    %v1760 = vmul.f32 %v1758, %v1752
    %v1761 = vmul.f32 %v1759, %v1749
    %v1762 = vmul.f32 %v1760, %v1752
    %v1763 = vadd.f32 %v1749, %v1761
    %v1764 = vadd.f32 %v1752, %v1762
    %v1765 = vmul.f32 %v1763, 0.7978846
    %v1766 = vmul.f32 %v1764, 0.7978846
    %v1767 = vtanh.pop %v1765
    %v1768 = vtanh.pop %v1766
    %v1769 = vadd.f32 %v1767, 1.0
    %v1770 = vadd.f32 %v1768, 1.0
    %v1771 = vmul.f32 %v1755, %v1769
    %v1772 = vmul.f32 %v1756, %v1770
    %v1773 = vpack.c.bf16 %v1772, %v1771
    %v1774 = vld [vmem:[%s12] sm:$0xf]
    %v1775 = vld [vmem:[%s12 + $0x4] sm:$0xf]
    %v1776 = vld [vmem:[%s12 + $0x8] sm:$0xf]
    %v1777 = vld [vmem:[%s12 + $0xc] sm:$0xf]
    %v1778 = vld [vmem:[%s12 + $0x10] sm:$0xf]
    %v1779 = vld [vmem:[%s12 + $0x14] sm:$0xf]
    %v1780 = vld [vmem:[%s12 + $0x18] sm:$0xf]
    %v1781 = vld [vmem:[%s12 + $0x1c] sm:$0xf]
    %v1782 = vld [vmem:[%s12 + $0x20] sm:$0xf]
    %v1783 = vld [vmem:[%s12 + $0x24] sm:$0xf]
    %v1784 = vld [vmem:[%s12 + $0x28] sm:$0xf]
    %v1785 = vld [vmem:[%s12 + $0x2c] sm:$0xf]
    %v1786 = vld [vmem:[%s12 + $0x30] sm:$0xf]
    %v1787 = vld [vmem:[%s12 + $0x34] sm:$0xf]
    %v1788 = vld [vmem:[%s12 + $0x38] sm:$0xf]
    %v1789 = vld [vmem:[%s12 + $0x3c] sm:$0xf]
    %v1790 = vld [vmem:[%s13] sm:$0x1]
    %v1792 = vlaneseq
    %v1793 = vshrl.u32 %v1792, 7
    %v1794 = vsub.s32 0, %v1793
    %v1795 = vrot.slane %v1790, %v1794
    %v1813 = vunpack.c.l.b16 %v1774
    %v1814 = vunpack.c.l.b16 %v1775
    %v1815 = vunpack.c.l.b16 %v1776
    %v1816 = vunpack.c.l.b16 %v1777
    %v1817 = vunpack.c.l.b16 %v1778
    %v1818 = vunpack.c.l.b16 %v1779
    %v1819 = vunpack.c.l.b16 %v1780
    %v1820 = vunpack.c.l.b16 %v1781
    %v1821 = vunpack.c.l.b16 %v1782
    %v1822 = vunpack.c.l.b16 %v1783
    %v1823 = vunpack.c.l.b16 %v1784
    %v1824 = vunpack.c.l.b16 %v1785
    %v1825 = vunpack.c.l.b16 %v1786
    %v1826 = vunpack.c.l.b16 %v1787
    %v1827 = vunpack.c.l.b16 %v1788
    %v1828 = vunpack.c.l.b16 %v1789
    %v1829 = vpack.c.b16 %v1814, %v1813
    %v1830 = vpack.c.b16 %v1816, %v1815
    %v1831 = vpack.c.b16 %v1818, %v1817
    %v1832 = vpack.c.b16 %v1820, %v1819
    %v1833 = vpack.c.b16 %v1822, %v1821
    %v1834 = vpack.c.b16 %v1824, %v1823
    %v1835 = vpack.c.b16 %v1826, %v1825
    %v1836 = vpack.c.b16 %v1828, %v1827
    %1845 = vmatprep.subr.bf16.mxu0 0
    %1846 = vmatpush1.bf16.msra.mxu0 %v1829
    %1847 = vmatprep.subr.bf16.mxu0 0
    %1848 = vmatpush1.bf16.msra.mxu0 %v1830
    %1849 = vmatprep.subr.bf16.mxu0 0
    %1850 = vmatpush1.bf16.msra.mxu0 %v1831
    %1851 = vmatprep.subr.bf16.mxu0 0
    %1852 = vmatpush1.bf16.msra.mxu0 %v1832
    %1853 = vmatprep.subr.bf16.mxu0 0
    %1854 = vmatpush1.bf16.msra.mxu0 %v1833
    %1855 = vmatprep.subr.bf16.mxu0 0
    %1856 = vmatpush1.bf16.msra.mxu0 %v1834
    %1857 = vmatprep.subr.bf16.mxu0 0
    %1858 = vmatpush1.bf16.msra.mxu0 %v1835
    %1859 = vmatprep.subr.bf16.mxu0 0
    %1860 = vmatpush1.bf16.msra.mxu0 %v1836
    %1861 = vmatprep.subr.bf16.mxu0 0
    %1862 = vmatpush1.bf16.msra.mxu0 0
    %1863 = vmatprep.subr.bf16.mxu0 0
    %1864 = vmatpush1.bf16.msra.mxu0 0
    %1865 = vmatprep.subr.bf16.mxu0 0
    %1866 = vmatpush1.bf16.msra.mxu0 0
    %1867 = vmatprep.subr.bf16.mxu0 0
    %1868 = vmatpush1.bf16.msra.mxu0 0
    %1869 = vmatprep.subr.bf16.mxu0 0
    %1870 = vmatpush1.bf16.msra.mxu0 0
    %1871 = vmatprep.subr.bf16.mxu0 0
    %1872 = vmatpush1.bf16.msra.mxu0 0
    %1873 = vmatprep.subr.bf16.mxu0 0
    %1874 = vmatpush1.bf16.msra.mxu0 0
    %1875 = vmatprep.subr.bf16.mxu0 0
    %1876 = vmatpush1.bf16.msra.mxu0 0
    %1877 = vmatprep.mubr.bf16.mxu0 0
    %1878 = vmatmul.mubr.bf16.gmra.mrb[0].mxu0 %v1773
    %v1879 = vpop.f32.mrb[0].mxu0
    %v1880 = vadd.f32 %v1795, %v1879
    %v1881 = vpop.f32.mrb[0].mxu0
    %v1882 = vpop.f32.mrb[0].mxu0
    %v1883 = vadd.f32 %v1795, %v1882
    %v1884 = vpop.f32.mrb[0].mxu0
    %1885 = vdwg.mxu0
    %v1886 = vadd.f32 %v1880, %v1685
    %v1887 = vadd.f32 %v1883, %v1686
    %v1888 = vld [vmem:[%s14] sm:$0x1]
    %v1889 = vld [vmem:[%s15] sm:$0x1]
    %v1890 = vsel %vm76, %v1886, 0.0
    %1891 = vadd.xlane.f32.xlu0 %v1890
    %v1892 = vpop.xlane.xlu0 %1891
    %v1893 = vsel %vm76, %v1887, 0.0
    %1894 = vadd.xlane.f32.xlu0 %v1893
    %v1895 = vpop.xlane.xlu0 %1894
    %v1896 = vmul.f32 %v1892, %v83
    %v1897 = vmul.f32 %v1895, %v83
    %v1898 = vsub.f32 %v1886, %v1896
    %v1899 = vsub.f32 %v1887, %v1897
    %v1900 = vmul.f32 %v1898, %v1898
    %v1901 = vmul.f32 %v1899, %v1899
    %v1902 = vsel %vm76, %v1900, 0.0
    %1903 = vadd.xlane.f32.xlu0 %v1902
    %v1904 = vpop.xlane.xlu0 %1903
    %v1905 = vsel %vm76, %v1901, 0.0
    %1906 = vadd.xlane.f32.xlu0 %v1905
    %v1907 = vpop.xlane.xlu0 %1906
    %v1908 = vmul.f32 %v1904, %v83
    %v1909 = vmul.f32 %v1907, %v83
    %v1910 = vadd.f32 %v1908, 1e-12
    %v1911 = vadd.f32 %v1909, 1e-12
    %v1912 = vrsqrt.pop %v1910
    %v1913 = vrsqrt.pop %v1911
    %v1914 = vmul.f32 %v1898, %v1912
    %v1915 = vmul.f32 %v1899, %v1913
    %v1917 = vlaneseq
    %v1918 = vshrl.u32 %v1917, 7
    %v1919 = vsub.s32 0, %v1918
    %v1920 = vrot.slane %v1888, %v1919
    %v1922 = vmul.f32 %v1914, %v1920
    %v1923 = vmul.f32 %v1915, %v1920
    %v1925 = vlaneseq
    %v1926 = vshrl.u32 %v1925, 7
    %v1927 = vsub.s32 0, %v1926
    %v1928 = vrot.slane %v1889, %v1927
    %v1930 = vadd.f32 %v1922, %v1928
    %v1931 = vadd.f32 %v1923, %v1928
    %v1932 = vpack.c.bf16 %v1931, %v1930
    %s1933 = scalar_lea.vmem %s4, 16
    %v1934 = vld [vmem:[%s1933] sm:$0xf]
    %v1935 = vld [vmem:[%s1933 + $0x4] sm:$0xf]
    %v1936 = vld [vmem:[%s1933 + $0x8] sm:$0xf]
    %v1937 = vld [vmem:[%s1933 + $0xc] sm:$0xf]
    %s1938 = scalar_lea.vmem %s5, 1
    %v1939 = vld [vmem:[%s1938] sm:$0x1]
    %v1941 = vlaneseq
    %v1942 = vshrl.u32 %v1941, 7
    %v1943 = vsub.s32 0, %v1942
    %v1944 = vrot.slane %v1939, %v1943
    %v1950 = vunpack.c.l.b16 %v1934
    %v1951 = vunpack.c.l.b16 %v1935
    %v1952 = vunpack.c.l.b16 %v1936
    %v1953 = vunpack.c.l.b16 %v1937
    %v1954 = vpack.c.b16 %v1951, %v1950
    %v1955 = vpack.c.b16 %v1953, %v1952
    %v1959 = vsel %vm76, %v1932, 0
    %1961 = vmatprep.subr.bf16.mxu0 0
    %1962 = vmatpush1.bf16.msra.mxu0 %v1954
    %1963 = vmatprep.subr.bf16.mxu0 0
    %1964 = vmatpush1.bf16.msra.mxu0 %v1955
    %1965 = vmatprep.subr.bf16.mxu0 0
    %1966 = vmatpush1.bf16.msra.mxu0 0
    %1967 = vmatprep.subr.bf16.mxu0 0
    %1968 = vmatpush1.bf16.msra.mxu0 0
    %1969 = vmatprep.subr.bf16.mxu0 0
    %1970 = vmatpush1.bf16.msra.mxu0 0
    %1971 = vmatprep.subr.bf16.mxu0 0
    %1972 = vmatpush1.bf16.msra.mxu0 0
    %1973 = vmatprep.subr.bf16.mxu0 0
    %1974 = vmatpush1.bf16.msra.mxu0 0
    %1975 = vmatprep.subr.bf16.mxu0 0
    %1976 = vmatpush1.bf16.msra.mxu0 0
    %1977 = vmatprep.subr.bf16.mxu0 0
    %1978 = vmatpush1.bf16.msra.mxu0 0
    %1979 = vmatprep.subr.bf16.mxu0 0
    %1980 = vmatpush1.bf16.msra.mxu0 0
    %1981 = vmatprep.subr.bf16.mxu0 0
    %1982 = vmatpush1.bf16.msra.mxu0 0
    %1983 = vmatprep.subr.bf16.mxu0 0
    %1984 = vmatpush1.bf16.msra.mxu0 0
    %1985 = vmatprep.subr.bf16.mxu0 0
    %1986 = vmatpush1.bf16.msra.mxu0 0
    %1987 = vmatprep.subr.bf16.mxu0 0
    %1988 = vmatpush1.bf16.msra.mxu0 0
    %1989 = vmatprep.subr.bf16.mxu0 0
    %1990 = vmatpush1.bf16.msra.mxu0 0
    %1991 = vmatprep.subr.bf16.mxu0 0
    %1992 = vmatpush1.bf16.msra.mxu0 0
    %1993 = vmatprep.mubr.bf16.mxu0 0
    %1994 = vmatmul.mubr.bf16.gmra.mrb[0].mxu0 %v1959
    %v1995 = vpop.f32.mrb[0].mxu0
    %v1996 = vadd.f32 %v1944, %v1995
    %v1997 = vpop.f32.mrb[0].mxu0
    %v1998 = vpop.f32.mrb[0].mxu0
    %v1999 = vadd.f32 %v1944, %v1998
    %v2000 = vpop.f32.mrb[0].mxu0
    %2001 = vdwg.mxu0
    %2003 = vrot.lane.b32.xlu0 %v1996, 96
    %v2004 = vpop.permute.xlu0 %2003
    %v2005 = vsel %vm225, %v1996, 0
    %v2007 = vsel %vm225, %v2004, 0
    %2009 = vmatprep.subr.mxu0 0.0
    %2010 = vmatpush1.xpose.msra.mxu0 %v2007
    %2011 = vmatprep.subr.mxu0 0.0
    %2012 = vmatpush1.xpose.msra.mxu0 0.0
    %2013 = vmatprep.subr.mxu0 0.0
    %2014 = vmatpush1.xpose.msra.mxu0 0.0
    %2015 = vmatprep.subr.mxu0 0.0
    %2016 = vmatpush1.xpose.msra.mxu0 0.0
    %2017 = vmatprep.subr.mxu0 0.0
    %2018 = vmatpush1.xpose.msra.mxu0 0.0
    %2019 = vmatprep.subr.mxu0 0.0
    %2020 = vmatpush1.xpose.msra.mxu0 0.0
    %2021 = vmatprep.subr.mxu0 0.0
    %2022 = vmatpush1.xpose.msra.mxu0 0.0
    %2023 = vmatprep.subr.mxu0 0.0
    %2024 = vmatpush1.xpose.msra.mxu0 0.0
    %2025 = vmatprep.subr.mxu0 0.0
    %2026 = vmatpush1.xpose.msra.mxu0 0.0
    %2027 = vmatprep.subr.mxu0 0.0
    %2028 = vmatpush1.xpose.msra.mxu0 0.0
    %2029 = vmatprep.subr.mxu0 0.0
    %2030 = vmatpush1.xpose.msra.mxu0 0.0
    %2031 = vmatprep.subr.mxu0 0.0
    %2032 = vmatpush1.xpose.msra.mxu0 0.0
    %2033 = vmatprep.subr.mxu0 0.0
    %2034 = vmatpush1.xpose.msra.mxu0 0.0
    %2035 = vmatprep.subr.mxu0 0.0
    %2036 = vmatpush1.xpose.msra.mxu0 0.0
    %2037 = vmatprep.subr.mxu0 0.0
    %2038 = vmatpush1.xpose.msra.mxu0 0.0
    %2039 = vmatprep.subr.mxu0 0.0
    %2040 = vmatpush1.xpose.msra.mxu0 0.0
    %2041 = vmatprep.subr.mxu0 0.0
    %2042 = vmatpush1.xpose.msra.mxu0 0.0
    %2043 = vmatprep.subr.mxu0 0.0
    %2044 = vmatpush1.xpose.msra.mxu0 0.0
    %2045 = vmatprep.subr.mxu0 0.0
    %2046 = vmatpush1.xpose.msra.mxu0 0.0
    %2047 = vmatprep.subr.mxu0 0.0
    %2048 = vmatpush1.xpose.msra.mxu0 0.0
    %2049 = vmatprep.subr.mxu0 0.0
    %2050 = vmatpush1.xpose.msra.mxu0 0.0
    %2051 = vmatprep.subr.mxu0 0.0
    %2052 = vmatpush1.xpose.msra.mxu0 0.0
    %2053 = vmatprep.subr.mxu0 0.0
    %2054 = vmatpush1.xpose.msra.mxu0 0.0
    %2055 = vmatprep.subr.mxu0 0.0
    %2056 = vmatpush1.xpose.msra.mxu0 0.0
    %2057 = vmatprep.subr.mxu0 0.0
    %2058 = vmatpush1.xpose.msra.mxu0 0.0
    %2059 = vmatprep.subr.mxu0 0.0
    %2060 = vmatpush1.xpose.msra.mxu0 0.0
    %2061 = vmatprep.subr.mxu0 0.0
    %2062 = vmatpush1.xpose.msra.mxu0 0.0
    %2063 = vmatprep.subr.mxu0 0.0
    %2064 = vmatpush1.xpose.msra.mxu0 0.0
    %2065 = vmatprep.subr.mxu0 0.0
    %2066 = vmatpush1.xpose.msra.mxu0 0.0
    %2067 = vmatprep.subr.mxu0 0.0
    %2068 = vmatpush1.xpose.msra.mxu0 0.0
    %2069 = vmatprep.subr.mxu0 0.0
    %2070 = vmatpush1.xpose.msra.mxu0 0.0
    %2071 = vmatprep.subr.mxu0 0.0
    %2072 = vmatpush1.xpose.msra.mxu0 0.0
    %2073 = vmatprep.mubr.f32.mxu0 0.0
    %2074 = vmatmul.mubr.f32.gmra.mrb[0].mxu0 %v2005
    %v2075 = vpop.f32.mrb[0].mxu0
    %v2076 = vadd.f32 %v215, %v2075
    %v2077 = vpop.f32.mrb[0].mxu0
    %2078 = vdwg.mxu0
    %2080 = vrot.lane.b32.xlu0 %v1999, 96
    %v2081 = vpop.permute.xlu0 %2080
    %v2082 = vsel %vm225, %v1999, 0
    %v2084 = vsel %vm225, %v2081, 0
    %2086 = vmatprep.subr.mxu0 0.0
    %2087 = vmatpush1.xpose.msra.mxu0 %v2084
    %2088 = vmatprep.subr.mxu0 0.0
    %2089 = vmatpush1.xpose.msra.mxu0 0.0
    %2090 = vmatprep.subr.mxu0 0.0
    %2091 = vmatpush1.xpose.msra.mxu0 0.0
    %2092 = vmatprep.subr.mxu0 0.0
    %2093 = vmatpush1.xpose.msra.mxu0 0.0
    %2094 = vmatprep.subr.mxu0 0.0
    %2095 = vmatpush1.xpose.msra.mxu0 0.0
    %2096 = vmatprep.subr.mxu0 0.0
    %2097 = vmatpush1.xpose.msra.mxu0 0.0
    %2098 = vmatprep.subr.mxu0 0.0
    %2099 = vmatpush1.xpose.msra.mxu0 0.0
    %2100 = vmatprep.subr.mxu0 0.0
    %2101 = vmatpush1.xpose.msra.mxu0 0.0
    %2102 = vmatprep.subr.mxu0 0.0
    %2103 = vmatpush1.xpose.msra.mxu0 0.0
    %2104 = vmatprep.subr.mxu0 0.0
    %2105 = vmatpush1.xpose.msra.mxu0 0.0
    %2106 = vmatprep.subr.mxu0 0.0
    %2107 = vmatpush1.xpose.msra.mxu0 0.0
    %2108 = vmatprep.subr.mxu0 0.0
    %2109 = vmatpush1.xpose.msra.mxu0 0.0
    %2110 = vmatprep.subr.mxu0 0.0
    %2111 = vmatpush1.xpose.msra.mxu0 0.0
    %2112 = vmatprep.subr.mxu0 0.0
    %2113 = vmatpush1.xpose.msra.mxu0 0.0
    %2114 = vmatprep.subr.mxu0 0.0
    %2115 = vmatpush1.xpose.msra.mxu0 0.0
    %2116 = vmatprep.subr.mxu0 0.0
    %2117 = vmatpush1.xpose.msra.mxu0 0.0
    %2118 = vmatprep.subr.mxu0 0.0
    %2119 = vmatpush1.xpose.msra.mxu0 0.0
    %2120 = vmatprep.subr.mxu0 0.0
    %2121 = vmatpush1.xpose.msra.mxu0 0.0
    %2122 = vmatprep.subr.mxu0 0.0
    %2123 = vmatpush1.xpose.msra.mxu0 0.0
    %2124 = vmatprep.subr.mxu0 0.0
    %2125 = vmatpush1.xpose.msra.mxu0 0.0
    %2126 = vmatprep.subr.mxu0 0.0
    %2127 = vmatpush1.xpose.msra.mxu0 0.0
    %2128 = vmatprep.subr.mxu0 0.0
    %2129 = vmatpush1.xpose.msra.mxu0 0.0
    %2130 = vmatprep.subr.mxu0 0.0
    %2131 = vmatpush1.xpose.msra.mxu0 0.0
    %2132 = vmatprep.subr.mxu0 0.0
    %2133 = vmatpush1.xpose.msra.mxu0 0.0
    %2134 = vmatprep.subr.mxu0 0.0
    %2135 = vmatpush1.xpose.msra.mxu0 0.0
    %2136 = vmatprep.subr.mxu0 0.0
    %2137 = vmatpush1.xpose.msra.mxu0 0.0
    %2138 = vmatprep.subr.mxu0 0.0
    %2139 = vmatpush1.xpose.msra.mxu0 0.0
    %2140 = vmatprep.subr.mxu0 0.0
    %2141 = vmatpush1.xpose.msra.mxu0 0.0
    %2142 = vmatprep.subr.mxu0 0.0
    %2143 = vmatpush1.xpose.msra.mxu0 0.0
    %2144 = vmatprep.subr.mxu0 0.0
    %2145 = vmatpush1.xpose.msra.mxu0 0.0
    %2146 = vmatprep.subr.mxu0 0.0
    %2147 = vmatpush1.xpose.msra.mxu0 0.0
    %2148 = vmatprep.subr.mxu0 0.0
    %2149 = vmatpush1.xpose.msra.mxu0 0.0
    %2150 = vmatprep.mubr.f32.mxu0 0.0
    %2151 = vmatmul.mubr.f32.gmra.mrb[0].mxu0 %v2082
    %v2152 = vpop.f32.mrb[0].mxu0
    %v2153 = vadd.f32 %v219, %v2152
    %v2154 = vpop.f32.mrb[0].mxu0
    %2155 = vdwg.mxu0
    %v2156 = vsel %vm225, %v2076, -inf
    %2157 = vmax.xlane.f32.xlu0 %v2156
    %v2158 = vpop.xlane.xlu0 %2157
    %v2159 = vsel %vm225, %v2153, -inf
    %2160 = vmax.xlane.f32.xlu0 %v2159
    %v2161 = vpop.xlane.xlu0 %2160
    %v2162 = vsub.f32 %v2076, %v2158
    %v2163 = vsub.f32 %v2153, %v2161
    %v2164 = vmul.f32 %v2162, 1.442695
    %v2165 = vpow.pop %v2164
    %v2166 = vmul.f32 %v2163, 1.442695
    %v2167 = vpow.pop %v2166
    %v2168 = vsel %vm225, %v2165, 0.0
    %2169 = vadd.xlane.f32.xlu0 %v2168
    %v2170 = vpop.xlane.xlu0 %2169
    %v2171 = vsel %vm225, %v2167, 0.0
    %2172 = vadd.xlane.f32.xlu0 %v2171
    %v2173 = vpop.xlane.xlu0 %2172
    %v2174 = vrcp.pop %v2170
    %v2175 = vrcp.pop %v2173
    %v2176 = vmul.f32 %v2165, %v2174
    %v2177 = vmul.f32 %v2167, %v2175
    %2178 = vrot.lane.b32.xlu0 %v1996, 64
    %v2179 = vpop.permute.xlu0 %2178
    %v2182 = vsel %vm225, %v2176, 0
    %2184 = vmatprep.subr.mxu0 0.0
    %2185 = vmatpush1.msra.mxu0 %v2179
    %2186 = vmatprep.subr.mxu0 0.0
    %2187 = vmatpush1.msra.mxu0 0.0
    %2188 = vmatprep.subr.mxu0 0.0
    %2189 = vmatpush1.msra.mxu0 0.0
    %2190 = vmatprep.subr.mxu0 0.0
    %2191 = vmatpush1.msra.mxu0 0.0
    %2192 = vmatprep.subr.mxu0 0.0
    %2193 = vmatpush1.msra.mxu0 0.0
    %2194 = vmatprep.subr.mxu0 0.0
    %2195 = vmatpush1.msra.mxu0 0.0
    %2196 = vmatprep.subr.mxu0 0.0
    %2197 = vmatpush1.msra.mxu0 0.0
    %2198 = vmatprep.subr.mxu0 0.0
    %2199 = vmatpush1.msra.mxu0 0.0
    %2200 = vmatprep.subr.mxu0 0.0
    %2201 = vmatpush1.msra.mxu0 0.0
    %2202 = vmatprep.subr.mxu0 0.0
    %2203 = vmatpush1.msra.mxu0 0.0
    %2204 = vmatprep.subr.mxu0 0.0
    %2205 = vmatpush1.msra.mxu0 0.0
    %2206 = vmatprep.subr.mxu0 0.0
    %2207 = vmatpush1.msra.mxu0 0.0
    %2208 = vmatprep.subr.mxu0 0.0
    %2209 = vmatpush1.msra.mxu0 0.0
    %2210 = vmatprep.subr.mxu0 0.0
    %2211 = vmatpush1.msra.mxu0 0.0
    %2212 = vmatprep.subr.mxu0 0.0
    %2213 = vmatpush1.msra.mxu0 0.0
    %2214 = vmatprep.subr.mxu0 0.0
    %2215 = vmatpush1.msra.mxu0 0.0
    %2216 = vmatprep.subr.mxu0 0.0
    %2217 = vmatpush1.msra.mxu0 0.0
    %2218 = vmatprep.subr.mxu0 0.0
    %2219 = vmatpush1.msra.mxu0 0.0
    %2220 = vmatprep.subr.mxu0 0.0
    %2221 = vmatpush1.msra.mxu0 0.0
    %2222 = vmatprep.subr.mxu0 0.0
    %2223 = vmatpush1.msra.mxu0 0.0
    %2224 = vmatprep.subr.mxu0 0.0
    %2225 = vmatpush1.msra.mxu0 0.0
    %2226 = vmatprep.subr.mxu0 0.0
    %2227 = vmatpush1.msra.mxu0 0.0
    %2228 = vmatprep.subr.mxu0 0.0
    %2229 = vmatpush1.msra.mxu0 0.0
    %2230 = vmatprep.subr.mxu0 0.0
    %2231 = vmatpush1.msra.mxu0 0.0
    %2232 = vmatprep.subr.mxu0 0.0
    %2233 = vmatpush1.msra.mxu0 0.0
    %2234 = vmatprep.subr.mxu0 0.0
    %2235 = vmatpush1.msra.mxu0 0.0
    %2236 = vmatprep.subr.mxu0 0.0
    %2237 = vmatpush1.msra.mxu0 0.0
    %2238 = vmatprep.subr.mxu0 0.0
    %2239 = vmatpush1.msra.mxu0 0.0
    %2240 = vmatprep.subr.mxu0 0.0
    %2241 = vmatpush1.msra.mxu0 0.0
    %2242 = vmatprep.subr.mxu0 0.0
    %2243 = vmatpush1.msra.mxu0 0.0
    %2244 = vmatprep.subr.mxu0 0.0
    %2245 = vmatpush1.msra.mxu0 0.0
    %2246 = vmatprep.subr.mxu0 0.0
    %2247 = vmatpush1.msra.mxu0 0.0
    %2248 = vmatprep.mubr.f32.mxu0 0.0
    %2249 = vmatmul.mubr.f32.gmra.mrb[0].mxu0 %v2182
    %v2250 = vpop.f32.mrb[0].mxu0
    %v2251 = vadd.f32 0.0, %v2250
    %v2252 = vpop.f32.mrb[0].mxu0
    %2253 = vdwg.mxu0
    %2254 = vrot.lane.b32.xlu0 %v1999, 64
    %v2255 = vpop.permute.xlu0 %2254
    %v2258 = vsel %vm225, %v2177, 0
    %2260 = vmatprep.subr.mxu0 0.0
    %2261 = vmatpush1.msra.mxu0 %v2255
    %2262 = vmatprep.subr.mxu0 0.0
    %2263 = vmatpush1.msra.mxu0 0.0
    %2264 = vmatprep.subr.mxu0 0.0
    %2265 = vmatpush1.msra.mxu0 0.0
    %2266 = vmatprep.subr.mxu0 0.0
    %2267 = vmatpush1.msra.mxu0 0.0
    %2268 = vmatprep.subr.mxu0 0.0
    %2269 = vmatpush1.msra.mxu0 0.0
    %2270 = vmatprep.subr.mxu0 0.0
    %2271 = vmatpush1.msra.mxu0 0.0
    %2272 = vmatprep.subr.mxu0 0.0
    %2273 = vmatpush1.msra.mxu0 0.0
    %2274 = vmatprep.subr.mxu0 0.0
    %2275 = vmatpush1.msra.mxu0 0.0
    %2276 = vmatprep.subr.mxu0 0.0
    %2277 = vmatpush1.msra.mxu0 0.0
    %2278 = vmatprep.subr.mxu0 0.0
    %2279 = vmatpush1.msra.mxu0 0.0
    %2280 = vmatprep.subr.mxu0 0.0
    %2281 = vmatpush1.msra.mxu0 0.0
    %2282 = vmatprep.subr.mxu0 0.0
    %2283 = vmatpush1.msra.mxu0 0.0
    %2284 = vmatprep.subr.mxu0 0.0
    %2285 = vmatpush1.msra.mxu0 0.0
    %2286 = vmatprep.subr.mxu0 0.0
    %2287 = vmatpush1.msra.mxu0 0.0
    %2288 = vmatprep.subr.mxu0 0.0
    %2289 = vmatpush1.msra.mxu0 0.0
    %2290 = vmatprep.subr.mxu0 0.0
    %2291 = vmatpush1.msra.mxu0 0.0
    %2292 = vmatprep.subr.mxu0 0.0
    %2293 = vmatpush1.msra.mxu0 0.0
    %2294 = vmatprep.subr.mxu0 0.0
    %2295 = vmatpush1.msra.mxu0 0.0
    %2296 = vmatprep.subr.mxu0 0.0
    %2297 = vmatpush1.msra.mxu0 0.0
    %2298 = vmatprep.subr.mxu0 0.0
    %2299 = vmatpush1.msra.mxu0 0.0
    %2300 = vmatprep.subr.mxu0 0.0
    %2301 = vmatpush1.msra.mxu0 0.0
    %2302 = vmatprep.subr.mxu0 0.0
    %2303 = vmatpush1.msra.mxu0 0.0
    %2304 = vmatprep.subr.mxu0 0.0
    %2305 = vmatpush1.msra.mxu0 0.0
    %2306 = vmatprep.subr.mxu0 0.0
    %2307 = vmatpush1.msra.mxu0 0.0
    %2308 = vmatprep.subr.mxu0 0.0
    %2309 = vmatpush1.msra.mxu0 0.0
    %2310 = vmatprep.subr.mxu0 0.0
    %2311 = vmatpush1.msra.mxu0 0.0
    %2312 = vmatprep.subr.mxu0 0.0
    %2313 = vmatpush1.msra.mxu0 0.0
    %2314 = vmatprep.subr.mxu0 0.0
    %2315 = vmatpush1.msra.mxu0 0.0
    %2316 = vmatprep.subr.mxu0 0.0
    %2317 = vmatpush1.msra.mxu0 0.0
    %2318 = vmatprep.subr.mxu0 0.0
    %2319 = vmatpush1.msra.mxu0 0.0
    %2320 = vmatprep.subr.mxu0 0.0
    %2321 = vmatpush1.msra.mxu0 0.0
    %2322 = vmatprep.subr.mxu0 0.0
    %2323 = vmatpush1.msra.mxu0 0.0
    %2324 = vmatprep.mubr.f32.mxu0 0.0
    %2325 = vmatmul.mubr.f32.gmra.mrb[0].mxu0 %v2258
    %v2326 = vpop.f32.mrb[0].mxu0
    %v2327 = vadd.f32 0.0, %v2326
    %v2328 = vpop.f32.mrb[0].mxu0
    %2329 = vdwg.mxu0
    %2330 = vrot.lane.b32.xlu0 %v1996, 120
    %v2331 = vpop.permute.xlu0 %2330
    %2332 = vrot.lane.b32.xlu0 %v1996, 88
    %v2333 = vpop.permute.xlu0 %2332
    %v2334 = vsel %vm225, %v2331, 0
    %v2336 = vsel %vm225, %v2333, 0
    %2338 = vmatprep.subr.mxu0 0.0
    %2339 = vmatpush1.xpose.msra.mxu0 %v2336
    %2340 = vmatprep.subr.mxu0 0.0
    %2341 = vmatpush1.xpose.msra.mxu0 0.0
    %2342 = vmatprep.subr.mxu0 0.0
    %2343 = vmatpush1.xpose.msra.mxu0 0.0
    %2344 = vmatprep.subr.mxu0 0.0
    %2345 = vmatpush1.xpose.msra.mxu0 0.0
    %2346 = vmatprep.subr.mxu0 0.0
    %2347 = vmatpush1.xpose.msra.mxu0 0.0
    %2348 = vmatprep.subr.mxu0 0.0
    %2349 = vmatpush1.xpose.msra.mxu0 0.0
    %2350 = vmatprep.subr.mxu0 0.0
    %2351 = vmatpush1.xpose.msra.mxu0 0.0
    %2352 = vmatprep.subr.mxu0 0.0
    %2353 = vmatpush1.xpose.msra.mxu0 0.0
    %2354 = vmatprep.subr.mxu0 0.0
    %2355 = vmatpush1.xpose.msra.mxu0 0.0
    %2356 = vmatprep.subr.mxu0 0.0
    %2357 = vmatpush1.xpose.msra.mxu0 0.0
    %2358 = vmatprep.subr.mxu0 0.0
    %2359 = vmatpush1.xpose.msra.mxu0 0.0
    %2360 = vmatprep.subr.mxu0 0.0
    %2361 = vmatpush1.xpose.msra.mxu0 0.0
    %2362 = vmatprep.subr.mxu0 0.0
    %2363 = vmatpush1.xpose.msra.mxu0 0.0
    %2364 = vmatprep.subr.mxu0 0.0
    %2365 = vmatpush1.xpose.msra.mxu0 0.0
    %2366 = vmatprep.subr.mxu0 0.0
    %2367 = vmatpush1.xpose.msra.mxu0 0.0
    %2368 = vmatprep.subr.mxu0 0.0
    %2369 = vmatpush1.xpose.msra.mxu0 0.0
    %2370 = vmatprep.subr.mxu0 0.0
    %2371 = vmatpush1.xpose.msra.mxu0 0.0
    %2372 = vmatprep.subr.mxu0 0.0
    %2373 = vmatpush1.xpose.msra.mxu0 0.0
    %2374 = vmatprep.subr.mxu0 0.0
    %2375 = vmatpush1.xpose.msra.mxu0 0.0
    %2376 = vmatprep.subr.mxu0 0.0
    %2377 = vmatpush1.xpose.msra.mxu0 0.0
    %2378 = vmatprep.subr.mxu0 0.0
    %2379 = vmatpush1.xpose.msra.mxu0 0.0
    %2380 = vmatprep.subr.mxu0 0.0
    %2381 = vmatpush1.xpose.msra.mxu0 0.0
    %2382 = vmatprep.subr.mxu0 0.0
    %2383 = vmatpush1.xpose.msra.mxu0 0.0
    %2384 = vmatprep.subr.mxu0 0.0
    %2385 = vmatpush1.xpose.msra.mxu0 0.0
    %2386 = vmatprep.subr.mxu0 0.0
    %2387 = vmatpush1.xpose.msra.mxu0 0.0
    %2388 = vmatprep.subr.mxu0 0.0
    %2389 = vmatpush1.xpose.msra.mxu0 0.0
    %2390 = vmatprep.subr.mxu0 0.0
    %2391 = vmatpush1.xpose.msra.mxu0 0.0
    %2392 = vmatprep.subr.mxu0 0.0
    %2393 = vmatpush1.xpose.msra.mxu0 0.0
    %2394 = vmatprep.subr.mxu0 0.0
    %2395 = vmatpush1.xpose.msra.mxu0 0.0
    %2396 = vmatprep.subr.mxu0 0.0
    %2397 = vmatpush1.xpose.msra.mxu0 0.0
    %2398 = vmatprep.subr.mxu0 0.0
    %2399 = vmatpush1.xpose.msra.mxu0 0.0
    %2400 = vmatprep.subr.mxu0 0.0
    %2401 = vmatpush1.xpose.msra.mxu0 0.0
    %2402 = vmatprep.mubr.f32.mxu0 0.0
    %2403 = vmatmul.mubr.f32.gmra.mrb[0].mxu0 %v2334
    %v2404 = vpop.f32.mrb[0].mxu0
    %v2405 = vadd.f32 %v215, %v2404
    %v2406 = vpop.f32.mrb[0].mxu0
    %2407 = vdwg.mxu0
    %2408 = vrot.lane.b32.xlu0 %v1999, 120
    %v2409 = vpop.permute.xlu0 %2408
    %2410 = vrot.lane.b32.xlu0 %v1999, 88
    %v2411 = vpop.permute.xlu0 %2410
    %v2412 = vsel %vm225, %v2409, 0
    %v2414 = vsel %vm225, %v2411, 0
    %2416 = vmatprep.subr.mxu0 0.0
    %2417 = vmatpush1.xpose.msra.mxu0 %v2414
    %2418 = vmatprep.subr.mxu0 0.0
    %2419 = vmatpush1.xpose.msra.mxu0 0.0
    %2420 = vmatprep.subr.mxu0 0.0
    %2421 = vmatpush1.xpose.msra.mxu0 0.0
    %2422 = vmatprep.subr.mxu0 0.0
    %2423 = vmatpush1.xpose.msra.mxu0 0.0
    %2424 = vmatprep.subr.mxu0 0.0
    %2425 = vmatpush1.xpose.msra.mxu0 0.0
    %2426 = vmatprep.subr.mxu0 0.0
    %2427 = vmatpush1.xpose.msra.mxu0 0.0
    %2428 = vmatprep.subr.mxu0 0.0
    %2429 = vmatpush1.xpose.msra.mxu0 0.0
    %2430 = vmatprep.subr.mxu0 0.0
    %2431 = vmatpush1.xpose.msra.mxu0 0.0
    %2432 = vmatprep.subr.mxu0 0.0
    %2433 = vmatpush1.xpose.msra.mxu0 0.0
    %2434 = vmatprep.subr.mxu0 0.0
    %2435 = vmatpush1.xpose.msra.mxu0 0.0
    %2436 = vmatprep.subr.mxu0 0.0
    %2437 = vmatpush1.xpose.msra.mxu0 0.0
    %2438 = vmatprep.subr.mxu0 0.0
    %2439 = vmatpush1.xpose.msra.mxu0 0.0
    %2440 = vmatprep.subr.mxu0 0.0
    %2441 = vmatpush1.xpose.msra.mxu0 0.0
    %2442 = vmatprep.subr.mxu0 0.0
    %2443 = vmatpush1.xpose.msra.mxu0 0.0
    %2444 = vmatprep.subr.mxu0 0.0
    %2445 = vmatpush1.xpose.msra.mxu0 0.0
    %2446 = vmatprep.subr.mxu0 0.0
    %2447 = vmatpush1.xpose.msra.mxu0 0.0
    %2448 = vmatprep.subr.mxu0 0.0
    %2449 = vmatpush1.xpose.msra.mxu0 0.0
    %2450 = vmatprep.subr.mxu0 0.0
    %2451 = vmatpush1.xpose.msra.mxu0 0.0
    %2452 = vmatprep.subr.mxu0 0.0
    %2453 = vmatpush1.xpose.msra.mxu0 0.0
    %2454 = vmatprep.subr.mxu0 0.0
    %2455 = vmatpush1.xpose.msra.mxu0 0.0
    %2456 = vmatprep.subr.mxu0 0.0
    %2457 = vmatpush1.xpose.msra.mxu0 0.0
    %2458 = vmatprep.subr.mxu0 0.0
    %2459 = vmatpush1.xpose.msra.mxu0 0.0
    %2460 = vmatprep.subr.mxu0 0.0
    %2461 = vmatpush1.xpose.msra.mxu0 0.0
    %2462 = vmatprep.subr.mxu0 0.0
    %2463 = vmatpush1.xpose.msra.mxu0 0.0
    %2464 = vmatprep.subr.mxu0 0.0
    %2465 = vmatpush1.xpose.msra.mxu0 0.0
    %2466 = vmatprep.subr.mxu0 0.0
    %2467 = vmatpush1.xpose.msra.mxu0 0.0
    %2468 = vmatprep.subr.mxu0 0.0
    %2469 = vmatpush1.xpose.msra.mxu0 0.0
    %2470 = vmatprep.subr.mxu0 0.0
    %2471 = vmatpush1.xpose.msra.mxu0 0.0
    %2472 = vmatprep.subr.mxu0 0.0
    %2473 = vmatpush1.xpose.msra.mxu0 0.0
    %2474 = vmatprep.subr.mxu0 0.0
    %2475 = vmatpush1.xpose.msra.mxu0 0.0
    %2476 = vmatprep.subr.mxu0 0.0
    %2477 = vmatpush1.xpose.msra.mxu0 0.0
    %2478 = vmatprep.subr.mxu0 0.0
    %2479 = vmatpush1.xpose.msra.mxu0 0.0
    %2480 = vmatprep.mubr.f32.mxu0 0.0
    %2481 = vmatmul.mubr.f32.gmra.mrb[0].mxu0 %v2412
    %v2482 = vpop.f32.mrb[0].mxu0
    %v2483 = vadd.f32 %v219, %v2482
    %v2484 = vpop.f32.mrb[0].mxu0
    %2485 = vdwg.mxu0
    %v2486 = vsel %vm225, %v2405, -inf
    %2487 = vmax.xlane.f32.xlu0 %v2486
    %v2488 = vpop.xlane.xlu0 %2487
    %v2489 = vsel %vm225, %v2483, -inf
    %2490 = vmax.xlane.f32.xlu0 %v2489
    %v2491 = vpop.xlane.xlu0 %2490
    %v2492 = vsub.f32 %v2405, %v2488
    %v2493 = vsub.f32 %v2483, %v2491
    %v2494 = vmul.f32 %v2492, 1.442695
    %v2495 = vpow.pop %v2494
    %v2496 = vmul.f32 %v2493, 1.442695
    %v2497 = vpow.pop %v2496
    %v2498 = vsel %vm225, %v2495, 0.0
    %2499 = vadd.xlane.f32.xlu0 %v2498
    %v2500 = vpop.xlane.xlu0 %2499
    %v2501 = vsel %vm225, %v2497, 0.0
    %2502 = vadd.xlane.f32.xlu0 %v2501
    %v2503 = vpop.xlane.xlu0 %2502
    %v2504 = vrcp.pop %v2500
    %v2505 = vrcp.pop %v2503
    %v2506 = vmul.f32 %v2495, %v2504
    %v2507 = vmul.f32 %v2497, %v2505
    %2508 = vrot.lane.b32.xlu0 %v1996, 56
    %v2509 = vpop.permute.xlu0 %2508
    %v2512 = vsel %vm225, %v2506, 0
    %2514 = vmatprep.subr.mxu0 0.0
    %2515 = vmatpush1.msra.mxu0 %v2509
    %2516 = vmatprep.subr.mxu0 0.0
    %2517 = vmatpush1.msra.mxu0 0.0
    %2518 = vmatprep.subr.mxu0 0.0
    %2519 = vmatpush1.msra.mxu0 0.0
    %2520 = vmatprep.subr.mxu0 0.0
    %2521 = vmatpush1.msra.mxu0 0.0
    %2522 = vmatprep.subr.mxu0 0.0
    %2523 = vmatpush1.msra.mxu0 0.0
    %2524 = vmatprep.subr.mxu0 0.0
    %2525 = vmatpush1.msra.mxu0 0.0
    %2526 = vmatprep.subr.mxu0 0.0
    %2527 = vmatpush1.msra.mxu0 0.0
    %2528 = vmatprep.subr.mxu0 0.0
    %2529 = vmatpush1.msra.mxu0 0.0
    %2530 = vmatprep.subr.mxu0 0.0
    %2531 = vmatpush1.msra.mxu0 0.0
    %2532 = vmatprep.subr.mxu0 0.0
    %2533 = vmatpush1.msra.mxu0 0.0
    %2534 = vmatprep.subr.mxu0 0.0
    %2535 = vmatpush1.msra.mxu0 0.0
    %2536 = vmatprep.subr.mxu0 0.0
    %2537 = vmatpush1.msra.mxu0 0.0
    %2538 = vmatprep.subr.mxu0 0.0
    %2539 = vmatpush1.msra.mxu0 0.0
    %2540 = vmatprep.subr.mxu0 0.0
    %2541 = vmatpush1.msra.mxu0 0.0
    %2542 = vmatprep.subr.mxu0 0.0
    %2543 = vmatpush1.msra.mxu0 0.0
    %2544 = vmatprep.subr.mxu0 0.0
    %2545 = vmatpush1.msra.mxu0 0.0
    %2546 = vmatprep.subr.mxu0 0.0
    %2547 = vmatpush1.msra.mxu0 0.0
    %2548 = vmatprep.subr.mxu0 0.0
    %2549 = vmatpush1.msra.mxu0 0.0
    %2550 = vmatprep.subr.mxu0 0.0
    %2551 = vmatpush1.msra.mxu0 0.0
    %2552 = vmatprep.subr.mxu0 0.0
    %2553 = vmatpush1.msra.mxu0 0.0
    %2554 = vmatprep.subr.mxu0 0.0
    %2555 = vmatpush1.msra.mxu0 0.0
    %2556 = vmatprep.subr.mxu0 0.0
    %2557 = vmatpush1.msra.mxu0 0.0
    %2558 = vmatprep.subr.mxu0 0.0
    %2559 = vmatpush1.msra.mxu0 0.0
    %2560 = vmatprep.subr.mxu0 0.0
    %2561 = vmatpush1.msra.mxu0 0.0
    %2562 = vmatprep.subr.mxu0 0.0
    %2563 = vmatpush1.msra.mxu0 0.0
    %2564 = vmatprep.subr.mxu0 0.0
    %2565 = vmatpush1.msra.mxu0 0.0
    %2566 = vmatprep.subr.mxu0 0.0
    %2567 = vmatpush1.msra.mxu0 0.0
    %2568 = vmatprep.subr.mxu0 0.0
    %2569 = vmatpush1.msra.mxu0 0.0
    %2570 = vmatprep.subr.mxu0 0.0
    %2571 = vmatpush1.msra.mxu0 0.0
    %2572 = vmatprep.subr.mxu0 0.0
    %2573 = vmatpush1.msra.mxu0 0.0
    %2574 = vmatprep.subr.mxu0 0.0
    %2575 = vmatpush1.msra.mxu0 0.0
    %2576 = vmatprep.subr.mxu0 0.0
    %2577 = vmatpush1.msra.mxu0 0.0
    %2578 = vmatprep.mubr.f32.mxu0 0.0
    %2579 = vmatmul.mubr.f32.gmra.mrb[0].mxu0 %v2512
    %v2580 = vpop.f32.mrb[0].mxu0
    %v2581 = vadd.f32 0.0, %v2580
    %v2582 = vpop.f32.mrb[0].mxu0
    %2583 = vdwg.mxu0
    %2584 = vrot.lane.b32.xlu0 %v1999, 56
    %v2585 = vpop.permute.xlu0 %2584
    %v2588 = vsel %vm225, %v2507, 0
    %2590 = vmatprep.subr.mxu0 0.0
    %2591 = vmatpush1.msra.mxu0 %v2585
    %2592 = vmatprep.subr.mxu0 0.0
    %2593 = vmatpush1.msra.mxu0 0.0
    %2594 = vmatprep.subr.mxu0 0.0
    %2595 = vmatpush1.msra.mxu0 0.0
    %2596 = vmatprep.subr.mxu0 0.0
    %2597 = vmatpush1.msra.mxu0 0.0
    %2598 = vmatprep.subr.mxu0 0.0
    %2599 = vmatpush1.msra.mxu0 0.0
    %2600 = vmatprep.subr.mxu0 0.0
    %2601 = vmatpush1.msra.mxu0 0.0
    %2602 = vmatprep.subr.mxu0 0.0
    %2603 = vmatpush1.msra.mxu0 0.0
    %2604 = vmatprep.subr.mxu0 0.0
    %2605 = vmatpush1.msra.mxu0 0.0
    %2606 = vmatprep.subr.mxu0 0.0
    %2607 = vmatpush1.msra.mxu0 0.0
    %2608 = vmatprep.subr.mxu0 0.0
    %2609 = vmatpush1.msra.mxu0 0.0
    %2610 = vmatprep.subr.mxu0 0.0
    %2611 = vmatpush1.msra.mxu0 0.0
    %2612 = vmatprep.subr.mxu0 0.0
    %2613 = vmatpush1.msra.mxu0 0.0
    %2614 = vmatprep.subr.mxu0 0.0
    %2615 = vmatpush1.msra.mxu0 0.0
    %2616 = vmatprep.subr.mxu0 0.0
    %2617 = vmatpush1.msra.mxu0 0.0
    %2618 = vmatprep.subr.mxu0 0.0
    %2619 = vmatpush1.msra.mxu0 0.0
    %2620 = vmatprep.subr.mxu0 0.0
    %2621 = vmatpush1.msra.mxu0 0.0
    %2622 = vmatprep.subr.mxu0 0.0
    %2623 = vmatpush1.msra.mxu0 0.0
    %2624 = vmatprep.subr.mxu0 0.0
    %2625 = vmatpush1.msra.mxu0 0.0
    %2626 = vmatprep.subr.mxu0 0.0
    %2627 = vmatpush1.msra.mxu0 0.0
    %2628 = vmatprep.subr.mxu0 0.0
    %2629 = vmatpush1.msra.mxu0 0.0
    %2630 = vmatprep.subr.mxu0 0.0
    %2631 = vmatpush1.msra.mxu0 0.0
    %2632 = vmatprep.subr.mxu0 0.0
    %2633 = vmatpush1.msra.mxu0 0.0
    %2634 = vmatprep.subr.mxu0 0.0
    %2635 = vmatpush1.msra.mxu0 0.0
    %2636 = vmatprep.subr.mxu0 0.0
    %2637 = vmatpush1.msra.mxu0 0.0
    %2638 = vmatprep.subr.mxu0 0.0
    %2639 = vmatpush1.msra.mxu0 0.0
    %2640 = vmatprep.subr.mxu0 0.0
    %2641 = vmatpush1.msra.mxu0 0.0
    %2642 = vmatprep.subr.mxu0 0.0
    %2643 = vmatpush1.msra.mxu0 0.0
    %2644 = vmatprep.subr.mxu0 0.0
    %2645 = vmatpush1.msra.mxu0 0.0
    %2646 = vmatprep.subr.mxu0 0.0
    %2647 = vmatpush1.msra.mxu0 0.0
    %2648 = vmatprep.subr.mxu0 0.0
    %2649 = vmatpush1.msra.mxu0 0.0
    %2650 = vmatprep.subr.mxu0 0.0
    %2651 = vmatpush1.msra.mxu0 0.0
    %2652 = vmatprep.subr.mxu0 0.0
    %2653 = vmatpush1.msra.mxu0 0.0
    %2654 = vmatprep.mubr.f32.mxu0 0.0
    %2655 = vmatmul.mubr.f32.gmra.mrb[0].mxu0 %v2588
    %v2656 = vpop.f32.mrb[0].mxu0
    %v2657 = vadd.f32 0.0, %v2656
    %v2658 = vpop.f32.mrb[0].mxu0
    %2659 = vdwg.mxu0
    %2660 = vrot.lane.b32.xlu0 %v1996, 112
    %v2661 = vpop.permute.xlu0 %2660
    %2662 = vrot.lane.b32.xlu0 %v1996, 80
    %v2663 = vpop.permute.xlu0 %2662
    %v2664 = vsel %vm225, %v2661, 0
    %v2666 = vsel %vm225, %v2663, 0
    %2668 = vmatprep.subr.mxu0 0.0
    %2669 = vmatpush1.xpose.msra.mxu0 %v2666
    %2670 = vmatprep.subr.mxu0 0.0
    %2671 = vmatpush1.xpose.msra.mxu0 0.0
    %2672 = vmatprep.subr.mxu0 0.0
    %2673 = vmatpush1.xpose.msra.mxu0 0.0
    %2674 = vmatprep.subr.mxu0 0.0
    %2675 = vmatpush1.xpose.msra.mxu0 0.0
    %2676 = vmatprep.subr.mxu0 0.0
    %2677 = vmatpush1.xpose.msra.mxu0 0.0
    %2678 = vmatprep.subr.mxu0 0.0
    %2679 = vmatpush1.xpose.msra.mxu0 0.0
    %2680 = vmatprep.subr.mxu0 0.0
    %2681 = vmatpush1.xpose.msra.mxu0 0.0
    %2682 = vmatprep.subr.mxu0 0.0
    %2683 = vmatpush1.xpose.msra.mxu0 0.0
    %2684 = vmatprep.subr.mxu0 0.0
    %2685 = vmatpush1.xpose.msra.mxu0 0.0
    %2686 = vmatprep.subr.mxu0 0.0
    %2687 = vmatpush1.xpose.msra.mxu0 0.0
    %2688 = vmatprep.subr.mxu0 0.0
    %2689 = vmatpush1.xpose.msra.mxu0 0.0
    %2690 = vmatprep.subr.mxu0 0.0
    %2691 = vmatpush1.xpose.msra.mxu0 0.0
    %2692 = vmatprep.subr.mxu0 0.0
    %2693 = vmatpush1.xpose.msra.mxu0 0.0
    %2694 = vmatprep.subr.mxu0 0.0
    %2695 = vmatpush1.xpose.msra.mxu0 0.0
    %2696 = vmatprep.subr.mxu0 0.0
    %2697 = vmatpush1.xpose.msra.mxu0 0.0
    %2698 = vmatprep.subr.mxu0 0.0
    %2699 = vmatpush1.xpose.msra.mxu0 0.0
    %2700 = vmatprep.subr.mxu0 0.0
    %2701 = vmatpush1.xpose.msra.mxu0 0.0
    %2702 = vmatprep.subr.mxu0 0.0
    %2703 = vmatpush1.xpose.msra.mxu0 0.0
    %2704 = vmatprep.subr.mxu0 0.0
    %2705 = vmatpush1.xpose.msra.mxu0 0.0
    %2706 = vmatprep.subr.mxu0 0.0
    %2707 = vmatpush1.xpose.msra.mxu0 0.0
    %2708 = vmatprep.subr.mxu0 0.0
    %2709 = vmatpush1.xpose.msra.mxu0 0.0
    %2710 = vmatprep.subr.mxu0 0.0
    %2711 = vmatpush1.xpose.msra.mxu0 0.0
    %2712 = vmatprep.subr.mxu0 0.0
    %2713 = vmatpush1.xpose.msra.mxu0 0.0
    %2714 = vmatprep.subr.mxu0 0.0
    %2715 = vmatpush1.xpose.msra.mxu0 0.0
    %2716 = vmatprep.subr.mxu0 0.0
    %2717 = vmatpush1.xpose.msra.mxu0 0.0
    %2718 = vmatprep.subr.mxu0 0.0
    %2719 = vmatpush1.xpose.msra.mxu0 0.0
    %2720 = vmatprep.subr.mxu0 0.0
    %2721 = vmatpush1.xpose.msra.mxu0 0.0
    %2722 = vmatprep.subr.mxu0 0.0
    %2723 = vmatpush1.xpose.msra.mxu0 0.0
    %2724 = vmatprep.subr.mxu0 0.0
    %2725 = vmatpush1.xpose.msra.mxu0 0.0
    %2726 = vmatprep.subr.mxu0 0.0
    %2727 = vmatpush1.xpose.msra.mxu0 0.0
    %2728 = vmatprep.subr.mxu0 0.0
    %2729 = vmatpush1.xpose.msra.mxu0 0.0
    %2730 = vmatprep.subr.mxu0 0.0
    %2731 = vmatpush1.xpose.msra.mxu0 0.0
    %2732 = vmatprep.mubr.f32.mxu0 0.0
    %2733 = vmatmul.mubr.f32.gmra.mrb[0].mxu0 %v2664
    %v2734 = vpop.f32.mrb[0].mxu0
    %v2735 = vadd.f32 %v215, %v2734
    %v2736 = vpop.f32.mrb[0].mxu0
    %2737 = vdwg.mxu0
    %2738 = vrot.lane.b32.xlu0 %v1999, 112
    %v2739 = vpop.permute.xlu0 %2738
    %2740 = vrot.lane.b32.xlu0 %v1999, 80
    %v2741 = vpop.permute.xlu0 %2740
    %v2742 = vsel %vm225, %v2739, 0
    %v2744 = vsel %vm225, %v2741, 0
    %2746 = vmatprep.subr.mxu0 0.0
    %2747 = vmatpush1.xpose.msra.mxu0 %v2744
    %2748 = vmatprep.subr.mxu0 0.0
    %2749 = vmatpush1.xpose.msra.mxu0 0.0
    %2750 = vmatprep.subr.mxu0 0.0
    %2751 = vmatpush1.xpose.msra.mxu0 0.0
    %2752 = vmatprep.subr.mxu0 0.0
    %2753 = vmatpush1.xpose.msra.mxu0 0.0
    %2754 = vmatprep.subr.mxu0 0.0
    %2755 = vmatpush1.xpose.msra.mxu0 0.0
    %2756 = vmatprep.subr.mxu0 0.0
    %2757 = vmatpush1.xpose.msra.mxu0 0.0
    %2758 = vmatprep.subr.mxu0 0.0
    %2759 = vmatpush1.xpose.msra.mxu0 0.0
    %2760 = vmatprep.subr.mxu0 0.0
    %2761 = vmatpush1.xpose.msra.mxu0 0.0
    %2762 = vmatprep.subr.mxu0 0.0
    %2763 = vmatpush1.xpose.msra.mxu0 0.0
    %2764 = vmatprep.subr.mxu0 0.0
    %2765 = vmatpush1.xpose.msra.mxu0 0.0
    %2766 = vmatprep.subr.mxu0 0.0
    %2767 = vmatpush1.xpose.msra.mxu0 0.0
    %2768 = vmatprep.subr.mxu0 0.0
    %2769 = vmatpush1.xpose.msra.mxu0 0.0
    %2770 = vmatprep.subr.mxu0 0.0
    %2771 = vmatpush1.xpose.msra.mxu0 0.0
    %2772 = vmatprep.subr.mxu0 0.0
    %2773 = vmatpush1.xpose.msra.mxu0 0.0
    %2774 = vmatprep.subr.mxu0 0.0
    %2775 = vmatpush1.xpose.msra.mxu0 0.0
    %2776 = vmatprep.subr.mxu0 0.0
    %2777 = vmatpush1.xpose.msra.mxu0 0.0
    %2778 = vmatprep.subr.mxu0 0.0
    %2779 = vmatpush1.xpose.msra.mxu0 0.0
    %2780 = vmatprep.subr.mxu0 0.0
    %2781 = vmatpush1.xpose.msra.mxu0 0.0
    %2782 = vmatprep.subr.mxu0 0.0
    %2783 = vmatpush1.xpose.msra.mxu0 0.0
    %2784 = vmatprep.subr.mxu0 0.0
    %2785 = vmatpush1.xpose.msra.mxu0 0.0
    %2786 = vmatprep.subr.mxu0 0.0
    %2787 = vmatpush1.xpose.msra.mxu0 0.0
    %2788 = vmatprep.subr.mxu0 0.0
    %2789 = vmatpush1.xpose.msra.mxu0 0.0
    %2790 = vmatprep.subr.mxu0 0.0
    %2791 = vmatpush1.xpose.msra.mxu0 0.0
    %2792 = vmatprep.subr.mxu0 0.0
    %2793 = vmatpush1.xpose.msra.mxu0 0.0
    %2794 = vmatprep.subr.mxu0 0.0
    %2795 = vmatpush1.xpose.msra.mxu0 0.0
    %2796 = vmatprep.subr.mxu0 0.0
    %2797 = vmatpush1.xpose.msra.mxu0 0.0
    %2798 = vmatprep.subr.mxu0 0.0
    %2799 = vmatpush1.xpose.msra.mxu0 0.0
    %2800 = vmatprep.subr.mxu0 0.0
    %2801 = vmatpush1.xpose.msra.mxu0 0.0
    %2802 = vmatprep.subr.mxu0 0.0
    %2803 = vmatpush1.xpose.msra.mxu0 0.0
    %2804 = vmatprep.subr.mxu0 0.0
    %2805 = vmatpush1.xpose.msra.mxu0 0.0
    %2806 = vmatprep.subr.mxu0 0.0
    %2807 = vmatpush1.xpose.msra.mxu0 0.0
    %2808 = vmatprep.subr.mxu0 0.0
    %2809 = vmatpush1.xpose.msra.mxu0 0.0
    %2810 = vmatprep.mubr.f32.mxu0 0.0
    %2811 = vmatmul.mubr.f32.gmra.mrb[0].mxu0 %v2742
    %v2812 = vpop.f32.mrb[0].mxu0
    %v2813 = vadd.f32 %v219, %v2812
    %v2814 = vpop.f32.mrb[0].mxu0
    %2815 = vdwg.mxu0
    %v2816 = vsel %vm225, %v2735, -inf
    %2817 = vmax.xlane.f32.xlu0 %v2816
    %v2818 = vpop.xlane.xlu0 %2817
    %v2819 = vsel %vm225, %v2813, -inf
    %2820 = vmax.xlane.f32.xlu0 %v2819
    %v2821 = vpop.xlane.xlu0 %2820
    %v2822 = vsub.f32 %v2735, %v2818
    %v2823 = vsub.f32 %v2813, %v2821
    %v2824 = vmul.f32 %v2822, 1.442695
    %v2825 = vpow.pop %v2824
    %v2826 = vmul.f32 %v2823, 1.442695
    %v2827 = vpow.pop %v2826
    %v2828 = vsel %vm225, %v2825, 0.0
    %2829 = vadd.xlane.f32.xlu0 %v2828
    %v2830 = vpop.xlane.xlu0 %2829
    %v2831 = vsel %vm225, %v2827, 0.0
    %2832 = vadd.xlane.f32.xlu0 %v2831
    %v2833 = vpop.xlane.xlu0 %2832
    %v2834 = vrcp.pop %v2830
    %v2835 = vrcp.pop %v2833
    %v2836 = vmul.f32 %v2825, %v2834
    %v2837 = vmul.f32 %v2827, %v2835
    %2838 = vrot.lane.b32.xlu0 %v1996, 48
    %v2839 = vpop.permute.xlu0 %2838
    %v2842 = vsel %vm225, %v2836, 0
    %2844 = vmatprep.subr.mxu0 0.0
    %2845 = vmatpush1.msra.mxu0 %v2839
    %2846 = vmatprep.subr.mxu0 0.0
    %2847 = vmatpush1.msra.mxu0 0.0
    %2848 = vmatprep.subr.mxu0 0.0
    %2849 = vmatpush1.msra.mxu0 0.0
    %2850 = vmatprep.subr.mxu0 0.0
    %2851 = vmatpush1.msra.mxu0 0.0
    %2852 = vmatprep.subr.mxu0 0.0
    %2853 = vmatpush1.msra.mxu0 0.0
    %2854 = vmatprep.subr.mxu0 0.0
    %2855 = vmatpush1.msra.mxu0 0.0
    %2856 = vmatprep.subr.mxu0 0.0
    %2857 = vmatpush1.msra.mxu0 0.0
    %2858 = vmatprep.subr.mxu0 0.0
    %2859 = vmatpush1.msra.mxu0 0.0
    %2860 = vmatprep.subr.mxu0 0.0
    %2861 = vmatpush1.msra.mxu0 0.0
    %2862 = vmatprep.subr.mxu0 0.0
    %2863 = vmatpush1.msra.mxu0 0.0
    %2864 = vmatprep.subr.mxu0 0.0
    %2865 = vmatpush1.msra.mxu0 0.0
    %2866 = vmatprep.subr.mxu0 0.0
    %2867 = vmatpush1.msra.mxu0 0.0
    %2868 = vmatprep.subr.mxu0 0.0
    %2869 = vmatpush1.msra.mxu0 0.0
    %2870 = vmatprep.subr.mxu0 0.0
    %2871 = vmatpush1.msra.mxu0 0.0
    %2872 = vmatprep.subr.mxu0 0.0
    %2873 = vmatpush1.msra.mxu0 0.0
    %2874 = vmatprep.subr.mxu0 0.0
    %2875 = vmatpush1.msra.mxu0 0.0
    %2876 = vmatprep.subr.mxu0 0.0
    %2877 = vmatpush1.msra.mxu0 0.0
    %2878 = vmatprep.subr.mxu0 0.0
    %2879 = vmatpush1.msra.mxu0 0.0
    %2880 = vmatprep.subr.mxu0 0.0
    %2881 = vmatpush1.msra.mxu0 0.0
    %2882 = vmatprep.subr.mxu0 0.0
    %2883 = vmatpush1.msra.mxu0 0.0
    %2884 = vmatprep.subr.mxu0 0.0
    %2885 = vmatpush1.msra.mxu0 0.0
    %2886 = vmatprep.subr.mxu0 0.0
    %2887 = vmatpush1.msra.mxu0 0.0
    %2888 = vmatprep.subr.mxu0 0.0
    %2889 = vmatpush1.msra.mxu0 0.0
    %2890 = vmatprep.subr.mxu0 0.0
    %2891 = vmatpush1.msra.mxu0 0.0
    %2892 = vmatprep.subr.mxu0 0.0
    %2893 = vmatpush1.msra.mxu0 0.0
    %2894 = vmatprep.subr.mxu0 0.0
    %2895 = vmatpush1.msra.mxu0 0.0
    %2896 = vmatprep.subr.mxu0 0.0
    %2897 = vmatpush1.msra.mxu0 0.0
    %2898 = vmatprep.subr.mxu0 0.0
    %2899 = vmatpush1.msra.mxu0 0.0
    %2900 = vmatprep.subr.mxu0 0.0
    %2901 = vmatpush1.msra.mxu0 0.0
    %2902 = vmatprep.subr.mxu0 0.0
    %2903 = vmatpush1.msra.mxu0 0.0
    %2904 = vmatprep.subr.mxu0 0.0
    %2905 = vmatpush1.msra.mxu0 0.0
    %2906 = vmatprep.subr.mxu0 0.0
    %2907 = vmatpush1.msra.mxu0 0.0
    %2908 = vmatprep.mubr.f32.mxu0 0.0
    %2909 = vmatmul.mubr.f32.gmra.mrb[0].mxu0 %v2842
    %v2910 = vpop.f32.mrb[0].mxu0
    %v2911 = vadd.f32 0.0, %v2910
    %v2912 = vpop.f32.mrb[0].mxu0
    %2913 = vdwg.mxu0
    %2914 = vrot.lane.b32.xlu0 %v1999, 48
    %v2915 = vpop.permute.xlu0 %2914
    %v2918 = vsel %vm225, %v2837, 0
    %2920 = vmatprep.subr.mxu0 0.0
    %2921 = vmatpush1.msra.mxu0 %v2915
    %2922 = vmatprep.subr.mxu0 0.0
    %2923 = vmatpush1.msra.mxu0 0.0
    %2924 = vmatprep.subr.mxu0 0.0
    %2925 = vmatpush1.msra.mxu0 0.0
    %2926 = vmatprep.subr.mxu0 0.0
    %2927 = vmatpush1.msra.mxu0 0.0
    %2928 = vmatprep.subr.mxu0 0.0
    %2929 = vmatpush1.msra.mxu0 0.0
    %2930 = vmatprep.subr.mxu0 0.0
    %2931 = vmatpush1.msra.mxu0 0.0
    %2932 = vmatprep.subr.mxu0 0.0
    %2933 = vmatpush1.msra.mxu0 0.0
    %2934 = vmatprep.subr.mxu0 0.0
    %2935 = vmatpush1.msra.mxu0 0.0
    %2936 = vmatprep.subr.mxu0 0.0
    %2937 = vmatpush1.msra.mxu0 0.0
    %2938 = vmatprep.subr.mxu0 0.0
    %2939 = vmatpush1.msra.mxu0 0.0
    %2940 = vmatprep.subr.mxu0 0.0
    %2941 = vmatpush1.msra.mxu0 0.0
    %2942 = vmatprep.subr.mxu0 0.0
    %2943 = vmatpush1.msra.mxu0 0.0
    %2944 = vmatprep.subr.mxu0 0.0
    %2945 = vmatpush1.msra.mxu0 0.0
    %2946 = vmatprep.subr.mxu0 0.0
    %2947 = vmatpush1.msra.mxu0 0.0
    %2948 = vmatprep.subr.mxu0 0.0
    %2949 = vmatpush1.msra.mxu0 0.0
    %2950 = vmatprep.subr.mxu0 0.0
    %2951 = vmatpush1.msra.mxu0 0.0
    %2952 = vmatprep.subr.mxu0 0.0
    %2953 = vmatpush1.msra.mxu0 0.0
    %2954 = vmatprep.subr.mxu0 0.0
    %2955 = vmatpush1.msra.mxu0 0.0
    %2956 = vmatprep.subr.mxu0 0.0
    %2957 = vmatpush1.msra.mxu0 0.0
    %2958 = vmatprep.subr.mxu0 0.0
    %2959 = vmatpush1.msra.mxu0 0.0
    %2960 = vmatprep.subr.mxu0 0.0
    %2961 = vmatpush1.msra.mxu0 0.0
    %2962 = vmatprep.subr.mxu0 0.0
    %2963 = vmatpush1.msra.mxu0 0.0
    %2964 = vmatprep.subr.mxu0 0.0
    %2965 = vmatpush1.msra.mxu0 0.0
    %2966 = vmatprep.subr.mxu0 0.0
    %2967 = vmatpush1.msra.mxu0 0.0
    %2968 = vmatprep.subr.mxu0 0.0
    %2969 = vmatpush1.msra.mxu0 0.0
    %2970 = vmatprep.subr.mxu0 0.0
    %2971 = vmatpush1.msra.mxu0 0.0
    %2972 = vmatprep.subr.mxu0 0.0
    %2973 = vmatpush1.msra.mxu0 0.0
    %2974 = vmatprep.subr.mxu0 0.0
    %2975 = vmatpush1.msra.mxu0 0.0
    %2976 = vmatprep.subr.mxu0 0.0
    %2977 = vmatpush1.msra.mxu0 0.0
    %2978 = vmatprep.subr.mxu0 0.0
    %2979 = vmatpush1.msra.mxu0 0.0
    %2980 = vmatprep.subr.mxu0 0.0
    %2981 = vmatpush1.msra.mxu0 0.0
    %2982 = vmatprep.subr.mxu0 0.0
    %2983 = vmatpush1.msra.mxu0 0.0
    %2984 = vmatprep.mubr.f32.mxu0 0.0
    %2985 = vmatmul.mubr.f32.gmra.mrb[0].mxu0 %v2918
    %v2986 = vpop.f32.mrb[0].mxu0
    %v2987 = vadd.f32 0.0, %v2986
    %v2988 = vpop.f32.mrb[0].mxu0
    %2989 = vdwg.mxu0
    %2990 = vrot.lane.b32.xlu0 %v1996, 104
    %v2991 = vpop.permute.xlu0 %2990
    %2992 = vrot.lane.b32.xlu0 %v1996, 72
    %v2993 = vpop.permute.xlu0 %2992
    %v2994 = vsel %vm225, %v2991, 0
    %v2996 = vsel %vm225, %v2993, 0
    %2998 = vmatprep.subr.mxu0 0.0
    %2999 = vmatpush1.xpose.msra.mxu0 %v2996
    %3000 = vmatprep.subr.mxu0 0.0
    %3001 = vmatpush1.xpose.msra.mxu0 0.0
    %3002 = vmatprep.subr.mxu0 0.0
    %3003 = vmatpush1.xpose.msra.mxu0 0.0
    %3004 = vmatprep.subr.mxu0 0.0
    %3005 = vmatpush1.xpose.msra.mxu0 0.0
    %3006 = vmatprep.subr.mxu0 0.0
    %3007 = vmatpush1.xpose.msra.mxu0 0.0
    %3008 = vmatprep.subr.mxu0 0.0
    %3009 = vmatpush1.xpose.msra.mxu0 0.0
    %3010 = vmatprep.subr.mxu0 0.0
    %3011 = vmatpush1.xpose.msra.mxu0 0.0
    %3012 = vmatprep.subr.mxu0 0.0
    %3013 = vmatpush1.xpose.msra.mxu0 0.0
    %3014 = vmatprep.subr.mxu0 0.0
    %3015 = vmatpush1.xpose.msra.mxu0 0.0
    %3016 = vmatprep.subr.mxu0 0.0
    %3017 = vmatpush1.xpose.msra.mxu0 0.0
    %3018 = vmatprep.subr.mxu0 0.0
    %3019 = vmatpush1.xpose.msra.mxu0 0.0
    %3020 = vmatprep.subr.mxu0 0.0
    %3021 = vmatpush1.xpose.msra.mxu0 0.0
    %3022 = vmatprep.subr.mxu0 0.0
    %3023 = vmatpush1.xpose.msra.mxu0 0.0
    %3024 = vmatprep.subr.mxu0 0.0
    %3025 = vmatpush1.xpose.msra.mxu0 0.0
    %3026 = vmatprep.subr.mxu0 0.0
    %3027 = vmatpush1.xpose.msra.mxu0 0.0
    %3028 = vmatprep.subr.mxu0 0.0
    %3029 = vmatpush1.xpose.msra.mxu0 0.0
    %3030 = vmatprep.subr.mxu0 0.0
    %3031 = vmatpush1.xpose.msra.mxu0 0.0
    %3032 = vmatprep.subr.mxu0 0.0
    %3033 = vmatpush1.xpose.msra.mxu0 0.0
    %3034 = vmatprep.subr.mxu0 0.0
    %3035 = vmatpush1.xpose.msra.mxu0 0.0
    %3036 = vmatprep.subr.mxu0 0.0
    %3037 = vmatpush1.xpose.msra.mxu0 0.0
    %3038 = vmatprep.subr.mxu0 0.0
    %3039 = vmatpush1.xpose.msra.mxu0 0.0
    %3040 = vmatprep.subr.mxu0 0.0
    %3041 = vmatpush1.xpose.msra.mxu0 0.0
    %3042 = vmatprep.subr.mxu0 0.0
    %3043 = vmatpush1.xpose.msra.mxu0 0.0
    %3044 = vmatprep.subr.mxu0 0.0
    %3045 = vmatpush1.xpose.msra.mxu0 0.0
    %3046 = vmatprep.subr.mxu0 0.0
    %3047 = vmatpush1.xpose.msra.mxu0 0.0
    %3048 = vmatprep.subr.mxu0 0.0
    %3049 = vmatpush1.xpose.msra.mxu0 0.0
    %3050 = vmatprep.subr.mxu0 0.0
    %3051 = vmatpush1.xpose.msra.mxu0 0.0
    %3052 = vmatprep.subr.mxu0 0.0
    %3053 = vmatpush1.xpose.msra.mxu0 0.0
    %3054 = vmatprep.subr.mxu0 0.0
    %3055 = vmatpush1.xpose.msra.mxu0 0.0
    %3056 = vmatprep.subr.mxu0 0.0
    %3057 = vmatpush1.xpose.msra.mxu0 0.0
    %3058 = vmatprep.subr.mxu0 0.0
    %3059 = vmatpush1.xpose.msra.mxu0 0.0
    %3060 = vmatprep.subr.mxu0 0.0
    %3061 = vmatpush1.xpose.msra.mxu0 0.0
    %3062 = vmatprep.mubr.f32.mxu0 0.0
    %3063 = vmatmul.mubr.f32.gmra.mrb[0].mxu0 %v2994
    %v3064 = vpop.f32.mrb[0].mxu0
    %v3065 = vadd.f32 %v215, %v3064
    %v3066 = vpop.f32.mrb[0].mxu0
    %3067 = vdwg.mxu0
    %3068 = vrot.lane.b32.xlu0 %v1999, 104
    %v3069 = vpop.permute.xlu0 %3068
    %3070 = vrot.lane.b32.xlu0 %v1999, 72
    %v3071 = vpop.permute.xlu0 %3070
    %v3072 = vsel %vm225, %v3069, 0
    %v3074 = vsel %vm225, %v3071, 0
    %3076 = vmatprep.subr.mxu0 0.0
    %3077 = vmatpush1.xpose.msra.mxu0 %v3074
    %3078 = vmatprep.subr.mxu0 0.0
    %3079 = vmatpush1.xpose.msra.mxu0 0.0
    %3080 = vmatprep.subr.mxu0 0.0
    %3081 = vmatpush1.xpose.msra.mxu0 0.0
    %3082 = vmatprep.subr.mxu0 0.0
    %3083 = vmatpush1.xpose.msra.mxu0 0.0
    %3084 = vmatprep.subr.mxu0 0.0
    %3085 = vmatpush1.xpose.msra.mxu0 0.0
    %3086 = vmatprep.subr.mxu0 0.0
    %3087 = vmatpush1.xpose.msra.mxu0 0.0
    %3088 = vmatprep.subr.mxu0 0.0
    %3089 = vmatpush1.xpose.msra.mxu0 0.0
    %3090 = vmatprep.subr.mxu0 0.0
    %3091 = vmatpush1.xpose.msra.mxu0 0.0
    %3092 = vmatprep.subr.mxu0 0.0
    %3093 = vmatpush1.xpose.msra.mxu0 0.0
    %3094 = vmatprep.subr.mxu0 0.0
    %3095 = vmatpush1.xpose.msra.mxu0 0.0
    %3096 = vmatprep.subr.mxu0 0.0
    %3097 = vmatpush1.xpose.msra.mxu0 0.0
    %3098 = vmatprep.subr.mxu0 0.0
    %3099 = vmatpush1.xpose.msra.mxu0 0.0
    %3100 = vmatprep.subr.mxu0 0.0
    %3101 = vmatpush1.xpose.msra.mxu0 0.0
    %3102 = vmatprep.subr.mxu0 0.0
    %3103 = vmatpush1.xpose.msra.mxu0 0.0
    %3104 = vmatprep.subr.mxu0 0.0
    %3105 = vmatpush1.xpose.msra.mxu0 0.0
    %3106 = vmatprep.subr.mxu0 0.0
    %3107 = vmatpush1.xpose.msra.mxu0 0.0
    %3108 = vmatprep.subr.mxu0 0.0
    %3109 = vmatpush1.xpose.msra.mxu0 0.0
    %3110 = vmatprep.subr.mxu0 0.0
    %3111 = vmatpush1.xpose.msra.mxu0 0.0
    %3112 = vmatprep.subr.mxu0 0.0
    %3113 = vmatpush1.xpose.msra.mxu0 0.0
    %3114 = vmatprep.subr.mxu0 0.0
    %3115 = vmatpush1.xpose.msra.mxu0 0.0
    %3116 = vmatprep.subr.mxu0 0.0
    %3117 = vmatpush1.xpose.msra.mxu0 0.0
    %3118 = vmatprep.subr.mxu0 0.0
    %3119 = vmatpush1.xpose.msra.mxu0 0.0
    %3120 = vmatprep.subr.mxu0 0.0
    %3121 = vmatpush1.xpose.msra.mxu0 0.0
    %3122 = vmatprep.subr.mxu0 0.0
    %3123 = vmatpush1.xpose.msra.mxu0 0.0
    %3124 = vmatprep.subr.mxu0 0.0
    %3125 = vmatpush1.xpose.msra.mxu0 0.0
    %3126 = vmatprep.subr.mxu0 0.0
    %3127 = vmatpush1.xpose.msra.mxu0 0.0
    %3128 = vmatprep.subr.mxu0 0.0
    %3129 = vmatpush1.xpose.msra.mxu0 0.0
    %3130 = vmatprep.subr.mxu0 0.0
    %3131 = vmatpush1.xpose.msra.mxu0 0.0
    %3132 = vmatprep.subr.mxu0 0.0
    %3133 = vmatpush1.xpose.msra.mxu0 0.0
    %3134 = vmatprep.subr.mxu0 0.0
    %3135 = vmatpush1.xpose.msra.mxu0 0.0
    %3136 = vmatprep.subr.mxu0 0.0
    %3137 = vmatpush1.xpose.msra.mxu0 0.0
    %3138 = vmatprep.subr.mxu0 0.0
    %3139 = vmatpush1.xpose.msra.mxu0 0.0
    %3140 = vmatprep.mubr.f32.mxu0 0.0
    %3141 = vmatmul.mubr.f32.gmra.mrb[0].mxu0 %v3072
    %v3142 = vpop.f32.mrb[0].mxu0
    %v3143 = vadd.f32 %v219, %v3142
    %v3144 = vpop.f32.mrb[0].mxu0
    %3145 = vdwg.mxu0
    %v3146 = vsel %vm225, %v3065, -inf
    %3147 = vmax.xlane.f32.xlu0 %v3146
    %v3148 = vpop.xlane.xlu0 %3147
    %v3149 = vsel %vm225, %v3143, -inf
    %3150 = vmax.xlane.f32.xlu0 %v3149
    %v3151 = vpop.xlane.xlu0 %3150
    %v3152 = vsub.f32 %v3065, %v3148
    %v3153 = vsub.f32 %v3143, %v3151
    %v3154 = vmul.f32 %v3152, 1.442695
    %v3155 = vpow.pop %v3154
    %v3156 = vmul.f32 %v3153, 1.442695
    %v3157 = vpow.pop %v3156
    %v3158 = vsel %vm225, %v3155, 0.0
    %3159 = vadd.xlane.f32.xlu0 %v3158
    %v3160 = vpop.xlane.xlu0 %3159
    %v3161 = vsel %vm225, %v3157, 0.0
    %3162 = vadd.xlane.f32.xlu0 %v3161
    %v3163 = vpop.xlane.xlu0 %3162
    %v3164 = vrcp.pop %v3160
    %v3165 = vrcp.pop %v3163
    %v3166 = vmul.f32 %v3155, %v3164
    %v3167 = vmul.f32 %v3157, %v3165
    %3168 = vrot.lane.b32.xlu0 %v1996, 40
    %v3169 = vpop.permute.xlu0 %3168
    %v3172 = vsel %vm225, %v3166, 0
    %3174 = vmatprep.subr.mxu0 0.0
    %3175 = vmatpush1.msra.mxu0 %v3169
    %3176 = vmatprep.subr.mxu0 0.0
    %3177 = vmatpush1.msra.mxu0 0.0
    %3178 = vmatprep.subr.mxu0 0.0
    %3179 = vmatpush1.msra.mxu0 0.0
    %3180 = vmatprep.subr.mxu0 0.0
    %3181 = vmatpush1.msra.mxu0 0.0
    %3182 = vmatprep.subr.mxu0 0.0
    %3183 = vmatpush1.msra.mxu0 0.0
    %3184 = vmatprep.subr.mxu0 0.0
    %3185 = vmatpush1.msra.mxu0 0.0
    %3186 = vmatprep.subr.mxu0 0.0
    %3187 = vmatpush1.msra.mxu0 0.0
    %3188 = vmatprep.subr.mxu0 0.0
    %3189 = vmatpush1.msra.mxu0 0.0
    %3190 = vmatprep.subr.mxu0 0.0
    %3191 = vmatpush1.msra.mxu0 0.0
    %3192 = vmatprep.subr.mxu0 0.0
    %3193 = vmatpush1.msra.mxu0 0.0
    %3194 = vmatprep.subr.mxu0 0.0
    %3195 = vmatpush1.msra.mxu0 0.0
    %3196 = vmatprep.subr.mxu0 0.0
    %3197 = vmatpush1.msra.mxu0 0.0
    %3198 = vmatprep.subr.mxu0 0.0
    %3199 = vmatpush1.msra.mxu0 0.0
    %3200 = vmatprep.subr.mxu0 0.0
    %3201 = vmatpush1.msra.mxu0 0.0
    %3202 = vmatprep.subr.mxu0 0.0
    %3203 = vmatpush1.msra.mxu0 0.0
    %3204 = vmatprep.subr.mxu0 0.0
    %3205 = vmatpush1.msra.mxu0 0.0
    %3206 = vmatprep.subr.mxu0 0.0
    %3207 = vmatpush1.msra.mxu0 0.0
    %3208 = vmatprep.subr.mxu0 0.0
    %3209 = vmatpush1.msra.mxu0 0.0
    %3210 = vmatprep.subr.mxu0 0.0
    %3211 = vmatpush1.msra.mxu0 0.0
    %3212 = vmatprep.subr.mxu0 0.0
    %3213 = vmatpush1.msra.mxu0 0.0
    %3214 = vmatprep.subr.mxu0 0.0
    %3215 = vmatpush1.msra.mxu0 0.0
    %3216 = vmatprep.subr.mxu0 0.0
    %3217 = vmatpush1.msra.mxu0 0.0
    %3218 = vmatprep.subr.mxu0 0.0
    %3219 = vmatpush1.msra.mxu0 0.0
    %3220 = vmatprep.subr.mxu0 0.0
    %3221 = vmatpush1.msra.mxu0 0.0
    %3222 = vmatprep.subr.mxu0 0.0
    %3223 = vmatpush1.msra.mxu0 0.0
    %3224 = vmatprep.subr.mxu0 0.0
    %3225 = vmatpush1.msra.mxu0 0.0
    %3226 = vmatprep.subr.mxu0 0.0
    %3227 = vmatpush1.msra.mxu0 0.0
    %3228 = vmatprep.subr.mxu0 0.0
    %3229 = vmatpush1.msra.mxu0 0.0
    %3230 = vmatprep.subr.mxu0 0.0
    %3231 = vmatpush1.msra.mxu0 0.0
    %3232 = vmatprep.subr.mxu0 0.0
    %3233 = vmatpush1.msra.mxu0 0.0
    %3234 = vmatprep.subr.mxu0 0.0
    %3235 = vmatpush1.msra.mxu0 0.0
    %3236 = vmatprep.subr.mxu0 0.0
    %3237 = vmatpush1.msra.mxu0 0.0
    %3238 = vmatprep.mubr.f32.mxu0 0.0
    %3239 = vmatmul.mubr.f32.gmra.mrb[0].mxu0 %v3172
    %v3240 = vpop.f32.mrb[0].mxu0
    %v3241 = vadd.f32 0.0, %v3240
    %v3242 = vpop.f32.mrb[0].mxu0
    %3243 = vdwg.mxu0
    %3244 = vrot.lane.b32.xlu0 %v1999, 40
    %v3245 = vpop.permute.xlu0 %3244
    %v3248 = vsel %vm225, %v3167, 0
    %3250 = vmatprep.subr.mxu0 0.0
    %3251 = vmatpush1.msra.mxu0 %v3245
    %3252 = vmatprep.subr.mxu0 0.0
    %3253 = vmatpush1.msra.mxu0 0.0
    %3254 = vmatprep.subr.mxu0 0.0
    %3255 = vmatpush1.msra.mxu0 0.0
    %3256 = vmatprep.subr.mxu0 0.0
    %3257 = vmatpush1.msra.mxu0 0.0
    %3258 = vmatprep.subr.mxu0 0.0
    %3259 = vmatpush1.msra.mxu0 0.0
    %3260 = vmatprep.subr.mxu0 0.0
    %3261 = vmatpush1.msra.mxu0 0.0
    %3262 = vmatprep.subr.mxu0 0.0
    %3263 = vmatpush1.msra.mxu0 0.0
    %3264 = vmatprep.subr.mxu0 0.0
    %3265 = vmatpush1.msra.mxu0 0.0
    %3266 = vmatprep.subr.mxu0 0.0
    %3267 = vmatpush1.msra.mxu0 0.0
    %3268 = vmatprep.subr.mxu0 0.0
    %3269 = vmatpush1.msra.mxu0 0.0
    %3270 = vmatprep.subr.mxu0 0.0
    %3271 = vmatpush1.msra.mxu0 0.0
    %3272 = vmatprep.subr.mxu0 0.0
    %3273 = vmatpush1.msra.mxu0 0.0
    %3274 = vmatprep.subr.mxu0 0.0
    %3275 = vmatpush1.msra.mxu0 0.0
    %3276 = vmatprep.subr.mxu0 0.0
    %3277 = vmatpush1.msra.mxu0 0.0
    %3278 = vmatprep.subr.mxu0 0.0
    %3279 = vmatpush1.msra.mxu0 0.0
    %3280 = vmatprep.subr.mxu0 0.0
    %3281 = vmatpush1.msra.mxu0 0.0
    %3282 = vmatprep.subr.mxu0 0.0
    %3283 = vmatpush1.msra.mxu0 0.0
    %3284 = vmatprep.subr.mxu0 0.0
    %3285 = vmatpush1.msra.mxu0 0.0
    %3286 = vmatprep.subr.mxu0 0.0
    %3287 = vmatpush1.msra.mxu0 0.0
    %3288 = vmatprep.subr.mxu0 0.0
    %3289 = vmatpush1.msra.mxu0 0.0
    %3290 = vmatprep.subr.mxu0 0.0
    %3291 = vmatpush1.msra.mxu0 0.0
    %3292 = vmatprep.subr.mxu0 0.0
    %3293 = vmatpush1.msra.mxu0 0.0
    %3294 = vmatprep.subr.mxu0 0.0
    %3295 = vmatpush1.msra.mxu0 0.0
    %3296 = vmatprep.subr.mxu0 0.0
    %3297 = vmatpush1.msra.mxu0 0.0
    %3298 = vmatprep.subr.mxu0 0.0
    %3299 = vmatpush1.msra.mxu0 0.0
    %3300 = vmatprep.subr.mxu0 0.0
    %3301 = vmatpush1.msra.mxu0 0.0
    %3302 = vmatprep.subr.mxu0 0.0
    %3303 = vmatpush1.msra.mxu0 0.0
    %3304 = vmatprep.subr.mxu0 0.0
    %3305 = vmatpush1.msra.mxu0 0.0
    %3306 = vmatprep.subr.mxu0 0.0
    %3307 = vmatpush1.msra.mxu0 0.0
    %3308 = vmatprep.subr.mxu0 0.0
    %3309 = vmatpush1.msra.mxu0 0.0
    %3310 = vmatprep.subr.mxu0 0.0
    %3311 = vmatpush1.msra.mxu0 0.0
    %3312 = vmatprep.subr.mxu0 0.0
    %3313 = vmatpush1.msra.mxu0 0.0
    %3314 = vmatprep.mubr.f32.mxu0 0.0
    %3315 = vmatmul.mubr.f32.gmra.mrb[0].mxu0 %v3248
    %v3316 = vpop.f32.mrb[0].mxu0
    %v3317 = vadd.f32 0.0, %v3316
    %v3318 = vpop.f32.mrb[0].mxu0
    %3319 = vdwg.mxu0
    %3322 = vrot.lane.b32.xlu0 %v2581, 8
    %v3323 = vpop.permute.xlu0 %3322
    %3324 = vrot.lane.b32.xlu0 %v2657, 8
    %v3325 = vpop.permute.xlu0 %3324
    %3330 = vrot.lane.b32.xlu0 %v2911, 16
    %v3331 = vpop.permute.xlu0 %3330
    %3332 = vrot.lane.b32.xlu0 %v2987, 16
    %v3333 = vpop.permute.xlu0 %3332
    %3338 = vrot.lane.b32.xlu0 %v3241, 24
    %v3339 = vpop.permute.xlu0 %3338
    %3340 = vrot.lane.b32.xlu0 %v3317, 24
    %v3341 = vpop.permute.xlu0 %3340
    %v3344 = vsel %vm225, %v2251, %v3323
    %v3345 = vsel %vm225, %v2327, %v3325
    %v3346 = vsel %vm1567, %v3344, %v3331
    %v3347 = vsel %vm1567, %v3345, %v3333
    %v3348 = vsel %vm1570, %v3346, %v3339
    %v3349 = vsel %vm1570, %v3347, %v3341
    %v3350 = vpack.c.bf16 %v3349, %v3348
    %s3351 = scalar_lea.vmem %s6, 16
    %v3352 = vld [vmem:[%s3351] sm:$0xf]
    %v3353 = vld [vmem:[%s3351 + $0x4] sm:$0xf]
    %v3354 = vld [vmem:[%s3351 + $0x8] sm:$0xf]
    %v3355 = vld [vmem:[%s3351 + $0xc] sm:$0xf]
    %s3356 = scalar_lea.vmem %s7, 1
    %v3357 = vld [vmem:[%s3356] sm:$0x1]
    %v3359 = vlaneseq
    %v3360 = vshrl.u32 %v3359, 7
    %v3361 = vsub.s32 0, %v3360
    %v3362 = vrot.slane %v3357, %v3361
    %v3368 = vunpack.c.l.b16 %v3352
    %v3369 = vunpack.c.l.b16 %v3353
    %v3370 = vunpack.c.l.b16 %v3354
    %v3371 = vunpack.c.l.b16 %v3355
    %v3372 = vpack.c.b16 %v3369, %v3368
    %v3373 = vpack.c.b16 %v3371, %v3370
    %v3377 = vsel %vm76, %v3350, 0
    %3379 = vmatprep.subr.bf16.mxu0 0
    %3380 = vmatpush1.bf16.msra.mxu0 %v3372
    %3381 = vmatprep.subr.bf16.mxu0 0
    %3382 = vmatpush1.bf16.msra.mxu0 %v3373
    %3383 = vmatprep.subr.bf16.mxu0 0
    %3384 = vmatpush1.bf16.msra.mxu0 0
    %3385 = vmatprep.subr.bf16.mxu0 0
    %3386 = vmatpush1.bf16.msra.mxu0 0
    %3387 = vmatprep.subr.bf16.mxu0 0
    %3388 = vmatpush1.bf16.msra.mxu0 0
    %3389 = vmatprep.subr.bf16.mxu0 0
    %3390 = vmatpush1.bf16.msra.mxu0 0
    %3391 = vmatprep.subr.bf16.mxu0 0
    %3392 = vmatpush1.bf16.msra.mxu0 0
    %3393 = vmatprep.subr.bf16.mxu0 0
    %3394 = vmatpush1.bf16.msra.mxu0 0
    %3395 = vmatprep.subr.bf16.mxu0 0
    %3396 = vmatpush1.bf16.msra.mxu0 0
    %3397 = vmatprep.subr.bf16.mxu0 0
    %3398 = vmatpush1.bf16.msra.mxu0 0
    %3399 = vmatprep.subr.bf16.mxu0 0
    %3400 = vmatpush1.bf16.msra.mxu0 0
    %3401 = vmatprep.subr.bf16.mxu0 0
    %3402 = vmatpush1.bf16.msra.mxu0 0
    %3403 = vmatprep.subr.bf16.mxu0 0
    %3404 = vmatpush1.bf16.msra.mxu0 0
    %3405 = vmatprep.subr.bf16.mxu0 0
    %3406 = vmatpush1.bf16.msra.mxu0 0
    %3407 = vmatprep.subr.bf16.mxu0 0
    %3408 = vmatpush1.bf16.msra.mxu0 0
    %3409 = vmatprep.subr.bf16.mxu0 0
    %3410 = vmatpush1.bf16.msra.mxu0 0
    %3411 = vmatprep.mubr.bf16.mxu0 0
    %3412 = vmatmul.mubr.bf16.gmra.mrb[0].mxu0 %v3377
    %v3413 = vpop.f32.mrb[0].mxu0
    %v3414 = vadd.f32 %v3362, %v3413
    %v3415 = vpop.f32.mrb[0].mxu0
    %v3416 = vpop.f32.mrb[0].mxu0
    %v3417 = vadd.f32 %v3362, %v3416
    %v3418 = vpop.f32.mrb[0].mxu0
    %3419 = vdwg.mxu0
    %v3420 = vadd.f32 %v3414, %v1930
    %v3421 = vadd.f32 %v3417, %v1931
    %s3422 = scalar_lea.vmem %s8, 1
    %v3423 = vld [vmem:[%s3422] sm:$0x1]
    %s3424 = scalar_lea.vmem %s9, 1
    %v3425 = vld [vmem:[%s3424] sm:$0x1]
    %v3426 = vsel %vm76, %v3420, 0.0
    %3427 = vadd.xlane.f32.xlu0 %v3426
    %v3428 = vpop.xlane.xlu0 %3427
    %v3429 = vsel %vm76, %v3421, 0.0
    %3430 = vadd.xlane.f32.xlu0 %v3429
    %v3431 = vpop.xlane.xlu0 %3430
    %v3432 = vmul.f32 %v3428, %v83
    %v3433 = vmul.f32 %v3431, %v83
    %v3434 = vsub.f32 %v3420, %v3432
    %v3435 = vsub.f32 %v3421, %v3433
    %v3436 = vmul.f32 %v3434, %v3434
    %v3437 = vmul.f32 %v3435, %v3435
    %v3438 = vsel %vm76, %v3436, 0.0
    %3439 = vadd.xlane.f32.xlu0 %v3438
    %v3440 = vpop.xlane.xlu0 %3439
    %v3441 = vsel %vm76, %v3437, 0.0
    %3442 = vadd.xlane.f32.xlu0 %v3441
    %v3443 = vpop.xlane.xlu0 %3442
    %v3444 = vmul.f32 %v3440, %v83
    %v3445 = vmul.f32 %v3443, %v83
    %v3446 = vadd.f32 %v3444, 1e-12
    %v3447 = vadd.f32 %v3445, 1e-12
    %v3448 = vrsqrt.pop %v3446
    %v3449 = vrsqrt.pop %v3447
    %v3450 = vmul.f32 %v3434, %v3448
    %v3451 = vmul.f32 %v3435, %v3449
    %v3453 = vlaneseq
    %v3454 = vshrl.u32 %v3453, 7
    %v3455 = vsub.s32 0, %v3454
    %v3456 = vrot.slane %v3423, %v3455
    %v3458 = vmul.f32 %v3450, %v3456
    %v3459 = vmul.f32 %v3451, %v3456
    %v3461 = vlaneseq
    %v3462 = vshrl.u32 %v3461, 7
    %v3463 = vsub.s32 0, %v3462
    %v3464 = vrot.slane %v3425, %v3463
    %v3466 = vadd.f32 %v3458, %v3464
    %v3467 = vadd.f32 %v3459, %v3464
    %v3468 = vpack.c.bf16 %v3467, %v3466
    %s3469 = scalar_lea.vmem %s10, 16
    %v3470 = vld [vmem:[%s3469] sm:$0xf]
    %v3471 = vld [vmem:[%s3469 + $0x4] sm:$0xf]
    %v3472 = vld [vmem:[%s3469 + $0x8] sm:$0xf]
    %v3473 = vld [vmem:[%s3469 + $0xc] sm:$0xf]
    %s3474 = scalar_lea.vmem %s11, 1
    %v3475 = vld [vmem:[%s3474] sm:$0x1]
    %v3477 = vlaneseq
    %v3478 = vshrl.u32 %v3477, 7
    %v3479 = vsub.s32 0, %v3478
    %v3480 = vrot.slane %v3475, %v3479
    %v3486 = vunpack.c.l.b16 %v3470
    %v3487 = vunpack.c.l.b16 %v3471
    %v3488 = vunpack.c.l.b16 %v3472
    %v3489 = vunpack.c.l.b16 %v3473
    %v3490 = vpack.c.b16 %v3487, %v3486
    %v3491 = vpack.c.b16 %v3489, %v3488
    %v3495 = vsel %vm76, %v3468, 0
    %3497 = vmatprep.subr.bf16.mxu0 0
    %3498 = vmatpush1.bf16.msra.mxu0 %v3490
    %3499 = vmatprep.subr.bf16.mxu0 0
    %3500 = vmatpush1.bf16.msra.mxu0 %v3491
    %3501 = vmatprep.subr.bf16.mxu0 0
    %3502 = vmatpush1.bf16.msra.mxu0 0
    %3503 = vmatprep.subr.bf16.mxu0 0
    %3504 = vmatpush1.bf16.msra.mxu0 0
    %3505 = vmatprep.subr.bf16.mxu0 0
    %3506 = vmatpush1.bf16.msra.mxu0 0
    %3507 = vmatprep.subr.bf16.mxu0 0
    %3508 = vmatpush1.bf16.msra.mxu0 0
    %3509 = vmatprep.subr.bf16.mxu0 0
    %3510 = vmatpush1.bf16.msra.mxu0 0
    %3511 = vmatprep.subr.bf16.mxu0 0
    %3512 = vmatpush1.bf16.msra.mxu0 0
    %3513 = vmatprep.subr.bf16.mxu0 0
    %3514 = vmatpush1.bf16.msra.mxu0 0
    %3515 = vmatprep.subr.bf16.mxu0 0
    %3516 = vmatpush1.bf16.msra.mxu0 0
    %3517 = vmatprep.subr.bf16.mxu0 0
    %3518 = vmatpush1.bf16.msra.mxu0 0
    %3519 = vmatprep.subr.bf16.mxu0 0
    %3520 = vmatpush1.bf16.msra.mxu0 0
    %3521 = vmatprep.subr.bf16.mxu0 0
    %3522 = vmatpush1.bf16.msra.mxu0 0
    %3523 = vmatprep.subr.bf16.mxu0 0
    %3524 = vmatpush1.bf16.msra.mxu0 0
    %3525 = vmatprep.subr.bf16.mxu0 0
    %3526 = vmatpush1.bf16.msra.mxu0 0
    %3527 = vmatprep.subr.bf16.mxu0 0
    %3528 = vmatpush1.bf16.msra.mxu0 0
    %3529 = vmatprep.mubr.bf16.mxu0 0
    %3530 = vmatmul.mubr.bf16.gmra.mrb[0].mxu0 %v3495
    %v3531 = vpop.f32.mrb[0].mxu0
    %v3532 = vadd.f32 %v3480, %v3531
    %v3533 = vpop.f32.mrb[0].mxu0
    %v3534 = vpop.f32.mrb[0].mxu0
    %v3535 = vadd.f32 %v3480, %v3534
    %v3536 = vpop.f32.mrb[0].mxu0
    %3537 = vdwg.mxu0
    %v3538 = vmul.f32 %v3532, 0.5
    %v3539 = vmul.f32 %v3535, 0.5
    %v3540 = vmul.f32 %v3532, 0.044715
    %v3541 = vmul.f32 %v3535, 0.044715
    %v3542 = vmul.f32 %v3540, %v3532
    %v3543 = vmul.f32 %v3541, %v3535
    %v3544 = vmul.f32 %v3542, %v3532
    %v3545 = vmul.f32 %v3543, %v3535
    %v3546 = vadd.f32 %v3532, %v3544
    %v3547 = vadd.f32 %v3535, %v3545
    %v3548 = vmul.f32 %v3546, 0.7978846
    %v3549 = vmul.f32 %v3547, 0.7978846
    %v3550 = vtanh.pop %v3548
    %v3551 = vtanh.pop %v3549
    %v3552 = vadd.f32 %v3550, 1.0
    %v3553 = vadd.f32 %v3551, 1.0
    %v3554 = vmul.f32 %v3538, %v3552
    %v3555 = vmul.f32 %v3539, %v3553
    %v3556 = vpack.c.bf16 %v3555, %v3554
    %s3557 = scalar_lea.vmem %s12, 64
    %v3558 = vld [vmem:[%s3557] sm:$0xf]
    %v3559 = vld [vmem:[%s3557 + $0x4] sm:$0xf]
    %v3560 = vld [vmem:[%s3557 + $0x8] sm:$0xf]
    %v3561 = vld [vmem:[%s3557 + $0xc] sm:$0xf]
    %v3562 = vld [vmem:[%s3557 + $0x10] sm:$0xf]
    %v3563 = vld [vmem:[%s3557 + $0x14] sm:$0xf]
    %v3564 = vld [vmem:[%s3557 + $0x18] sm:$0xf]
    %v3565 = vld [vmem:[%s3557 + $0x1c] sm:$0xf]
    %v3566 = vld [vmem:[%s3557 + $0x20] sm:$0xf]
    %v3567 = vld [vmem:[%s3557 + $0x24] sm:$0xf]
    %v3568 = vld [vmem:[%s3557 + $0x28] sm:$0xf]
    %v3569 = vld [vmem:[%s3557 + $0x2c] sm:$0xf]
    %v3570 = vld [vmem:[%s3557 + $0x30] sm:$0xf]
    %v3571 = vld [vmem:[%s3557 + $0x34] sm:$0xf]
    %v3572 = vld [vmem:[%s3557 + $0x38] sm:$0xf]
    %v3573 = vld [vmem:[%s3557 + $0x3c] sm:$0xf]
    %s3574 = scalar_lea.vmem %s13, 1
    %v3575 = vld [vmem:[%s3574] sm:$0x1]
    %v3577 = vlaneseq
    %v3578 = vshrl.u32 %v3577, 7
    %v3579 = vsub.s32 0, %v3578
    %v3580 = vrot.slane %v3575, %v3579
    %v3598 = vunpack.c.l.b16 %v3558
    %v3599 = vunpack.c.l.b16 %v3559
    %v3600 = vunpack.c.l.b16 %v3560
    %v3601 = vunpack.c.l.b16 %v3561
    %v3602 = vunpack.c.l.b16 %v3562
    %v3603 = vunpack.c.l.b16 %v3563
    %v3604 = vunpack.c.l.b16 %v3564
    %v3605 = vunpack.c.l.b16 %v3565
    %v3606 = vunpack.c.l.b16 %v3566
    %v3607 = vunpack.c.l.b16 %v3567
    %v3608 = vunpack.c.l.b16 %v3568
    %v3609 = vunpack.c.l.b16 %v3569
    %v3610 = vunpack.c.l.b16 %v3570
    %v3611 = vunpack.c.l.b16 %v3571
    %v3612 = vunpack.c.l.b16 %v3572
    %v3613 = vunpack.c.l.b16 %v3573
    %v3614 = vpack.c.b16 %v3599, %v3598
    %v3615 = vpack.c.b16 %v3601, %v3600
    %v3616 = vpack.c.b16 %v3603, %v3602
    %v3617 = vpack.c.b16 %v3605, %v3604
    %v3618 = vpack.c.b16 %v3607, %v3606
    %v3619 = vpack.c.b16 %v3609, %v3608
    %v3620 = vpack.c.b16 %v3611, %v3610
    %v3621 = vpack.c.b16 %v3613, %v3612
    %3630 = vmatprep.subr.bf16.mxu0 0
    %3631 = vmatpush1.bf16.msra.mxu0 %v3614
    %3632 = vmatprep.subr.bf16.mxu0 0
    %3633 = vmatpush1.bf16.msra.mxu0 %v3615
    %3634 = vmatprep.subr.bf16.mxu0 0
    %3635 = vmatpush1.bf16.msra.mxu0 %v3616
    %3636 = vmatprep.subr.bf16.mxu0 0
    %3637 = vmatpush1.bf16.msra.mxu0 %v3617
    %3638 = vmatprep.subr.bf16.mxu0 0
    %3639 = vmatpush1.bf16.msra.mxu0 %v3618
    %3640 = vmatprep.subr.bf16.mxu0 0
    %3641 = vmatpush1.bf16.msra.mxu0 %v3619
    %3642 = vmatprep.subr.bf16.mxu0 0
    %3643 = vmatpush1.bf16.msra.mxu0 %v3620
    %3644 = vmatprep.subr.bf16.mxu0 0
    %3645 = vmatpush1.bf16.msra.mxu0 %v3621
    %3646 = vmatprep.subr.bf16.mxu0 0
    %3647 = vmatpush1.bf16.msra.mxu0 0
    %3648 = vmatprep.subr.bf16.mxu0 0
    %3649 = vmatpush1.bf16.msra.mxu0 0
    %3650 = vmatprep.subr.bf16.mxu0 0
    %3651 = vmatpush1.bf16.msra.mxu0 0
    %3652 = vmatprep.subr.bf16.mxu0 0
    %3653 = vmatpush1.bf16.msra.mxu0 0
    %3654 = vmatprep.subr.bf16.mxu0 0
    %3655 = vmatpush1.bf16.msra.mxu0 0
    %3656 = vmatprep.subr.bf16.mxu0 0
    %3657 = vmatpush1.bf16.msra.mxu0 0
    %3658 = vmatprep.subr.bf16.mxu0 0
    %3659 = vmatpush1.bf16.msra.mxu0 0
    %3660 = vmatprep.subr.bf16.mxu0 0
    %3661 = vmatpush1.bf16.msra.mxu0 0
    %3662 = vmatprep.mubr.bf16.mxu0 0
    %3663 = vmatmul.mubr.bf16.gmra.mrb[0].mxu0 %v3556
    %v3664 = vpop.f32.mrb[0].mxu0
    %v3665 = vadd.f32 %v3580, %v3664
    %v3666 = vpop.f32.mrb[0].mxu0
    %v3667 = vpop.f32.mrb[0].mxu0
    %v3668 = vadd.f32 %v3580, %v3667
    %v3669 = vpop.f32.mrb[0].mxu0
    %3670 = vdwg.mxu0
    %v3671 = vadd.f32 %v3665, %v3466
    %v3672 = vadd.f32 %v3668, %v3467
    %s3673 = scalar_lea.vmem %s14, 1
    %v3674 = vld [vmem:[%s3673] sm:$0x1]
    %s3675 = scalar_lea.vmem %s15, 1
    %v3676 = vld [vmem:[%s3675] sm:$0x1]
    %v3677 = vsel %vm76, %v3671, 0.0
    %3678 = vadd.xlane.f32.xlu0 %v3677
    %v3679 = vpop.xlane.xlu0 %3678
    %v3680 = vsel %vm76, %v3672, 0.0
    %3681 = vadd.xlane.f32.xlu0 %v3680
    %v3682 = vpop.xlane.xlu0 %3681
    %v3683 = vmul.f32 %v3679, %v83
    %v3684 = vmul.f32 %v3682, %v83
    %v3685 = vsub.f32 %v3671, %v3683
    %v3686 = vsub.f32 %v3672, %v3684
    %v3687 = vmul.f32 %v3685, %v3685
    %v3688 = vmul.f32 %v3686, %v3686
    %v3689 = vsel %vm76, %v3687, 0.0
    %3690 = vadd.xlane.f32.xlu0 %v3689
    %v3691 = vpop.xlane.xlu0 %3690
    %v3692 = vsel %vm76, %v3688, 0.0
    %3693 = vadd.xlane.f32.xlu0 %v3692
    %v3694 = vpop.xlane.xlu0 %3693
    %v3695 = vmul.f32 %v3691, %v83
    %v3696 = vmul.f32 %v3694, %v83
    %v3697 = vadd.f32 %v3695, 1e-12
    %v3698 = vadd.f32 %v3696, 1e-12
    %v3699 = vrsqrt.pop %v3697
    %v3700 = vrsqrt.pop %v3698
    %v3701 = vmul.f32 %v3685, %v3699
    %v3702 = vmul.f32 %v3686, %v3700
    %v3704 = vlaneseq
    %v3705 = vshrl.u32 %v3704, 7
    %v3706 = vsub.s32 0, %v3705
    %v3707 = vrot.slane %v3674, %v3706
    %v3709 = vmul.f32 %v3701, %v3707
    %v3710 = vmul.f32 %v3702, %v3707
    %v3712 = vlaneseq
    %v3713 = vshrl.u32 %v3712, 7
    %v3714 = vsub.s32 0, %v3713
    %v3715 = vrot.slane %v3676, %v3714
    %v3717 = vadd.f32 %v3709, %v3715
    %v3718 = vadd.f32 %v3710, %v3715
    %v3719 = vpack.c.bf16 %v3718, %v3717
    %v3720 = vld [vmem:[%s16] sm:$0xf]
    %v3721 = vld [vmem:[%s16 + $0x4] sm:$0xf]
    %v3722 = vld [vmem:[%s16 + $0x8] sm:$0xf]
    %v3723 = vld [vmem:[%s16 + $0xc] sm:$0xf]
    %v3724 = vld [vmem:[%s17] sm:$0x1]
    %v3726 = vlaneseq
    %v3727 = vshrl.u32 %v3726, 7
    %v3728 = vsub.s32 0, %v3727
    %v3729 = vrot.slane %v3724, %v3728
    %v3735 = vunpack.c.l.b16 %v3720
    %v3736 = vunpack.c.l.b16 %v3721
    %v3737 = vunpack.c.l.b16 %v3722
    %v3738 = vunpack.c.l.b16 %v3723
    %v3739 = vpack.c.b16 %v3736, %v3735
    %v3740 = vpack.c.b16 %v3738, %v3737
    %v3744 = vsel %vm76, %v3719, 0
    %3746 = vmatprep.subr.bf16.mxu0 0
    %3747 = vmatpush1.bf16.msra.mxu0 %v3739
    %3748 = vmatprep.subr.bf16.mxu0 0
    %3749 = vmatpush1.bf16.msra.mxu0 %v3740
    %3750 = vmatprep.subr.bf16.mxu0 0
    %3751 = vmatpush1.bf16.msra.mxu0 0
    %3752 = vmatprep.subr.bf16.mxu0 0
    %3753 = vmatpush1.bf16.msra.mxu0 0
    %3754 = vmatprep.subr.bf16.mxu0 0
    %3755 = vmatpush1.bf16.msra.mxu0 0
    %3756 = vmatprep.subr.bf16.mxu0 0
    %3757 = vmatpush1.bf16.msra.mxu0 0
    %3758 = vmatprep.subr.bf16.mxu0 0
    %3759 = vmatpush1.bf16.msra.mxu0 0
    %3760 = vmatprep.subr.bf16.mxu0 0
    %3761 = vmatpush1.bf16.msra.mxu0 0
    %3762 = vmatprep.subr.bf16.mxu0 0
    %3763 = vmatpush1.bf16.msra.mxu0 0
    %3764 = vmatprep.subr.bf16.mxu0 0
    %3765 = vmatpush1.bf16.msra.mxu0 0
    %3766 = vmatprep.subr.bf16.mxu0 0
    %3767 = vmatpush1.bf16.msra.mxu0 0
    %3768 = vmatprep.subr.bf16.mxu0 0
    %3769 = vmatpush1.bf16.msra.mxu0 0
    %3770 = vmatprep.subr.bf16.mxu0 0
    %3771 = vmatpush1.bf16.msra.mxu0 0
    %3772 = vmatprep.subr.bf16.mxu0 0
    %3773 = vmatpush1.bf16.msra.mxu0 0
    %3774 = vmatprep.subr.bf16.mxu0 0
    %3775 = vmatpush1.bf16.msra.mxu0 0
    %3776 = vmatprep.subr.bf16.mxu0 0
    %3777 = vmatpush1.bf16.msra.mxu0 0
    %3778 = vmatprep.mubr.bf16.mxu0 0
    %3779 = vmatmul.mubr.bf16.gmra.mrb[0].mxu0 %v3744
    %v3780 = vpop.f32.mrb[0].mxu0
    %v3781 = vadd.f32 %v3729, %v3780
    %v3782 = vpop.f32.mrb[0].mxu0
    %v3783 = vpop.f32.mrb[0].mxu0
    %v3784 = vadd.f32 %v3729, %v3783
    %v3785 = vpop.f32.mrb[0].mxu0
    %3786 = vdwg.mxu0
    %v3787 = vtanh.pop %v3781
    %v3788 = vtanh.pop %v3784
    %v3789 = vpack.c.bf16 %v3788, %v3787
    %v3790 = vld [vmem:[%s18] sm:$0xf]
    %v3791 = vld [vmem:[%s18 + $0x4] sm:$0xf]
    %v3792 = vld [vmem:[%s18 + $0x8] sm:$0xf]
    %v3793 = vld [vmem:[%s18 + $0xc] sm:$0xf]
    %v3794 = vld [vmem:[%s19] sm:$0x1]
    %v3796 = vlaneseq
    %v3797 = vshrl.u32 %v3796, 7
    %v3798 = vsub.s32 0, %v3797
    %v3799 = vrot.slane %v3794, %v3798
    %v3805 = vunpack.c.l.b16 %v3790
    %v3806 = vunpack.c.l.b16 %v3791
    %v3807 = vunpack.c.l.b16 %v3792
    %v3808 = vunpack.c.l.b16 %v3793
    %v3809 = vpack.c.b16 %v3806, %v3805
    %v3810 = vpack.c.b16 %v3808, %v3807
    %v3814 = vsel %vm76, %v3789, 0
    %3816 = vmatprep.subr.bf16.mxu0 0
    %3817 = vmatpush1.bf16.msra.mxu0 %v3809
    %3818 = vmatprep.subr.bf16.mxu0 0
    %3819 = vmatpush1.bf16.msra.mxu0 %v3810
    %3820 = vmatprep.subr.bf16.mxu0 0
    %3821 = vmatpush1.bf16.msra.mxu0 0
    %3822 = vmatprep.subr.bf16.mxu0 0
    %3823 = vmatpush1.bf16.msra.mxu0 0
    %3824 = vmatprep.subr.bf16.mxu0 0
    %3825 = vmatpush1.bf16.msra.mxu0 0
    %3826 = vmatprep.subr.bf16.mxu0 0
    %3827 = vmatpush1.bf16.msra.mxu0 0
    %3828 = vmatprep.subr.bf16.mxu0 0
    %3829 = vmatpush1.bf16.msra.mxu0 0
    %3830 = vmatprep.subr.bf16.mxu0 0
    %3831 = vmatpush1.bf16.msra.mxu0 0
    %3832 = vmatprep.subr.bf16.mxu0 0
    %3833 = vmatpush1.bf16.msra.mxu0 0
    %3834 = vmatprep.subr.bf16.mxu0 0
    %3835 = vmatpush1.bf16.msra.mxu0 0
    %3836 = vmatprep.subr.bf16.mxu0 0
    %3837 = vmatpush1.bf16.msra.mxu0 0
    %3838 = vmatprep.subr.bf16.mxu0 0
    %3839 = vmatpush1.bf16.msra.mxu0 0
    %3840 = vmatprep.subr.bf16.mxu0 0
    %3841 = vmatpush1.bf16.msra.mxu0 0
    %3842 = vmatprep.subr.bf16.mxu0 0
    %3843 = vmatpush1.bf16.msra.mxu0 0
    %3844 = vmatprep.subr.bf16.mxu0 0
    %3845 = vmatpush1.bf16.msra.mxu0 0
    %3846 = vmatprep.subr.bf16.mxu0 0
    %3847 = vmatpush1.bf16.msra.mxu0 0
    %3848 = vmatprep.mubr.bf16.mxu0 0
    %3849 = vmatmul.mubr.bf16.gmra.mrb[0].mxu0 %v3814
    %v3850 = vpop.f32.mrb[0].mxu0
    %v3851 = vadd.f32 %v3799, %v3850
    %v3852 = vpop.f32.mrb[0].mxu0
    %v3853 = vpop.f32.mrb[0].mxu0
    %v3854 = vadd.f32 %v3799, %v3853
    %v3855 = vpop.f32.mrb[0].mxu0
    %3856 = vdwg.mxu0
    %3857 = vst [vmem:[%s21] sm:$0xff] %v3851
    %3858 = vst [vmem:[%s21 + $0x8] sm:$0xff] %v3854
    %vm3859 = vcmask 15360
    %v3860 = vsel %vm3859, %v3851, -inf
    %3861 = vmax.xlane.f32.xlu0 %v3860
    %v3862 = vpop.xlane.xlu0 %3861
    %v3863 = vsel %vm3859, %v3854, -inf
    %3864 = vmax.xlane.f32.xlu0 %v3863
    %v3865 = vpop.xlane.xlu0 %3864
    %v3866 = vsub.f32 %v3851, %v3862
    %v3867 = vsub.f32 %v3854, %v3865
    %v3868 = vmul.f32 %v3866, 1.442695
    %v3869 = vpow.pop %v3868
    %v3870 = vmul.f32 %v3867, 1.442695
    %v3871 = vpow.pop %v3870
    %v3872 = vsel %vm3859, %v3869, 0.0
    %3873 = vadd.xlane.f32.xlu0 %v3872
    %v3874 = vpop.xlane.xlu0 %3873
    %v3875 = vsel %vm3859, %v3871, 0.0
    %3876 = vadd.xlane.f32.xlu0 %v3875
    %v3877 = vpop.xlane.xlu0 %3876
    %v3878 = vlog2.pop %v3874
    %v3879 = vmul.f32 %v3878, 0.6931472
    %v3880 = vlog2.pop %v3877
    %v3881 = vmul.f32 %v3880, 0.6931472
    %v3882 = vadd.f32 %v3879, %v3862
    %v3883 = vadd.f32 %v3881, %v3865
    %v3884 = vsub.f32 %v3882, %v3851
    %v3885 = vsub.f32 %v3883, %v3854
    %v3886 = vld [vmem:[%s20] sm:$0xff]
    %v3887 = vld [vmem:[%s20 + $0x8] sm:$0xff]
    %v3888 = vmul.f32 %v3886, %v3884
    %v3889 = vmul.f32 %v3887, %v3885
    %v3890 = vadd.f32 %v3888, %v3889
    %3891 = vadd.xlane.f32.xlu0 %v3890
    %v3892 = vpop.xlane.xlu0 %3891
    %v3893 = vrot.slane %v3892, 4
    %v3894 = vadd.f32 %v3892, %v3893
    %v3895 = vrot.slane %v3894, 2
    %v3896 = vadd.f32 %v3894, %v3895
    %v3897 = vrot.slane %v3896, 1
    %v3898 = vadd.f32 %v3896, %v3897
    %s3899 = vtos %v3898
    %v3900 = vstv %s3899
    %v3901 = vadd.f32 %v3886, %v3887
    %3902 = vadd.xlane.f32.xlu0 %v3901
    %v3903 = vpop.xlane.xlu0 %3902
    %v3904 = vrot.slane %v3903, 4
    %v3905 = vadd.f32 %v3903, %v3904
    %v3906 = vrot.slane %v3905, 2
    %v3907 = vadd.f32 %v3905, %v3906
    %v3908 = vrot.slane %v3907, 1
    %v3909 = vadd.f32 %v3907, %v3908
    %s3910 = vtos %v3909
    %v3911 = vstv %s3910
    %v3912 = vrcp.pop %v3911
    %v3913 = vmul.f32 %v3900, %v3912
    %3914 = vst [vmem:[#allocation2] sm:$0x1] %v3913
    // Predicated region
    $region86: #{_forward_with_loss.1} parent=1 // pred_check
      _
    $region87: #{_forward_with_loss.1} parent=1 // pred_check_branch
      %3916 = sbr.rel (0) target = $region89
    $region88: #{_forward_with_loss.1} parent=1 // pred_region
      _
    $region89: #{_forward_with_loss.1} parent=1 // pred_fallthru
      _
    // Predicated region
    $region90: #{_forward_with_loss.1} parent=1 // pred_check
      _
    $region91: #{_forward_with_loss.1} parent=1 // pred_check_branch
      %3918 = sbr.rel (0) target = $region93
    $region92: #{_forward_with_loss.1} parent=1 // pred_region
      %s3920 = ssub.s32 16, 16
      %3921 = vsyncadd [#allocation3], %s3920
      %s3923 = sshll.u32 [#allocation2], 4
      %s3924 = int_to_ptr.vmem [resolvable:$true] %s3923
      %3926 = dma.vmem_to_hbm [thread:$0]  %s3924, 16, %s22, [#allocation3]
    $region93: #{_forward_with_loss.1} parent=1 // pred_fallthru
      _
    // Predicated region
    $region94: #{_forward_with_loss.1} parent=1 // pred_check
      _
    $region95: #{_forward_with_loss.1} parent=1 // pred_check_branch
      %3928 = sbr.rel (0) target = $region97
    $region96: #{_forward_with_loss.1} parent=1 // pred_region
      _
    $region97: #{_forward_with_loss.1} parent=1 // pred_fallthru
      _
    // Predicated region
    $region98: #{_forward_with_loss.1} parent=1 // pred_check
      _
    $region99: #{_forward_with_loss.1} parent=1 // pred_check_branch
      %3930 = sbr.rel (0) target = $region101
    $region100: #{_forward_with_loss.1} parent=1 // pred_region
      %3931 = dma.done [#allocation3], 16
    $region101: #{_forward_with_loss.1} parent=1 // pred_fallthru
      _
    %3932 = vsyncpa [#allocation3], 1

</llo_original>
